<compile_context>
chip_gen: v7x
topology: tpu7x:2x2x1
jax: 0.10.0
libtpu: 0.0.40
codegen_flags: <defaults>
</compile_context>

<pallas_src>
import functools

import jax
import jax.numpy as jnp
from jax.experimental import pallas as pl
from jax.experimental.pallas import tpu as pltpu

GP = 128   # gate pitch: each of the 4 LSTM gates gets its own 128-lane block
RP = 8     # row pitch: each timestep occupies a full 8-sublane group


def _sigmoid(z):
    # sigmoid(x) = 0.5 * (tanh(x/2) + 1): single EUP transcendental per call
    return 0.5 * jnp.tanh(0.5 * z) + 0.5


def _gate_act(g):
    # lane-aligned (128-wide) gate slices -> free views
    i = _sigmoid(g[:, 0 * GP:1 * GP])
    f = _sigmoid(g[:, 1 * GP:2 * GP])
    c = jnp.tanh(g[:, 2 * GP:3 * GP])
    o = _sigmoid(g[:, 3 * GP:4 * GP])
    return i, f, c, o


def lstm_kernel(xf_ref, wih0_ref, b0_ref, wfused_ref, b1_ref,
                wlin_ref, blin_ref, y_ref, *, seq):
    S = seq
    G4 = 4 * GP

    # ---- layer-0 input projection for ALL timesteps (one matmul, off the
    # recurrence critical path); b0 already folds b_ih0 + b_hh0 ----
    gih0 = jnp.dot(xf_ref[...], wih0_ref[...],
                   preferred_element_type=jnp.float32) + b0_ref[...]   # (S*RP, 4GP)

    b1 = jnp.broadcast_to(b1_ref[...], (RP, G4))       # hoisted bias broadcast

    zeros = jnp.zeros((RP, GP), jnp.float32)
    h1 = c1 = h2 = c2 = zeros                          # zero init (PyTorch default)
    h2_blocks = []

    # ---- software-pipelined recurrence: one fused K=256 matmul per step ----
    # iteration t computes layer-0 gates for step t AND layer-1 gates for
    # step t-1 from LHS = [h1_{t-1} | h2_{t-2}]; iteration S drains layer-1.
    for t in range(S + 1):
        hx = jnp.concatenate([h1, h2], axis=1)                          # (RP, 2GP)
        if t < S:
            g = jnp.dot(hx, wfused_ref[...],
                        preferred_element_type=jnp.float32)             # (RP, 8GP)
        else:
            # drain: only layer-1(S-1) remains -> layer-1 column block only
            g = jnp.dot(hx, wfused_ref[:, G4:2 * G4],
                        preferred_element_type=jnp.float32)             # (RP, 4GP)

        if t >= 1:
            # layer-1 cell, step t-1
            g1 = (g[:, G4:2 * G4] if t < S else g) + b1
            i1, f1, gg1, o1 = _gate_act(g1)
            c2 = f1 * c2 + i1 * gg1
            h2 = o1 * jnp.tanh(c2)
            h2_blocks.append(h2)                                        # step t-1

        if t < S:
            # layer-0 cell, step t
            g0 = gih0[t * RP:(t + 1) * RP, :] + g[:, 0:G4]
            i0, f0, gg0, o0 = _gate_act(g0)
            c1 = f0 * c1 + i0 * gg0
            h1 = o0 * jnp.tanh(c1)

    # ---- deferred lane-dense linear head: one matmul over all timesteps ----
    h2_all = jnp.concatenate(h2_blocks, axis=0)                         # (S*RP, GP)
    y_ref[...] = jnp.dot(h2_all, wlin_ref[...],
                         preferred_element_type=jnp.float32) + blin_ref[...]


def lstm_forward(x, kp, out_size=1):
    S, B, I = x.shape
    assert B <= RP, "batch must fit in one 8-sublane group"
    OL = kp["wlin"].shape[1]                       # lane-dense head width (128)

    # row-pitch padding: each timestep gets a full 8-row group, valid rows on top
    xp = jnp.zeros((S, RP, I), jnp.float32).at[:, :B, :].set(x)
    xf = xp.reshape(S * RP, I)

    vmem = pl.BlockSpec(memory_space=pltpu.MemorySpace.VMEM)
    kernel = functools.partial(lstm_kernel, seq=S)

    y = pl.pallas_call(
        kernel,
        out_shape=jax.ShapeDtypeStruct((S * RP, OL), jnp.float32),
        in_specs=[vmem] * 7,
        out_specs=vmem,
    )(xf, kp["wih0"], kp["b0"], kp["wfused"], kp["b1"], kp["wlin"], kp["blin"])

    # slice back to valid batch rows and the true output width
    return y.reshape(S, RP, OL)[:, :B, :out_size]


# ------------------------- parameter construction -------------------------

def init_params(key, input_size=2, hidden_size=4, output_size=1):
    """Raw PyTorch-layout params, uniform(-1/sqrt(H), 1/sqrt(H)) like nn.LSTM."""
    H, I, O = hidden_size, input_size, output_size
    k = 1.0 / jnp.sqrt(H)
    keys = jax.random.split(key, 10)

    def u(kk, shape):
        return jax.random.uniform(kk, shape, jnp.float32, -k, k)

    return {
        "w_ih0": u(keys[0], (4 * H, I)), "w_hh0": u(keys[1], (4 * H, H)),
        "b_ih0": u(keys[2], (4 * H,)),   "b_hh0": u(keys[3], (4 * H,)),
        "w_ih1": u(keys[4], (4 * H, H)), "w_hh1": u(keys[5], (4 * H, H)),
        "b_ih1": u(keys[6], (4 * H,)),   "b_hh1": u(keys[7], (4 * H,)),
        "w_lin": u(keys[8], (O, H)),     "b_lin": u(keys[9], (O,)),
    }


def _pad_gate_cols(w_t, H):
    """(K, 4H) gate-major (i,f,g,o) -> (K, 4*GP), gate k in cols [k*GP, k*GP+H)."""
    K = w_t.shape[0]
    out = jnp.zeros((K, 4 * GP), jnp.float32)
    for g in range(4):
        out = out.at[:, g * GP:g * GP + H].set(w_t[:, g * H:(g + 1) * H])
    return out


def _pad_rows(w, H):
    """(H, N) -> (GP, N) with rows H..GP-1 zero (hidden state carried as (*, GP))."""
    return jnp.zeros((GP, w.shape[1]), jnp.float32).at[:H, :].set(w)


def pack_params(p, hidden_size=4):
    """Kernel layout: transposed, gate-padded to GP lanes, biases folded,
    block-structured fused recurrent weight, lane-dense head."""
    H = hidden_size
    wih0 = _pad_gate_cols(p["w_ih0"].T, H)                              # (I, 4GP)
    whh0 = _pad_rows(_pad_gate_cols(p["w_hh0"].T, H), H)                # (GP, 4GP)
    b0 = _pad_gate_cols((p["b_ih0"] + p["b_hh0"]).reshape(1, -1), H)    # (1, 4GP)
    wih1 = _pad_rows(_pad_gate_cols(p["w_ih1"].T, H), H)                # (GP, 4GP)
    whh1 = _pad_rows(_pad_gate_cols(p["w_hh1"].T, H), H)                # (GP, 4GP)
    b1 = _pad_gate_cols((p["b_ih1"] + p["b_hh1"]).reshape(1, -1), H)    # (1, 4GP)

    # fused block-structured weight for the pipelined recurrence:
    #   [ whh0  wih1 ]
    #   [   0   whh1 ]            (2GP, 8GP)
    top = jnp.concatenate([whh0, wih1], axis=1)
    bot = jnp.concatenate([jnp.zeros_like(whh1), whh1], axis=1)
    wfused = jnp.concatenate([top, bot], axis=0)

    # lane-dense linear head: (H, O) padded to (GP, 128)
    O = p["w_lin"].shape[0]
    wlin = jnp.zeros((GP, 128), jnp.float32).at[:H, :O].set(p["w_lin"].T)
    blin = jnp.zeros((1, 128), jnp.float32).at[0, :O].set(p["b_lin"])

    return {"wih0": wih0, "b0": b0, "wfused": wfused, "b1": b1,
            "wlin": wlin, "blin": blin}


# ------------------------------ pure-JAX reference ------------------------------

def lstm_ref(x, p):
    S, B, _ = x.shape
    H = p["w_hh0"].shape[1]

    def cell(x_t, h, c, w_ih, w_hh, b_ih, b_hh):
        g = x_t @ w_ih.T + h @ w_hh.T + b_ih + b_hh
        i = jax.nn.sigmoid(g[:, :H])
        f = jax.nn.sigmoid(g[:, H:2 * H])
        gg = jnp.tanh(g[:, 2 * H:3 * H])
        o = jax.nn.sigmoid(g[:, 3 * H:])
        c = f * c + i * gg
        h = o * jnp.tanh(c)
        return h, c

    h1 = c1 = h2 = c2 = jnp.zeros((B, H), jnp.float32)
    ys = []
    for t in range(S):
        h1, c1 = cell(x[t], h1, c1, p["w_ih0"], p["w_hh0"], p["b_ih0"], p["b_hh0"])
        h2, c2 = cell(h1, h2, c2, p["w_ih1"], p["w_hh1"], p["b_ih1"], p["b_hh1"])
        ys.append(h2 @ p["w_lin"].T + p["b_lin"])
    return jnp.stack(ys, axis=0)


if __name__ == "__main__":
    key = jax.random.PRNGKey(0)
    k_params, k_x = jax.random.split(key)

    seq, batch, input_size, hidden, out_size = 8, 2, 2, 4, 1
    raw = init_params(k_params, input_size, hidden, out_size)
    kp = pack_params(raw, hidden)
    x = jax.random.normal(k_x, (seq, batch, input_size), jnp.float32)

    y = jax.block_until_ready(lstm_forward(x, kp, out_size))
    y_ref = lstm_ref(x, raw)

    assert y.shape == (seq, batch, out_size), y.shape
    max_err = jnp.max(jnp.abs(y - y_ref))
    assert jnp.allclose(y, y_ref, atol=1e-3, rtol=1e-3), f"max abs diff {max_err}"

    print("KERNEL_OK")
</pallas_src>

<mosaic_0001>
module attributes {stable_mosaic.version = 11 : i64} {
  func.func @lstm_kernel(%arg0: memref<64x2xf32, #tpu.memory_space<vmem>>, %arg1: memref<2x512xf32, #tpu.memory_space<vmem>>, %arg2: memref<1x512xf32, #tpu.memory_space<vmem>>, %arg3: memref<256x1024xf32, #tpu.memory_space<vmem>>, %arg4: memref<1x512xf32, #tpu.memory_space<vmem>>, %arg5: memref<128x128xf32, #tpu.memory_space<vmem>>, %arg6: memref<1x128xf32, #tpu.memory_space<vmem>>, %arg7: memref<64x128xf32, #tpu.memory_space<vmem>>) attributes {dimension_semantics = [], scalar_prefetch = 0 : i64, scratch_operands = 0 : i64, tpu.core_type = #tpu.core_type<tc>} {
    %c0 = arith.constant 0 : index
    %c0_0 = arith.constant 0 : index
    %0 = vector.load %arg0[%c0, %c0_0] : memref<64x2xf32, #tpu.memory_space<vmem>>, vector<64x2xf32>
    %c0_1 = arith.constant 0 : index
    %c0_2 = arith.constant 0 : index
    %1 = vector.load %arg1[%c0_1, %c0_2] : memref<2x512xf32, #tpu.memory_space<vmem>>, vector<2x512xf32>
    %cst = arith.constant dense<0.000000e+00> : vector<64x512xf32>
    %2 = tpu.matmul %0, %1, %cst {dimension_numbers = #tpu.dot_dimension_numbers<[1], [0], [0], [1], [0, 0, 1, 1], [], []>} : vector<64x2xf32>, vector<2x512xf32>, vector<64x512xf32> -> vector<64x512xf32>
    %c0_3 = arith.constant 0 : index
    %c0_4 = arith.constant 0 : index
    %3 = vector.load %arg2[%c0_3, %c0_4] : memref<1x512xf32, #tpu.memory_space<vmem>>, vector<1x512xf32>
    %4 = vector.broadcast %3 : vector<1x512xf32> to vector<64x512xf32>
    %5 = arith.addf %2, %4 : vector<64x512xf32>
    %c0_5 = arith.constant 0 : index
    %c0_6 = arith.constant 0 : index
    %6 = vector.load %arg4[%c0_5, %c0_6] : memref<1x512xf32, #tpu.memory_space<vmem>>, vector<1x512xf32>
    %7 = vector.shape_cast %6 : vector<1x512xf32> to vector<1x512xf32>
    %8 = vector.broadcast %7 : vector<1x512xf32> to vector<8x512xf32>
    %cst_7 = arith.constant 0.000000e+00 : f32
    %9 = vector.broadcast %cst_7 : f32 to vector<8x128xf32>
    %10 = tpu.concatenate %9, %9 in 1 : vector<8x128xf32>, vector<8x128xf32> -> vector<8x256xf32>
    %c0_8 = arith.constant 0 : index
    %c0_9 = arith.constant 0 : index
    %11 = vector.load %arg3[%c0_8, %c0_9] : memref<256x1024xf32, #tpu.memory_space<vmem>>, vector<256x1024xf32>
    %cst_10 = arith.constant dense<0.000000e+00> : vector<8x1024xf32>
    %12 = tpu.matmul %10, %11, %cst_10 {dimension_numbers = #tpu.dot_dimension_numbers<[1], [0], [0], [1], [0, 0, 1, 1], [], []>} : vector<8x256xf32>, vector<256x1024xf32>, vector<8x1024xf32> -> vector<8x1024xf32>
    %13 = vector.extract_strided_slice %5 {offsets = [0, 0], sizes = [8, 512], strides = [1, 1]} : vector<64x512xf32> to vector<8x512xf32>
    %14 = vector.extract_strided_slice %12 {offsets = [0, 0], sizes = [8, 512], strides = [1, 1]} : vector<8x1024xf32> to vector<8x512xf32>
    %15 = arith.addf %13, %14 : vector<8x512xf32>
    %16 = vector.extract_strided_slice %15 {offsets = [0, 0], sizes = [8, 128], strides = [1, 1]} : vector<8x512xf32> to vector<8x128xf32>
    %cst_11 = arith.constant 5.000000e-01 : f32
    %17 = vector.broadcast %cst_11 : f32 to vector<8x128xf32>
    %18 = arith.mulf %17, %16 : vector<8x128xf32>
    %19 = math.tanh %18 : vector<8x128xf32>
    %cst_12 = arith.constant 5.000000e-01 : f32
    %20 = vector.broadcast %cst_12 : f32 to vector<8x128xf32>
    %21 = arith.mulf %20, %19 : vector<8x128xf32>
    %cst_13 = arith.constant 5.000000e-01 : f32
    %22 = vector.broadcast %cst_13 : f32 to vector<8x128xf32>
    %23 = arith.addf %21, %22 : vector<8x128xf32>
    %24 = vector.extract_strided_slice %15 {offsets = [0, 128], sizes = [8, 128], strides = [1, 1]} : vector<8x512xf32> to vector<8x128xf32>
    %cst_14 = arith.constant 5.000000e-01 : f32
    %25 = vector.broadcast %cst_14 : f32 to vector<8x128xf32>
    %26 = arith.mulf %25, %24 : vector<8x128xf32>
    %27 = math.tanh %26 : vector<8x128xf32>
    %cst_15 = arith.constant 5.000000e-01 : f32
    %28 = vector.broadcast %cst_15 : f32 to vector<8x128xf32>
    %29 = arith.mulf %28, %27 : vector<8x128xf32>
    %cst_16 = arith.constant 5.000000e-01 : f32
    %30 = vector.broadcast %cst_16 : f32 to vector<8x128xf32>
    %31 = arith.addf %29, %30 : vector<8x128xf32>
    %32 = vector.extract_strided_slice %15 {offsets = [0, 256], sizes = [8, 128], strides = [1, 1]} : vector<8x512xf32> to vector<8x128xf32>
    %33 = math.tanh %32 : vector<8x128xf32>
    %34 = vector.extract_strided_slice %15 {offsets = [0, 384], sizes = [8, 128], strides = [1, 1]} : vector<8x512xf32> to vector<8x128xf32>
    %cst_17 = arith.constant 5.000000e-01 : f32
    %35 = vector.broadcast %cst_17 : f32 to vector<8x128xf32>
    %36 = arith.mulf %35, %34 : vector<8x128xf32>
    %37 = math.tanh %36 : vector<8x128xf32>
    %cst_18 = arith.constant 5.000000e-01 : f32
    %38 = vector.broadcast %cst_18 : f32 to vector<8x128xf32>
    %39 = arith.mulf %38, %37 : vector<8x128xf32>
    %cst_19 = arith.constant 5.000000e-01 : f32
    %40 = vector.broadcast %cst_19 : f32 to vector<8x128xf32>
    %41 = arith.addf %39, %40 : vector<8x128xf32>
    %42 = arith.mulf %31, %9 : vector<8x128xf32>
    %43 = arith.mulf %23, %33 : vector<8x128xf32>
    %44 = arith.addf %42, %43 : vector<8x128xf32>
    %45 = math.tanh %44 : vector<8x128xf32>
    %46 = arith.mulf %41, %45 : vector<8x128xf32>
    %47 = tpu.concatenate %46, %9 in 1 : vector<8x128xf32>, vector<8x128xf32> -> vector<8x256xf32>
    %c0_20 = arith.constant 0 : index
    %c0_21 = arith.constant 0 : index
    %48 = vector.load %arg3[%c0_20, %c0_21] : memref<256x1024xf32, #tpu.memory_space<vmem>>, vector<256x1024xf32>
    %cst_22 = arith.constant dense<0.000000e+00> : vector<8x1024xf32>
    %49 = tpu.matmul %47, %48, %cst_22 {dimension_numbers = #tpu.dot_dimension_numbers<[1], [0], [0], [1], [0, 0, 1, 1], [], []>} : vector<8x256xf32>, vector<256x1024xf32>, vector<8x1024xf32> -> vector<8x1024xf32>
    %50 = vector.extract_strided_slice %49 {offsets = [0, 512], sizes = [8, 512], strides = [1, 1]} : vector<8x1024xf32> to vector<8x512xf32>
    %51 = arith.addf %50, %8 : vector<8x512xf32>
    %52 = vector.extract_strided_slice %51 {offsets = [0, 0], sizes = [8, 128], strides = [1, 1]} : vector<8x512xf32> to vector<8x128xf32>
    %cst_23 = arith.constant 5.000000e-01 : f32
    %53 = vector.broadcast %cst_23 : f32 to vector<8x128xf32>
    %54 = arith.mulf %53, %52 : vector<8x128xf32>
    %55 = math.tanh %54 : vector<8x128xf32>
    %cst_24 = arith.constant 5.000000e-01 : f32
    %56 = vector.broadcast %cst_24 : f32 to vector<8x128xf32>
    %57 = arith.mulf %56, %55 : vector<8x128xf32>
    %cst_25 = arith.constant 5.000000e-01 : f32
    %58 = vector.broadcast %cst_25 : f32 to vector<8x128xf32>
    %59 = arith.addf %57, %58 : vector<8x128xf32>
    %60 = vector.extract_strided_slice %51 {offsets = [0, 128], sizes = [8, 128], strides = [1, 1]} : vector<8x512xf32> to vector<8x128xf32>
    %cst_26 = arith.constant 5.000000e-01 : f32
    %61 = vector.broadcast %cst_26 : f32 to vector<8x128xf32>
    %62 = arith.mulf %61, %60 : vector<8x128xf32>
    %63 = math.tanh %62 : vector<8x128xf32>
    %cst_27 = arith.constant 5.000000e-01 : f32
    %64 = vector.broadcast %cst_27 : f32 to vector<8x128xf32>
    %65 = arith.mulf %64, %63 : vector<8x128xf32>
    %cst_28 = arith.constant 5.000000e-01 : f32
    %66 = vector.broadcast %cst_28 : f32 to vector<8x128xf32>
    %67 = arith.addf %65, %66 : vector<8x128xf32>
    %68 = vector.extract_strided_slice %51 {offsets = [0, 256], sizes = [8, 128], strides = [1, 1]} : vector<8x512xf32> to vector<8x128xf32>
    %69 = math.tanh %68 : vector<8x128xf32>
    %70 = vector.extract_strided_slice %51 {offsets = [0, 384], sizes = [8, 128], strides = [1, 1]} : vector<8x512xf32> to vector<8x128xf32>
    %cst_29 = arith.constant 5.000000e-01 : f32
    %71 = vector.broadcast %cst_29 : f32 to vector<8x128xf32>
    %72 = arith.mulf %71, %70 : vector<8x128xf32>
    %73 = math.tanh %72 : vector<8x128xf32>
    %cst_30 = arith.constant 5.000000e-01 : f32
    %74 = vector.broadcast %cst_30 : f32 to vector<8x128xf32>
    %75 = arith.mulf %74, %73 : vector<8x128xf32>
    %cst_31 = arith.constant 5.000000e-01 : f32
    %76 = vector.broadcast %cst_31 : f32 to vector<8x128xf32>
    %77 = arith.addf %75, %76 : vector<8x128xf32>
    %78 = arith.mulf %67, %9 : vector<8x128xf32>
    %79 = arith.mulf %59, %69 : vector<8x128xf32>
    %80 = arith.addf %78, %79 : vector<8x128xf32>
    %81 = math.tanh %80 : vector<8x128xf32>
    %82 = arith.mulf %77, %81 : vector<8x128xf32>
    %83 = vector.extract_strided_slice %5 {offsets = [8, 0], sizes = [8, 512], strides = [1, 1]} : vector<64x512xf32> to vector<8x512xf32>
    %84 = vector.extract_strided_slice %49 {offsets = [0, 0], sizes = [8, 512], strides = [1, 1]} : vector<8x1024xf32> to vector<8x512xf32>
    %85 = arith.addf %83, %84 : vector<8x512xf32>
    %86 = vector.extract_strided_slice %85 {offsets = [0, 0], sizes = [8, 128], strides = [1, 1]} : vector<8x512xf32> to vector<8x128xf32>
    %cst_32 = arith.constant 5.000000e-01 : f32
    %87 = vector.broadcast %cst_32 : f32 to vector<8x128xf32>
    %88 = arith.mulf %87, %86 : vector<8x128xf32>
    %89 = math.tanh %88 : vector<8x128xf32>
    %cst_33 = arith.constant 5.000000e-01 : f32
    %90 = vector.broadcast %cst_33 : f32 to vector<8x128xf32>
    %91 = arith.mulf %90, %89 : vector<8x128xf32>
    %cst_34 = arith.constant 5.000000e-01 : f32
    %92 = vector.broadcast %cst_34 : f32 to vector<8x128xf32>
    %93 = arith.addf %91, %92 : vector<8x128xf32>
    %94 = vector.extract_strided_slice %85 {offsets = [0, 128], sizes = [8, 128], strides = [1, 1]} : vector<8x512xf32> to vector<8x128xf32>
    %cst_35 = arith.constant 5.000000e-01 : f32
    %95 = vector.broadcast %cst_35 : f32 to vector<8x128xf32>
    %96 = arith.mulf %95, %94 : vector<8x128xf32>
    %97 = math.tanh %96 : vector<8x128xf32>
    %cst_36 = arith.constant 5.000000e-01 : f32
    %98 = vector.broadcast %cst_36 : f32 to vector<8x128xf32>
    %99 = arith.mulf %98, %97 : vector<8x128xf32>
    %cst_37 = arith.constant 5.000000e-01 : f32
    %100 = vector.broadcast %cst_37 : f32 to vector<8x128xf32>
    %101 = arith.addf %99, %100 : vector<8x128xf32>
    %102 = vector.extract_strided_slice %85 {offsets = [0, 256], sizes = [8, 128], strides = [1, 1]} : vector<8x512xf32> to vector<8x128xf32>
    %103 = math.tanh %102 : vector<8x128xf32>
    %104 = vector.extract_strided_slice %85 {offsets = [0, 384], sizes = [8, 128], strides = [1, 1]} : vector<8x512xf32> to vector<8x128xf32>
    %cst_38 = arith.constant 5.000000e-01 : f32
    %105 = vector.broadcast %cst_38 : f32 to vector<8x128xf32>
    %106 = arith.mulf %105, %104 : vector<8x128xf32>
    %107 = math.tanh %106 : vector<8x128xf32>
    %cst_39 = arith.constant 5.000000e-01 : f32
    %108 = vector.broadcast %cst_39 : f32 to vector<8x128xf32>
    %109 = arith.mulf %108, %107 : vector<8x128xf32>
    %cst_40 = arith.constant 5.000000e-01 : f32
    %110 = vector.broadcast %cst_40 : f32 to vector<8x128xf32>
    %111 = arith.addf %109, %110 : vector<8x128xf32>
    %112 = arith.mulf %101, %44 : vector<8x128xf32>
    %113 = arith.mulf %93, %103 : vector<8x128xf32>
    %114 = arith.addf %112, %113 : vector<8x128xf32>
    %115 = math.tanh %114 : vector<8x128xf32>
    %116 = arith.mulf %111, %115 : vector<8x128xf32>
    %117 = tpu.concatenate %116, %82 in 1 : vector<8x128xf32>, vector<8x128xf32> -> vector<8x256xf32>
    %c0_41 = arith.constant 0 : index
    %c0_42 = arith.constant 0 : index
    %118 = vector.load %arg3[%c0_41, %c0_42] : memref<256x1024xf32, #tpu.memory_space<vmem>>, vector<256x1024xf32>
    %cst_43 = arith.constant dense<0.000000e+00> : vector<8x1024xf32>
    %119 = tpu.matmul %117, %118, %cst_43 {dimension_numbers = #tpu.dot_dimension_numbers<[1], [0], [0], [1], [0, 0, 1, 1], [], []>} : vector<8x256xf32>, vector<256x1024xf32>, vector<8x1024xf32> -> vector<8x1024xf32>
    %120 = vector.extract_strided_slice %119 {offsets = [0, 512], sizes = [8, 512], strides = [1, 1]} : vector<8x1024xf32> to vector<8x512xf32>
    %121 = arith.addf %120, %8 : vector<8x512xf32>
    %122 = vector.extract_strided_slice %121 {offsets = [0, 0], sizes = [8, 128], strides = [1, 1]} : vector<8x512xf32> to vector<8x128xf32>
    %cst_44 = arith.constant 5.000000e-01 : f32
    %123 = vector.broadcast %cst_44 : f32 to vector<8x128xf32>
    %124 = arith.mulf %123, %122 : vector<8x128xf32>
    %125 = math.tanh %124 : vector<8x128xf32>
    %cst_45 = arith.constant 5.000000e-01 : f32
    %126 = vector.broadcast %cst_45 : f32 to vector<8x128xf32>
    %127 = arith.mulf %126, %125 : vector<8x128xf32>
    %cst_46 = arith.constant 5.000000e-01 : f32
    %128 = vector.broadcast %cst_46 : f32 to vector<8x128xf32>
    %129 = arith.addf %127, %128 : vector<8x128xf32>
    %130 = vector.extract_strided_slice %121 {offsets = [0, 128], sizes = [8, 128], strides = [1, 1]} : vector<8x512xf32> to vector<8x128xf32>
    %cst_47 = arith.constant 5.000000e-01 : f32
    %131 = vector.broadcast %cst_47 : f32 to vector<8x128xf32>
    %132 = arith.mulf %131, %130 : vector<8x128xf32>
    %133 = math.tanh %132 : vector<8x128xf32>
    %cst_48 = arith.constant 5.000000e-01 : f32
    %134 = vector.broadcast %cst_48 : f32 to vector<8x128xf32>
    %135 = arith.mulf %134, %133 : vector<8x128xf32>
    %cst_49 = arith.constant 5.000000e-01 : f32
    %136 = vector.broadcast %cst_49 : f32 to vector<8x128xf32>
    %137 = arith.addf %135, %136 : vector<8x128xf32>
    %138 = vector.extract_strided_slice %121 {offsets = [0, 256], sizes = [8, 128], strides = [1, 1]} : vector<8x512xf32> to vector<8x128xf32>
    %139 = math.tanh %138 : vector<8x128xf32>
    %140 = vector.extract_strided_slice %121 {offsets = [0, 384], sizes = [8, 128], strides = [1, 1]} : vector<8x512xf32> to vector<8x128xf32>
    %cst_50 = arith.constant 5.000000e-01 : f32
    %141 = vector.broadcast %cst_50 : f32 to vector<8x128xf32>
    %142 = arith.mulf %141, %140 : vector<8x128xf32>
    %143 = math.tanh %142 : vector<8x128xf32>
    %cst_51 = arith.constant 5.000000e-01 : f32
    %144 = vector.broadcast %cst_51 : f32 to vector<8x128xf32>
    %145 = arith.mulf %144, %143 : vector<8x128xf32>
    %cst_52 = arith.constant 5.000000e-01 : f32
    %146 = vector.broadcast %cst_52 : f32 to vector<8x128xf32>
    %147 = arith.addf %145, %146 : vector<8x128xf32>
    %148 = arith.mulf %137, %80 : vector<8x128xf32>
    %149 = arith.mulf %129, %139 : vector<8x128xf32>
    %150 = arith.addf %148, %149 : vector<8x128xf32>
    %151 = math.tanh %150 : vector<8x128xf32>
    %152 = arith.mulf %147, %151 : vector<8x128xf32>
    %153 = vector.extract_strided_slice %5 {offsets = [16, 0], sizes = [8, 512], strides = [1, 1]} : vector<64x512xf32> to vector<8x512xf32>
    %154 = vector.extract_strided_slice %119 {offsets = [0, 0], sizes = [8, 512], strides = [1, 1]} : vector<8x1024xf32> to vector<8x512xf32>
    %155 = arith.addf %153, %154 : vector<8x512xf32>
    %156 = vector.extract_strided_slice %155 {offsets = [0, 0], sizes = [8, 128], strides = [1, 1]} : vector<8x512xf32> to vector<8x128xf32>
    %cst_53 = arith.constant 5.000000e-01 : f32
    %157 = vector.broadcast %cst_53 : f32 to vector<8x128xf32>
    %158 = arith.mulf %157, %156 : vector<8x128xf32>
    %159 = math.tanh %158 : vector<8x128xf32>
    %cst_54 = arith.constant 5.000000e-01 : f32
    %160 = vector.broadcast %cst_54 : f32 to vector<8x128xf32>
    %161 = arith.mulf %160, %159 : vector<8x128xf32>
    %cst_55 = arith.constant 5.000000e-01 : f32
    %162 = vector.broadcast %cst_55 : f32 to vector<8x128xf32>
    %163 = arith.addf %161, %162 : vector<8x128xf32>
    %164 = vector.extract_strided_slice %155 {offsets = [0, 128], sizes = [8, 128], strides = [1, 1]} : vector<8x512xf32> to vector<8x128xf32>
    %cst_56 = arith.constant 5.000000e-01 : f32
    %165 = vector.broadcast %cst_56 : f32 to vector<8x128xf32>
    %166 = arith.mulf %165, %164 : vector<8x128xf32>
    %167 = math.tanh %166 : vector<8x128xf32>
    %cst_57 = arith.constant 5.000000e-01 : f32
    %168 = vector.broadcast %cst_57 : f32 to vector<8x128xf32>
    %169 = arith.mulf %168, %167 : vector<8x128xf32>
    %cst_58 = arith.constant 5.000000e-01 : f32
    %170 = vector.broadcast %cst_58 : f32 to vector<8x128xf32>
    %171 = arith.addf %169, %170 : vector<8x128xf32>
    %172 = vector.extract_strided_slice %155 {offsets = [0, 256], sizes = [8, 128], strides = [1, 1]} : vector<8x512xf32> to vector<8x128xf32>
    %173 = math.tanh %172 : vector<8x128xf32>
    %174 = vector.extract_strided_slice %155 {offsets = [0, 384], sizes = [8, 128], strides = [1, 1]} : vector<8x512xf32> to vector<8x128xf32>
    %cst_59 = arith.constant 5.000000e-01 : f32
    %175 = vector.broadcast %cst_59 : f32 to vector<8x128xf32>
    %176 = arith.mulf %175, %174 : vector<8x128xf32>
    %177 = math.tanh %176 : vector<8x128xf32>
    %cst_60 = arith.constant 5.000000e-01 : f32
    %178 = vector.broadcast %cst_60 : f32 to vector<8x128xf32>
    %179 = arith.mulf %178, %177 : vector<8x128xf32>
    %cst_61 = arith.constant 5.000000e-01 : f32
    %180 = vector.broadcast %cst_61 : f32 to vector<8x128xf32>
    %181 = arith.addf %179, %180 : vector<8x128xf32>
    %182 = arith.mulf %171, %114 : vector<8x128xf32>
    %183 = arith.mulf %163, %173 : vector<8x128xf32>
    %184 = arith.addf %182, %183 : vector<8x128xf32>
    %185 = math.tanh %184 : vector<8x128xf32>
    %186 = arith.mulf %181, %185 : vector<8x128xf32>
    %187 = tpu.concatenate %186, %152 in 1 : vector<8x128xf32>, vector<8x128xf32> -> vector<8x256xf32>
    %c0_62 = arith.constant 0 : index
    %c0_63 = arith.constant 0 : index
    %188 = vector.load %arg3[%c0_62, %c0_63] : memref<256x1024xf32, #tpu.memory_space<vmem>>, vector<256x1024xf32>
    %cst_64 = arith.constant dense<0.000000e+00> : vector<8x1024xf32>
    %189 = tpu.matmul %187, %188, %cst_64 {dimension_numbers = #tpu.dot_dimension_numbers<[1], [0], [0], [1], [0, 0, 1, 1], [], []>} : vector<8x256xf32>, vector<256x1024xf32>, vector<8x1024xf32> -> vector<8x1024xf32>
    %190 = vector.extract_strided_slice %189 {offsets = [0, 512], sizes = [8, 512], strides = [1, 1]} : vector<8x1024xf32> to vector<8x512xf32>
    %191 = arith.addf %190, %8 : vector<8x512xf32>
    %192 = vector.extract_strided_slice %191 {offsets = [0, 0], sizes = [8, 128], strides = [1, 1]} : vector<8x512xf32> to vector<8x128xf32>
    %cst_65 = arith.constant 5.000000e-01 : f32
    %193 = vector.broadcast %cst_65 : f32 to vector<8x128xf32>
    %194 = arith.mulf %193, %192 : vector<8x128xf32>
    %195 = math.tanh %194 : vector<8x128xf32>
    %cst_66 = arith.constant 5.000000e-01 : f32
    %196 = vector.broadcast %cst_66 : f32 to vector<8x128xf32>
    %197 = arith.mulf %196, %195 : vector<8x128xf32>
    %cst_67 = arith.constant 5.000000e-01 : f32
    %198 = vector.broadcast %cst_67 : f32 to vector<8x128xf32>
    %199 = arith.addf %197, %198 : vector<8x128xf32>
    %200 = vector.extract_strided_slice %191 {offsets = [0, 128], sizes = [8, 128], strides = [1, 1]} : vector<8x512xf32> to vector<8x128xf32>
    %cst_68 = arith.constant 5.000000e-01 : f32
    %201 = vector.broadcast %cst_68 : f32 to vector<8x128xf32>
    %202 = arith.mulf %201, %200 : vector<8x128xf32>
    %203 = math.tanh %202 : vector<8x128xf32>
    %cst_69 = arith.constant 5.000000e-01 : f32
    %204 = vector.broadcast %cst_69 : f32 to vector<8x128xf32>
    %205 = arith.mulf %204, %203 : vector<8x128xf32>
    %cst_70 = arith.constant 5.000000e-01 : f32
    %206 = vector.broadcast %cst_70 : f32 to vector<8x128xf32>
    %207 = arith.addf %205, %206 : vector<8x128xf32>
    %208 = vector.extract_strided_slice %191 {offsets = [0, 256], sizes = [8, 128], strides = [1, 1]} : vector<8x512xf32> to vector<8x128xf32>
    %209 = math.tanh %208 : vector<8x128xf32>
    %210 = vector.extract_strided_slice %191 {offsets = [0, 384], sizes = [8, 128], strides = [1, 1]} : vector<8x512xf32> to vector<8x128xf32>
    %cst_71 = arith.constant 5.000000e-01 : f32
    %211 = vector.broadcast %cst_71 : f32 to vector<8x128xf32>
    %212 = arith.mulf %211, %210 : vector<8x128xf32>
    %213 = math.tanh %212 : vector<8x128xf32>
    %cst_72 = arith.constant 5.000000e-01 : f32
    %214 = vector.broadcast %cst_72 : f32 to vector<8x128xf32>
    %215 = arith.mulf %214, %213 : vector<8x128xf32>
    %cst_73 = arith.constant 5.000000e-01 : f32
    %216 = vector.broadcast %cst_73 : f32 to vector<8x128xf32>
    %217 = arith.addf %215, %216 : vector<8x128xf32>
    %218 = arith.mulf %207, %150 : vector<8x128xf32>
    %219 = arith.mulf %199, %209 : vector<8x128xf32>
    %220 = arith.addf %218, %219 : vector<8x128xf32>
    %221 = math.tanh %220 : vector<8x128xf32>
    %222 = arith.mulf %217, %221 : vector<8x128xf32>
    %223 = vector.extract_strided_slice %5 {offsets = [24, 0], sizes = [8, 512], strides = [1, 1]} : vector<64x512xf32> to vector<8x512xf32>
    %224 = vector.extract_strided_slice %189 {offsets = [0, 0], sizes = [8, 512], strides = [1, 1]} : vector<8x1024xf32> to vector<8x512xf32>
    %225 = arith.addf %223, %224 : vector<8x512xf32>
    %226 = vector.extract_strided_slice %225 {offsets = [0, 0], sizes = [8, 128], strides = [1, 1]} : vector<8x512xf32> to vector<8x128xf32>
    %cst_74 = arith.constant 5.000000e-01 : f32
    %227 = vector.broadcast %cst_74 : f32 to vector<8x128xf32>
    %228 = arith.mulf %227, %226 : vector<8x128xf32>
    %229 = math.tanh %228 : vector<8x128xf32>
    %cst_75 = arith.constant 5.000000e-01 : f32
    %230 = vector.broadcast %cst_75 : f32 to vector<8x128xf32>
    %231 = arith.mulf %230, %229 : vector<8x128xf32>
    %cst_76 = arith.constant 5.000000e-01 : f32
    %232 = vector.broadcast %cst_76 : f32 to vector<8x128xf32>
    %233 = arith.addf %231, %232 : vector<8x128xf32>
    %234 = vector.extract_strided_slice %225 {offsets = [0, 128], sizes = [8, 128], strides = [1, 1]} : vector<8x512xf32> to vector<8x128xf32>
    %cst_77 = arith.constant 5.000000e-01 : f32
    %235 = vector.broadcast %cst_77 : f32 to vector<8x128xf32>
    %236 = arith.mulf %235, %234 : vector<8x128xf32>
    %237 = math.tanh %236 : vector<8x128xf32>
    %cst_78 = arith.constant 5.000000e-01 : f32
    %238 = vector.broadcast %cst_78 : f32 to vector<8x128xf32>
    %239 = arith.mulf %238, %237 : vector<8x128xf32>
    %cst_79 = arith.constant 5.000000e-01 : f32
    %240 = vector.broadcast %cst_79 : f32 to vector<8x128xf32>
    %241 = arith.addf %239, %240 : vector<8x128xf32>
    %242 = vector.extract_strided_slice %225 {offsets = [0, 256], sizes = [8, 128], strides = [1, 1]} : vector<8x512xf32> to vector<8x128xf32>
    %243 = math.tanh %242 : vector<8x128xf32>
    %244 = vector.extract_strided_slice %225 {offsets = [0, 384], sizes = [8, 128], strides = [1, 1]} : vector<8x512xf32> to vector<8x128xf32>
    %cst_80 = arith.constant 5.000000e-01 : f32
    %245 = vector.broadcast %cst_80 : f32 to vector<8x128xf32>
    %246 = arith.mulf %245, %244 : vector<8x128xf32>
    %247 = math.tanh %246 : vector<8x128xf32>
    %cst_81 = arith.constant 5.000000e-01 : f32
    %248 = vector.broadcast %cst_81 : f32 to vector<8x128xf32>
    %249 = arith.mulf %248, %247 : vector<8x128xf32>
    %cst_82 = arith.constant 5.000000e-01 : f32
    %250 = vector.broadcast %cst_82 : f32 to vector<8x128xf32>
    %251 = arith.addf %249, %250 : vector<8x128xf32>
    %252 = arith.mulf %241, %184 : vector<8x128xf32>
    %253 = arith.mulf %233, %243 : vector<8x128xf32>
    %254 = arith.addf %252, %253 : vector<8x128xf32>
    %255 = math.tanh %254 : vector<8x128xf32>
    %256 = arith.mulf %251, %255 : vector<8x128xf32>
    %257 = tpu.concatenate %256, %222 in 1 : vector<8x128xf32>, vector<8x128xf32> -> vector<8x256xf32>
    %c0_83 = arith.constant 0 : index
    %c0_84 = arith.constant 0 : index
    %258 = vector.load %arg3[%c0_83, %c0_84] : memref<256x1024xf32, #tpu.memory_space<vmem>>, vector<256x1024xf32>
    %cst_85 = arith.constant dense<0.000000e+00> : vector<8x1024xf32>
    %259 = tpu.matmul %257, %258, %cst_85 {dimension_numbers = #tpu.dot_dimension_numbers<[1], [0], [0], [1], [0, 0, 1, 1], [], []>} : vector<8x256xf32>, vector<256x1024xf32>, vector<8x1024xf32> -> vector<8x1024xf32>
    %260 = vector.extract_strided_slice %259 {offsets = [0, 512], sizes = [8, 512], strides = [1, 1]} : vector<8x1024xf32> to vector<8x512xf32>
    %261 = arith.addf %260, %8 : vector<8x512xf32>
    %262 = vector.extract_strided_slice %261 {offsets = [0, 0], sizes = [8, 128], strides = [1, 1]} : vector<8x512xf32> to vector<8x128xf32>
    %cst_86 = arith.constant 5.000000e-01 : f32
    %263 = vector.broadcast %cst_86 : f32 to vector<8x128xf32>
    %264 = arith.mulf %263, %262 : vector<8x128xf32>
    %265 = math.tanh %264 : vector<8x128xf32>
    %cst_87 = arith.constant 5.000000e-01 : f32
    %266 = vector.broadcast %cst_87 : f32 to vector<8x128xf32>
    %267 = arith.mulf %266, %265 : vector<8x128xf32>
    %cst_88 = arith.constant 5.000000e-01 : f32
    %268 = vector.broadcast %cst_88 : f32 to vector<8x128xf32>
    %269 = arith.addf %267, %268 : vector<8x128xf32>
    %270 = vector.extract_strided_slice %261 {offsets = [0, 128], sizes = [8, 128], strides = [1, 1]} : vector<8x512xf32> to vector<8x128xf32>
    %cst_89 = arith.constant 5.000000e-01 : f32
    %271 = vector.broadcast %cst_89 : f32 to vector<8x128xf32>
    %272 = arith.mulf %271, %270 : vector<8x128xf32>
    %273 = math.tanh %272 : vector<8x128xf32>
    %cst_90 = arith.constant 5.000000e-01 : f32
    %274 = vector.broadcast %cst_90 : f32 to vector<8x128xf32>
    %275 = arith.mulf %274, %273 : vector<8x128xf32>
    %cst_91 = arith.constant 5.000000e-01 : f32
    %276 = vector.broadcast %cst_91 : f32 to vector<8x128xf32>
    %277 = arith.addf %275, %276 : vector<8x128xf32>
    %278 = vector.extract_strided_slice %261 {offsets = [0, 256], sizes = [8, 128], strides = [1, 1]} : vector<8x512xf32> to vector<8x128xf32>
    %279 = math.tanh %278 : vector<8x128xf32>
    %280 = vector.extract_strided_slice %261 {offsets = [0, 384], sizes = [8, 128], strides = [1, 1]} : vector<8x512xf32> to vector<8x128xf32>
    %cst_92 = arith.constant 5.000000e-01 : f32
    %281 = vector.broadcast %cst_92 : f32 to vector<8x128xf32>
    %282 = arith.mulf %281, %280 : vector<8x128xf32>
    %283 = math.tanh %282 : vector<8x128xf32>
    %cst_93 = arith.constant 5.000000e-01 : f32
    %284 = vector.broadcast %cst_93 : f32 to vector<8x128xf32>
    %285 = arith.mulf %284, %283 : vector<8x128xf32>
    %cst_94 = arith.constant 5.000000e-01 : f32
    %286 = vector.broadcast %cst_94 : f32 to vector<8x128xf32>
    %287 = arith.addf %285, %286 : vector<8x128xf32>
    %288 = arith.mulf %277, %220 : vector<8x128xf32>
    %289 = arith.mulf %269, %279 : vector<8x128xf32>
    %290 = arith.addf %288, %289 : vector<8x128xf32>
    %291 = math.tanh %290 : vector<8x128xf32>
    %292 = arith.mulf %287, %291 : vector<8x128xf32>
    %293 = vector.extract_strided_slice %5 {offsets = [32, 0], sizes = [8, 512], strides = [1, 1]} : vector<64x512xf32> to vector<8x512xf32>
    %294 = vector.extract_strided_slice %259 {offsets = [0, 0], sizes = [8, 512], strides = [1, 1]} : vector<8x1024xf32> to vector<8x512xf32>
    %295 = arith.addf %293, %294 : vector<8x512xf32>
    %296 = vector.extract_strided_slice %295 {offsets = [0, 0], sizes = [8, 128], strides = [1, 1]} : vector<8x512xf32> to vector<8x128xf32>
    %cst_95 = arith.constant 5.000000e-01 : f32
    %297 = vector.broadcast %cst_95 : f32 to vector<8x128xf32>
    %298 = arith.mulf %297, %296 : vector<8x128xf32>
    %299 = math.tanh %298 : vector<8x128xf32>
    %cst_96 = arith.constant 5.000000e-01 : f32
    %300 = vector.broadcast %cst_96 : f32 to vector<8x128xf32>
    %301 = arith.mulf %300, %299 : vector<8x128xf32>
    %cst_97 = arith.constant 5.000000e-01 : f32
    %302 = vector.broadcast %cst_97 : f32 to vector<8x128xf32>
    %303 = arith.addf %301, %302 : vector<8x128xf32>
    %304 = vector.extract_strided_slice %295 {offsets = [0, 128], sizes = [8, 128], strides = [1, 1]} : vector<8x512xf32> to vector<8x128xf32>
    %cst_98 = arith.constant 5.000000e-01 : f32
    %305 = vector.broadcast %cst_98 : f32 to vector<8x128xf32>
    %306 = arith.mulf %305, %304 : vector<8x128xf32>
    %307 = math.tanh %306 : vector<8x128xf32>
    %cst_99 = arith.constant 5.000000e-01 : f32
    %308 = vector.broadcast %cst_99 : f32 to vector<8x128xf32>
    %309 = arith.mulf %308, %307 : vector<8x128xf32>
    %cst_100 = arith.constant 5.000000e-01 : f32
    %310 = vector.broadcast %cst_100 : f32 to vector<8x128xf32>
    %311 = arith.addf %309, %310 : vector<8x128xf32>
    %312 = vector.extract_strided_slice %295 {offsets = [0, 256], sizes = [8, 128], strides = [1, 1]} : vector<8x512xf32> to vector<8x128xf32>
    %313 = math.tanh %312 : vector<8x128xf32>
    %314 = vector.extract_strided_slice %295 {offsets = [0, 384], sizes = [8, 128], strides = [1, 1]} : vector<8x512xf32> to vector<8x128xf32>
    %cst_101 = arith.constant 5.000000e-01 : f32
    %315 = vector.broadcast %cst_101 : f32 to vector<8x128xf32>
    %316 = arith.mulf %315, %314 : vector<8x128xf32>
    %317 = math.tanh %316 : vector<8x128xf32>
    %cst_102 = arith.constant 5.000000e-01 : f32
    %318 = vector.broadcast %cst_102 : f32 to vector<8x128xf32>
    %319 = arith.mulf %318, %317 : vector<8x128xf32>
    %cst_103 = arith.constant 5.000000e-01 : f32
    %320 = vector.broadcast %cst_103 : f32 to vector<8x128xf32>
    %321 = arith.addf %319, %320 : vector<8x128xf32>
    %322 = arith.mulf %311, %254 : vector<8x128xf32>
    %323 = arith.mulf %303, %313 : vector<8x128xf32>
    %324 = arith.addf %322, %323 : vector<8x128xf32>
    %325 = math.tanh %324 : vector<8x128xf32>
    %326 = arith.mulf %321, %325 : vector<8x128xf32>
    %327 = tpu.concatenate %326, %292 in 1 : vector<8x128xf32>, vector<8x128xf32> -> vector<8x256xf32>
    %c0_104 = arith.constant 0 : index
    %c0_105 = arith.constant 0 : index
    %328 = vector.load %arg3[%c0_104, %c0_105] : memref<256x1024xf32, #tpu.memory_space<vmem>>, vector<256x1024xf32>
    %cst_106 = arith.constant dense<0.000000e+00> : vector<8x1024xf32>
    %329 = tpu.matmul %327, %328, %cst_106 {dimension_numbers = #tpu.dot_dimension_numbers<[1], [0], [0], [1], [0, 0, 1, 1], [], []>} : vector<8x256xf32>, vector<256x1024xf32>, vector<8x1024xf32> -> vector<8x1024xf32>
    %330 = vector.extract_strided_slice %329 {offsets = [0, 512], sizes = [8, 512], strides = [1, 1]} : vector<8x1024xf32> to vector<8x512xf32>
    %331 = arith.addf %330, %8 : vector<8x512xf32>
    %332 = vector.extract_strided_slice %331 {offsets = [0, 0], sizes = [8, 128], strides = [1, 1]} : vector<8x512xf32> to vector<8x128xf32>
    %cst_107 = arith.constant 5.000000e-01 : f32
    %333 = vector.broadcast %cst_107 : f32 to vector<8x128xf32>
    %334 = arith.mulf %333, %332 : vector<8x128xf32>
    %335 = math.tanh %334 : vector<8x128xf32>
    %cst_108 = arith.constant 5.000000e-01 : f32
    %336 = vector.broadcast %cst_108 : f32 to vector<8x128xf32>
    %337 = arith.mulf %336, %335 : vector<8x128xf32>
    %cst_109 = arith.constant 5.000000e-01 : f32
    %338 = vector.broadcast %cst_109 : f32 to vector<8x128xf32>
    %339 = arith.addf %337, %338 : vector<8x128xf32>
    %340 = vector.extract_strided_slice %331 {offsets = [0, 128], sizes = [8, 128], strides = [1, 1]} : vector<8x512xf32> to vector<8x128xf32>
    %cst_110 = arith.constant 5.000000e-01 : f32
    %341 = vector.broadcast %cst_110 : f32 to vector<8x128xf32>
    %342 = arith.mulf %341, %340 : vector<8x128xf32>
    %343 = math.tanh %342 : vector<8x128xf32>
    %cst_111 = arith.constant 5.000000e-01 : f32
    %344 = vector.broadcast %cst_111 : f32 to vector<8x128xf32>
    %345 = arith.mulf %344, %343 : vector<8x128xf32>
    %cst_112 = arith.constant 5.000000e-01 : f32
    %346 = vector.broadcast %cst_112 : f32 to vector<8x128xf32>
    %347 = arith.addf %345, %346 : vector<8x128xf32>
    %348 = vector.extract_strided_slice %331 {offsets = [0, 256], sizes = [8, 128], strides = [1, 1]} : vector<8x512xf32> to vector<8x128xf32>
    %349 = math.tanh %348 : vector<8x128xf32>
    %350 = vector.extract_strided_slice %331 {offsets = [0, 384], sizes = [8, 128], strides = [1, 1]} : vector<8x512xf32> to vector<8x128xf32>
    %cst_113 = arith.constant 5.000000e-01 : f32
    %351 = vector.broadcast %cst_113 : f32 to vector<8x128xf32>
    %352 = arith.mulf %351, %350 : vector<8x128xf32>
    %353 = math.tanh %352 : vector<8x128xf32>
    %cst_114 = arith.constant 5.000000e-01 : f32
    %354 = vector.broadcast %cst_114 : f32 to vector<8x128xf32>
    %355 = arith.mulf %354, %353 : vector<8x128xf32>
    %cst_115 = arith.constant 5.000000e-01 : f32
    %356 = vector.broadcast %cst_115 : f32 to vector<8x128xf32>
    %357 = arith.addf %355, %356 : vector<8x128xf32>
    %358 = arith.mulf %347, %290 : vector<8x128xf32>
    %359 = arith.mulf %339, %349 : vector<8x128xf32>
    %360 = arith.addf %358, %359 : vector<8x128xf32>
    %361 = math.tanh %360 : vector<8x128xf32>
    %362 = arith.mulf %357, %361 : vector<8x128xf32>
    %363 = vector.extract_strided_slice %5 {offsets = [40, 0], sizes = [8, 512], strides = [1, 1]} : vector<64x512xf32> to vector<8x512xf32>
    %364 = vector.extract_strided_slice %329 {offsets = [0, 0], sizes = [8, 512], strides = [1, 1]} : vector<8x1024xf32> to vector<8x512xf32>
    %365 = arith.addf %363, %364 : vector<8x512xf32>
    %366 = vector.extract_strided_slice %365 {offsets = [0, 0], sizes = [8, 128], strides = [1, 1]} : vector<8x512xf32> to vector<8x128xf32>
    %cst_116 = arith.constant 5.000000e-01 : f32
    %367 = vector.broadcast %cst_116 : f32 to vector<8x128xf32>
    %368 = arith.mulf %367, %366 : vector<8x128xf32>
    %369 = math.tanh %368 : vector<8x128xf32>
    %cst_117 = arith.constant 5.000000e-01 : f32
    %370 = vector.broadcast %cst_117 : f32 to vector<8x128xf32>
    %371 = arith.mulf %370, %369 : vector<8x128xf32>
    %cst_118 = arith.constant 5.000000e-01 : f32
    %372 = vector.broadcast %cst_118 : f32 to vector<8x128xf32>
    %373 = arith.addf %371, %372 : vector<8x128xf32>
    %374 = vector.extract_strided_slice %365 {offsets = [0, 128], sizes = [8, 128], strides = [1, 1]} : vector<8x512xf32> to vector<8x128xf32>
    %cst_119 = arith.constant 5.000000e-01 : f32
    %375 = vector.broadcast %cst_119 : f32 to vector<8x128xf32>
    %376 = arith.mulf %375, %374 : vector<8x128xf32>
    %377 = math.tanh %376 : vector<8x128xf32>
    %cst_120 = arith.constant 5.000000e-01 : f32
    %378 = vector.broadcast %cst_120 : f32 to vector<8x128xf32>
    %379 = arith.mulf %378, %377 : vector<8x128xf32>
    %cst_121 = arith.constant 5.000000e-01 : f32
    %380 = vector.broadcast %cst_121 : f32 to vector<8x128xf32>
    %381 = arith.addf %379, %380 : vector<8x128xf32>
    %382 = vector.extract_strided_slice %365 {offsets = [0, 256], sizes = [8, 128], strides = [1, 1]} : vector<8x512xf32> to vector<8x128xf32>
    %383 = math.tanh %382 : vector<8x128xf32>
    %384 = vector.extract_strided_slice %365 {offsets = [0, 384], sizes = [8, 128], strides = [1, 1]} : vector<8x512xf32> to vector<8x128xf32>
    %cst_122 = arith.constant 5.000000e-01 : f32
    %385 = vector.broadcast %cst_122 : f32 to vector<8x128xf32>
    %386 = arith.mulf %385, %384 : vector<8x128xf32>
    %387 = math.tanh %386 : vector<8x128xf32>
    %cst_123 = arith.constant 5.000000e-01 : f32
    %388 = vector.broadcast %cst_123 : f32 to vector<8x128xf32>
    %389 = arith.mulf %388, %387 : vector<8x128xf32>
    %cst_124 = arith.constant 5.000000e-01 : f32
    %390 = vector.broadcast %cst_124 : f32 to vector<8x128xf32>
    %391 = arith.addf %389, %390 : vector<8x128xf32>
    %392 = arith.mulf %381, %324 : vector<8x128xf32>
    %393 = arith.mulf %373, %383 : vector<8x128xf32>
    %394 = arith.addf %392, %393 : vector<8x128xf32>
    %395 = math.tanh %394 : vector<8x128xf32>
    %396 = arith.mulf %391, %395 : vector<8x128xf32>
    %397 = tpu.concatenate %396, %362 in 1 : vector<8x128xf32>, vector<8x128xf32> -> vector<8x256xf32>
    %c0_125 = arith.constant 0 : index
    %c0_126 = arith.constant 0 : index
    %398 = vector.load %arg3[%c0_125, %c0_126] : memref<256x1024xf32, #tpu.memory_space<vmem>>, vector<256x1024xf32>
    %cst_127 = arith.constant dense<0.000000e+00> : vector<8x1024xf32>
    %399 = tpu.matmul %397, %398, %cst_127 {dimension_numbers = #tpu.dot_dimension_numbers<[1], [0], [0], [1], [0, 0, 1, 1], [], []>} : vector<8x256xf32>, vector<256x1024xf32>, vector<8x1024xf32> -> vector<8x1024xf32>
    %400 = vector.extract_strided_slice %399 {offsets = [0, 512], sizes = [8, 512], strides = [1, 1]} : vector<8x1024xf32> to vector<8x512xf32>
    %401 = arith.addf %400, %8 : vector<8x512xf32>
    %402 = vector.extract_strided_slice %401 {offsets = [0, 0], sizes = [8, 128], strides = [1, 1]} : vector<8x512xf32> to vector<8x128xf32>
    %cst_128 = arith.constant 5.000000e-01 : f32
    %403 = vector.broadcast %cst_128 : f32 to vector<8x128xf32>
    %404 = arith.mulf %403, %402 : vector<8x128xf32>
    %405 = math.tanh %404 : vector<8x128xf32>
    %cst_129 = arith.constant 5.000000e-01 : f32
    %406 = vector.broadcast %cst_129 : f32 to vector<8x128xf32>
    %407 = arith.mulf %406, %405 : vector<8x128xf32>
    %cst_130 = arith.constant 5.000000e-01 : f32
    %408 = vector.broadcast %cst_130 : f32 to vector<8x128xf32>
    %409 = arith.addf %407, %408 : vector<8x128xf32>
    %410 = vector.extract_strided_slice %401 {offsets = [0, 128], sizes = [8, 128], strides = [1, 1]} : vector<8x512xf32> to vector<8x128xf32>
    %cst_131 = arith.constant 5.000000e-01 : f32
    %411 = vector.broadcast %cst_131 : f32 to vector<8x128xf32>
    %412 = arith.mulf %411, %410 : vector<8x128xf32>
    %413 = math.tanh %412 : vector<8x128xf32>
    %cst_132 = arith.constant 5.000000e-01 : f32
    %414 = vector.broadcast %cst_132 : f32 to vector<8x128xf32>
    %415 = arith.mulf %414, %413 : vector<8x128xf32>
    %cst_133 = arith.constant 5.000000e-01 : f32
    %416 = vector.broadcast %cst_133 : f32 to vector<8x128xf32>
    %417 = arith.addf %415, %416 : vector<8x128xf32>
    %418 = vector.extract_strided_slice %401 {offsets = [0, 256], sizes = [8, 128], strides = [1, 1]} : vector<8x512xf32> to vector<8x128xf32>
    %419 = math.tanh %418 : vector<8x128xf32>
    %420 = vector.extract_strided_slice %401 {offsets = [0, 384], sizes = [8, 128], strides = [1, 1]} : vector<8x512xf32> to vector<8x128xf32>
    %cst_134 = arith.constant 5.000000e-01 : f32
    %421 = vector.broadcast %cst_134 : f32 to vector<8x128xf32>
    %422 = arith.mulf %421, %420 : vector<8x128xf32>
    %423 = math.tanh %422 : vector<8x128xf32>
    %cst_135 = arith.constant 5.000000e-01 : f32
    %424 = vector.broadcast %cst_135 : f32 to vector<8x128xf32>
    %425 = arith.mulf %424, %423 : vector<8x128xf32>
    %cst_136 = arith.constant 5.000000e-01 : f32
    %426 = vector.broadcast %cst_136 : f32 to vector<8x128xf32>
    %427 = arith.addf %425, %426 : vector<8x128xf32>
    %428 = arith.mulf %417, %360 : vector<8x128xf32>
    %429 = arith.mulf %409, %419 : vector<8x128xf32>
    %430 = arith.addf %428, %429 : vector<8x128xf32>
    %431 = math.tanh %430 : vector<8x128xf32>
    %432 = arith.mulf %427, %431 : vector<8x128xf32>
    %433 = vector.extract_strided_slice %5 {offsets = [48, 0], sizes = [8, 512], strides = [1, 1]} : vector<64x512xf32> to vector<8x512xf32>
    %434 = vector.extract_strided_slice %399 {offsets = [0, 0], sizes = [8, 512], strides = [1, 1]} : vector<8x1024xf32> to vector<8x512xf32>
    %435 = arith.addf %433, %434 : vector<8x512xf32>
    %436 = vector.extract_strided_slice %435 {offsets = [0, 0], sizes = [8, 128], strides = [1, 1]} : vector<8x512xf32> to vector<8x128xf32>
    %cst_137 = arith.constant 5.000000e-01 : f32
    %437 = vector.broadcast %cst_137 : f32 to vector<8x128xf32>
    %438 = arith.mulf %437, %436 : vector<8x128xf32>
    %439 = math.tanh %438 : vector<8x128xf32>
    %cst_138 = arith.constant 5.000000e-01 : f32
    %440 = vector.broadcast %cst_138 : f32 to vector<8x128xf32>
    %441 = arith.mulf %440, %439 : vector<8x128xf32>
    %cst_139 = arith.constant 5.000000e-01 : f32
    %442 = vector.broadcast %cst_139 : f32 to vector<8x128xf32>
    %443 = arith.addf %441, %442 : vector<8x128xf32>
    %444 = vector.extract_strided_slice %435 {offsets = [0, 128], sizes = [8, 128], strides = [1, 1]} : vector<8x512xf32> to vector<8x128xf32>
    %cst_140 = arith.constant 5.000000e-01 : f32
    %445 = vector.broadcast %cst_140 : f32 to vector<8x128xf32>
    %446 = arith.mulf %445, %444 : vector<8x128xf32>
    %447 = math.tanh %446 : vector<8x128xf32>
    %cst_141 = arith.constant 5.000000e-01 : f32
    %448 = vector.broadcast %cst_141 : f32 to vector<8x128xf32>
    %449 = arith.mulf %448, %447 : vector<8x128xf32>
    %cst_142 = arith.constant 5.000000e-01 : f32
    %450 = vector.broadcast %cst_142 : f32 to vector<8x128xf32>
    %451 = arith.addf %449, %450 : vector<8x128xf32>
    %452 = vector.extract_strided_slice %435 {offsets = [0, 256], sizes = [8, 128], strides = [1, 1]} : vector<8x512xf32> to vector<8x128xf32>
    %453 = math.tanh %452 : vector<8x128xf32>
    %454 = vector.extract_strided_slice %435 {offsets = [0, 384], sizes = [8, 128], strides = [1, 1]} : vector<8x512xf32> to vector<8x128xf32>
    %cst_143 = arith.constant 5.000000e-01 : f32
    %455 = vector.broadcast %cst_143 : f32 to vector<8x128xf32>
    %456 = arith.mulf %455, %454 : vector<8x128xf32>
    %457 = math.tanh %456 : vector<8x128xf32>
    %cst_144 = arith.constant 5.000000e-01 : f32
    %458 = vector.broadcast %cst_144 : f32 to vector<8x128xf32>
    %459 = arith.mulf %458, %457 : vector<8x128xf32>
    %cst_145 = arith.constant 5.000000e-01 : f32
    %460 = vector.broadcast %cst_145 : f32 to vector<8x128xf32>
    %461 = arith.addf %459, %460 : vector<8x128xf32>
    %462 = arith.mulf %451, %394 : vector<8x128xf32>
    %463 = arith.mulf %443, %453 : vector<8x128xf32>
    %464 = arith.addf %462, %463 : vector<8x128xf32>
    %465 = math.tanh %464 : vector<8x128xf32>
    %466 = arith.mulf %461, %465 : vector<8x128xf32>
    %467 = tpu.concatenate %466, %432 in 1 : vector<8x128xf32>, vector<8x128xf32> -> vector<8x256xf32>
    %c0_146 = arith.constant 0 : index
    %c0_147 = arith.constant 0 : index
    %468 = vector.load %arg3[%c0_146, %c0_147] : memref<256x1024xf32, #tpu.memory_space<vmem>>, vector<256x1024xf32>
    %cst_148 = arith.constant dense<0.000000e+00> : vector<8x1024xf32>
    %469 = tpu.matmul %467, %468, %cst_148 {dimension_numbers = #tpu.dot_dimension_numbers<[1], [0], [0], [1], [0, 0, 1, 1], [], []>} : vector<8x256xf32>, vector<256x1024xf32>, vector<8x1024xf32> -> vector<8x1024xf32>
    %470 = vector.extract_strided_slice %469 {offsets = [0, 512], sizes = [8, 512], strides = [1, 1]} : vector<8x1024xf32> to vector<8x512xf32>
    %471 = arith.addf %470, %8 : vector<8x512xf32>
    %472 = vector.extract_strided_slice %471 {offsets = [0, 0], sizes = [8, 128], strides = [1, 1]} : vector<8x512xf32> to vector<8x128xf32>
    %cst_149 = arith.constant 5.000000e-01 : f32
    %473 = vector.broadcast %cst_149 : f32 to vector<8x128xf32>
    %474 = arith.mulf %473, %472 : vector<8x128xf32>
    %475 = math.tanh %474 : vector<8x128xf32>
    %cst_150 = arith.constant 5.000000e-01 : f32
    %476 = vector.broadcast %cst_150 : f32 to vector<8x128xf32>
    %477 = arith.mulf %476, %475 : vector<8x128xf32>
    %cst_151 = arith.constant 5.000000e-01 : f32
    %478 = vector.broadcast %cst_151 : f32 to vector<8x128xf32>
    %479 = arith.addf %477, %478 : vector<8x128xf32>
    %480 = vector.extract_strided_slice %471 {offsets = [0, 128], sizes = [8, 128], strides = [1, 1]} : vector<8x512xf32> to vector<8x128xf32>
    %cst_152 = arith.constant 5.000000e-01 : f32
    %481 = vector.broadcast %cst_152 : f32 to vector<8x128xf32>
    %482 = arith.mulf %481, %480 : vector<8x128xf32>
    %483 = math.tanh %482 : vector<8x128xf32>
    %cst_153 = arith.constant 5.000000e-01 : f32
    %484 = vector.broadcast %cst_153 : f32 to vector<8x128xf32>
    %485 = arith.mulf %484, %483 : vector<8x128xf32>
    %cst_154 = arith.constant 5.000000e-01 : f32
    %486 = vector.broadcast %cst_154 : f32 to vector<8x128xf32>
    %487 = arith.addf %485, %486 : vector<8x128xf32>
    %488 = vector.extract_strided_slice %471 {offsets = [0, 256], sizes = [8, 128], strides = [1, 1]} : vector<8x512xf32> to vector<8x128xf32>
    %489 = math.tanh %488 : vector<8x128xf32>
    %490 = vector.extract_strided_slice %471 {offsets = [0, 384], sizes = [8, 128], strides = [1, 1]} : vector<8x512xf32> to vector<8x128xf32>
    %cst_155 = arith.constant 5.000000e-01 : f32
    %491 = vector.broadcast %cst_155 : f32 to vector<8x128xf32>
    %492 = arith.mulf %491, %490 : vector<8x128xf32>
    %493 = math.tanh %492 : vector<8x128xf32>
    %cst_156 = arith.constant 5.000000e-01 : f32
    %494 = vector.broadcast %cst_156 : f32 to vector<8x128xf32>
    %495 = arith.mulf %494, %493 : vector<8x128xf32>
    %cst_157 = arith.constant 5.000000e-01 : f32
    %496 = vector.broadcast %cst_157 : f32 to vector<8x128xf32>
    %497 = arith.addf %495, %496 : vector<8x128xf32>
    %498 = arith.mulf %487, %430 : vector<8x128xf32>
    %499 = arith.mulf %479, %489 : vector<8x128xf32>
    %500 = arith.addf %498, %499 : vector<8x128xf32>
    %501 = math.tanh %500 : vector<8x128xf32>
    %502 = arith.mulf %497, %501 : vector<8x128xf32>
    %503 = vector.extract_strided_slice %5 {offsets = [56, 0], sizes = [8, 512], strides = [1, 1]} : vector<64x512xf32> to vector<8x512xf32>
    %504 = vector.extract_strided_slice %469 {offsets = [0, 0], sizes = [8, 512], strides = [1, 1]} : vector<8x1024xf32> to vector<8x512xf32>
    %505 = arith.addf %503, %504 : vector<8x512xf32>
    %506 = vector.extract_strided_slice %505 {offsets = [0, 0], sizes = [8, 128], strides = [1, 1]} : vector<8x512xf32> to vector<8x128xf32>
    %cst_158 = arith.constant 5.000000e-01 : f32
    %507 = vector.broadcast %cst_158 : f32 to vector<8x128xf32>
    %508 = arith.mulf %507, %506 : vector<8x128xf32>
    %509 = math.tanh %508 : vector<8x128xf32>
    %cst_159 = arith.constant 5.000000e-01 : f32
    %510 = vector.broadcast %cst_159 : f32 to vector<8x128xf32>
    %511 = arith.mulf %510, %509 : vector<8x128xf32>
    %cst_160 = arith.constant 5.000000e-01 : f32
    %512 = vector.broadcast %cst_160 : f32 to vector<8x128xf32>
    %513 = arith.addf %511, %512 : vector<8x128xf32>
    %514 = vector.extract_strided_slice %505 {offsets = [0, 128], sizes = [8, 128], strides = [1, 1]} : vector<8x512xf32> to vector<8x128xf32>
    %cst_161 = arith.constant 5.000000e-01 : f32
    %515 = vector.broadcast %cst_161 : f32 to vector<8x128xf32>
    %516 = arith.mulf %515, %514 : vector<8x128xf32>
    %517 = math.tanh %516 : vector<8x128xf32>
    %cst_162 = arith.constant 5.000000e-01 : f32
    %518 = vector.broadcast %cst_162 : f32 to vector<8x128xf32>
    %519 = arith.mulf %518, %517 : vector<8x128xf32>
    %cst_163 = arith.constant 5.000000e-01 : f32
    %520 = vector.broadcast %cst_163 : f32 to vector<8x128xf32>
    %521 = arith.addf %519, %520 : vector<8x128xf32>
    %522 = vector.extract_strided_slice %505 {offsets = [0, 256], sizes = [8, 128], strides = [1, 1]} : vector<8x512xf32> to vector<8x128xf32>
    %523 = math.tanh %522 : vector<8x128xf32>
    %524 = vector.extract_strided_slice %505 {offsets = [0, 384], sizes = [8, 128], strides = [1, 1]} : vector<8x512xf32> to vector<8x128xf32>
    %cst_164 = arith.constant 5.000000e-01 : f32
    %525 = vector.broadcast %cst_164 : f32 to vector<8x128xf32>
    %526 = arith.mulf %525, %524 : vector<8x128xf32>
    %527 = math.tanh %526 : vector<8x128xf32>
    %cst_165 = arith.constant 5.000000e-01 : f32
    %528 = vector.broadcast %cst_165 : f32 to vector<8x128xf32>
    %529 = arith.mulf %528, %527 : vector<8x128xf32>
    %cst_166 = arith.constant 5.000000e-01 : f32
    %530 = vector.broadcast %cst_166 : f32 to vector<8x128xf32>
    %531 = arith.addf %529, %530 : vector<8x128xf32>
    %532 = arith.mulf %521, %464 : vector<8x128xf32>
    %533 = arith.mulf %513, %523 : vector<8x128xf32>
    %534 = arith.addf %532, %533 : vector<8x128xf32>
    %535 = math.tanh %534 : vector<8x128xf32>
    %536 = arith.mulf %531, %535 : vector<8x128xf32>
    %537 = tpu.concatenate %536, %502 in 1 : vector<8x128xf32>, vector<8x128xf32> -> vector<8x256xf32>
    %c0_167 = arith.constant 0 : index
    %c512 = arith.constant 512 : index
    %538 = vector.load %arg3[%c0_167, %c512] : memref<256x1024xf32, #tpu.memory_space<vmem>>, vector<256x512xf32>
    %cst_168 = arith.constant dense<0.000000e+00> : vector<8x512xf32>
    %539 = tpu.matmul %537, %538, %cst_168 {dimension_numbers = #tpu.dot_dimension_numbers<[1], [0], [0], [1], [0, 0, 1, 1], [], []>} : vector<8x256xf32>, vector<256x512xf32>, vector<8x512xf32> -> vector<8x512xf32>
    %540 = arith.addf %539, %8 : vector<8x512xf32>
    %541 = vector.extract_strided_slice %540 {offsets = [0, 0], sizes = [8, 128], strides = [1, 1]} : vector<8x512xf32> to vector<8x128xf32>
    %cst_169 = arith.constant 5.000000e-01 : f32
    %542 = vector.broadcast %cst_169 : f32 to vector<8x128xf32>
    %543 = arith.mulf %542, %541 : vector<8x128xf32>
    %544 = math.tanh %543 : vector<8x128xf32>
    %cst_170 = arith.constant 5.000000e-01 : f32
    %545 = vector.broadcast %cst_170 : f32 to vector<8x128xf32>
    %546 = arith.mulf %545, %544 : vector<8x128xf32>
    %cst_171 = arith.constant 5.000000e-01 : f32
    %547 = vector.broadcast %cst_171 : f32 to vector<8x128xf32>
    %548 = arith.addf %546, %547 : vector<8x128xf32>
    %549 = vector.extract_strided_slice %540 {offsets = [0, 128], sizes = [8, 128], strides = [1, 1]} : vector<8x512xf32> to vector<8x128xf32>
    %cst_172 = arith.constant 5.000000e-01 : f32
    %550 = vector.broadcast %cst_172 : f32 to vector<8x128xf32>
    %551 = arith.mulf %550, %549 : vector<8x128xf32>
    %552 = math.tanh %551 : vector<8x128xf32>
    %cst_173 = arith.constant 5.000000e-01 : f32
    %553 = vector.broadcast %cst_173 : f32 to vector<8x128xf32>
    %554 = arith.mulf %553, %552 : vector<8x128xf32>
    %cst_174 = arith.constant 5.000000e-01 : f32
    %555 = vector.broadcast %cst_174 : f32 to vector<8x128xf32>
    %556 = arith.addf %554, %555 : vector<8x128xf32>
    %557 = vector.extract_strided_slice %540 {offsets = [0, 256], sizes = [8, 128], strides = [1, 1]} : vector<8x512xf32> to vector<8x128xf32>
    %558 = math.tanh %557 : vector<8x128xf32>
    %559 = vector.extract_strided_slice %540 {offsets = [0, 384], sizes = [8, 128], strides = [1, 1]} : vector<8x512xf32> to vector<8x128xf32>
    %cst_175 = arith.constant 5.000000e-01 : f32
    %560 = vector.broadcast %cst_175 : f32 to vector<8x128xf32>
    %561 = arith.mulf %560, %559 : vector<8x128xf32>
    %562 = math.tanh %561 : vector<8x128xf32>
    %cst_176 = arith.constant 5.000000e-01 : f32
    %563 = vector.broadcast %cst_176 : f32 to vector<8x128xf32>
    %564 = arith.mulf %563, %562 : vector<8x128xf32>
    %cst_177 = arith.constant 5.000000e-01 : f32
    %565 = vector.broadcast %cst_177 : f32 to vector<8x128xf32>
    %566 = arith.addf %564, %565 : vector<8x128xf32>
    %567 = arith.mulf %556, %500 : vector<8x128xf32>
    %568 = arith.mulf %548, %558 : vector<8x128xf32>
    %569 = arith.addf %567, %568 : vector<8x128xf32>
    %570 = math.tanh %569 : vector<8x128xf32>
    %571 = arith.mulf %566, %570 : vector<8x128xf32>
    %572 = tpu.concatenate %82, %152, %222, %292, %362, %432, %502, %571 in 0 : vector<8x128xf32>, vector<8x128xf32>, vector<8x128xf32>, vector<8x128xf32>, vector<8x128xf32>, vector<8x128xf32>, vector<8x128xf32>, vector<8x128xf32> -> vector<64x128xf32>
    %c0_178 = arith.constant 0 : index
    %c0_179 = arith.constant 0 : index
    %573 = vector.load %arg5[%c0_178, %c0_179] : memref<128x128xf32, #tpu.memory_space<vmem>>, vector<128x128xf32>
    %cst_180 = arith.constant dense<0.000000e+00> : vector<64x128xf32>
    %574 = tpu.matmul %572, %573, %cst_180 {dimension_numbers = #tpu.dot_dimension_numbers<[1], [0], [0], [1], [0, 0, 1, 1], [], []>} : vector<64x128xf32>, vector<128x128xf32>, vector<64x128xf32> -> vector<64x128xf32>
    %c0_181 = arith.constant 0 : index
    %c0_182 = arith.constant 0 : index
    %575 = vector.load %arg6[%c0_181, %c0_182] : memref<1x128xf32, #tpu.memory_space<vmem>>, vector<1x128xf32>
    %576 = vector.broadcast %575 : vector<1x128xf32> to vector<64x128xf32>
    %577 = arith.addf %574, %576 : vector<64x128xf32>
    %c0_183 = arith.constant 0 : index
    %c0_184 = arith.constant 0 : index
    %578 = vector.load %arg7[%c0_183, %c0_184] : memref<64x128xf32, #tpu.memory_space<vmem>>, vector<64x128xf32>
    tpu.vector_store %arg7[%c0_183, %c0_184], %577 {strides = array<i32>} : memref<64x128xf32, #tpu.memory_space<vmem>>, vector<64x128xf32>,
    return
  }
}

</mosaic_0001>

<llo_original>
// kernel: tpu_custom_call.1
$region0: #{tpu_custom_call.1}
  #allocation0 [shape = 'u32[]', space=smem, size = 0x4, offset = 0x4, fixed_abs, tag = 'smem constant byte address 0x4 - core index']
  #allocation1 [shape = 'u32[144,128]{1,0:T(1,128)}', space=vmem, size = 0x12000, scoped, tag = 'internal scratch']
  %s0 = inlined_call_operand.vmem [shape: f32[64,2], index: 0, kind: input, shape index: {}]
  %s1 = inlined_call_operand.vmem [shape: f32[2,512], index: 1, kind: input, shape index: {}]
  %s2 = inlined_call_operand.vmem [shape: f32[1,512], index: 2, kind: input, shape index: {}]
  %s3 = inlined_call_operand.hbm [shape: f32[256,1024], index: 3, kind: input, shape index: {}]
  %s4 = inlined_call_operand.vmem [shape: f32[1,512], index: 4, kind: input, shape index: {}]
  %s5 = inlined_call_operand.hbm [shape: f32[128,128], index: 5, kind: input, shape index: {}]
  %s6 = inlined_call_operand.vmem [shape: f32[1,128], index: 6, kind: input, shape index: {}]
  %s7 = inlined_call_operand.hbm [shape: f32[64,128], index: 7, kind: output, shape index: {}]
  %s8 = sld [smem:[#allocation0]]
  $region46: #{tpu_custom_call.1} parent=0
    _
  %s10 = ssub.s32 1, %s8
  %s11 = scalar_select 0, %s10, %s8
  $region1: #{tpu_custom_call.1} parent=0
    #allocation2 [shape = 'u8[1048576]{0}', space=vmem, size = 0x100000, scoped, tag = 'input window, operand 3, single buffered']
    #allocation3 [shape = 's32[1]{0}', space=sflag, size = 0x4, scoped, tag = 'scoped memory for tpu_custom_call.1']
    #allocation4 [shape = 's32[1]{0}', space=sflag, size = 0x4, scoped, tag = 'scoped memory for tpu_custom_call.1']
    #allocation5 [shape = 'u8[65536]{0}', space=vmem, size = 0x10000, scoped, tag = 'input window, operand 5, single buffered']
    #allocation6 [shape = 's32[1]{0}', space=sflag, size = 0x4, scoped, tag = 'scoped memory for tpu_custom_call.1']
    #allocation7 [shape = 'u8[32768]{0}', space=vmem, size = 0x8000, scoped, tag = 'output window, operand 0, single buffered']
    %12 = vsyncpa [#allocation3], 0
    %13 = vsyncpa [#allocation6], 0
    %14 = vsyncpa [#allocation4], 0
    // Predicated region
    $region2: #{tpu_custom_call.1} parent=1 // pred_check
      _
    $region3: #{tpu_custom_call.1} parent=1 // pred_check_branch
      %16 = sbr.rel (0) target = $region5
    $region4: #{tpu_custom_call.1} parent=1 // pred_region
      _
    $region5: #{tpu_custom_call.1} parent=1 // pred_fallthru
      _
    // Predicated region
    $region6: #{tpu_custom_call.1} parent=1 // pred_check
      _
    $region7: #{tpu_custom_call.1} parent=1 // pred_check_branch
      %18 = sbr.rel (0) target = $region9
    $region8: #{tpu_custom_call.1} parent=1 // pred_region
      _
    $region9: #{tpu_custom_call.1} parent=1 // pred_fallthru
      _
    // Predicated region
    $region10: #{tpu_custom_call.1} parent=1 // pred_check
      _
    $region11: #{tpu_custom_call.1} parent=1 // pred_check_branch
      %20 = sbr.rel (0) target = $region13
    $region12: #{tpu_custom_call.1} parent=1 // pred_region
      _
    $region13: #{tpu_custom_call.1} parent=1 // pred_fallthru
      _
    // Predicated region
    $region14: #{tpu_custom_call.1} parent=1 // pred_check
      _
    $region15: #{tpu_custom_call.1} parent=1 // pred_check_branch
      %22 = sbr.rel (0) target = $region17
    $region16: #{tpu_custom_call.1} parent=1 // pred_region
      %s24 = ssub.s32 32768, 32768
      %25 = vsyncadd [#allocation3], %s24
      %s26 = sshll.u32 [#allocation2], 4
      %s27 = int_to_ptr.vmem [resolvable:$true] %s26
      %32 = dma.hbm_to_vmem [thread:$0]  %s3, 32768, %s27, [#allocation3], 1024, 1024, 64
    $region17: #{tpu_custom_call.1} parent=1 // pred_fallthru
      _
    // Predicated region
    $region18: #{tpu_custom_call.1} parent=1 // pred_check
      _
    $region19: #{tpu_custom_call.1} parent=1 // pred_check_branch
      %34 = sbr.rel (0) target = $region21
    $region20: #{tpu_custom_call.1} parent=1 // pred_region
      _
    $region21: #{tpu_custom_call.1} parent=1 // pred_fallthru
      _
    // Predicated region
    $region22: #{tpu_custom_call.1} parent=1 // pred_check
      _
    $region23: #{tpu_custom_call.1} parent=1 // pred_check_branch
      %36 = sbr.rel (0) target = $region25
    $region24: #{tpu_custom_call.1} parent=1 // pred_region
      %s38 = ssub.s32 2048, 2048
      %39 = vsyncadd [#allocation6], %s38
      %s40 = sshll.u32 [#allocation5], 4
      %s41 = int_to_ptr.vmem [resolvable:$true] %s40
      %46 = dma.hbm_to_vmem [thread:$0]  %s5, 2048, %s41, [#allocation6], 128, 128, 8
    $region25: #{tpu_custom_call.1} parent=1 // pred_fallthru
      _
    // Predicated region
    $region26: #{tpu_custom_call.1} parent=1 // pred_check
      _
    $region27: #{tpu_custom_call.1} parent=1 // pred_check_branch
      %48 = sbr.rel (0) target = $region29
    $region28: #{tpu_custom_call.1} parent=1 // pred_region
      _
    $region29: #{tpu_custom_call.1} parent=1 // pred_fallthru
      _
    // Predicated region
    $region30: #{tpu_custom_call.1} parent=1 // pred_check
      _
    $region31: #{tpu_custom_call.1} parent=1 // pred_check_branch
      %50 = sbr.rel (0) target = $region33
    $region32: #{tpu_custom_call.1} parent=1 // pred_region
      %51 = dma.done [#allocation3], 32768
    $region33: #{tpu_custom_call.1} parent=1 // pred_fallthru
      _
    // Predicated region
    $region34: #{tpu_custom_call.1} parent=1 // pred_check
      _
    $region35: #{tpu_custom_call.1} parent=1 // pred_check_branch
      %53 = sbr.rel (0) target = $region37
    $region36: #{tpu_custom_call.1} parent=1 // pred_region
      %54 = dma.done [#allocation6], 2048
    $region37: #{tpu_custom_call.1} parent=1 // pred_fallthru
      _
    %v55 = vld [vmem:[%s0] sm:$0xff]
    %v56 = vld [vmem:[%s0 + $0x8] sm:$0xff]
    %v57 = vld [vmem:[%s0 + $0x10] sm:$0xff]
    %v58 = vld [vmem:[%s0 + $0x18] sm:$0xff]
    %v59 = vld [vmem:[%s0 + $0x20] sm:$0xff]
    %v60 = vld [vmem:[%s0 + $0x28] sm:$0xff]
    %v61 = vld [vmem:[%s0 + $0x30] sm:$0xff]
    %v62 = vld [vmem:[%s0 + $0x38] sm:$0xff]
    %v63 = vld [vmem:[%s1] sm:$0xff]
    %v64 = vld [vmem:[%s2] sm:$0xf]
    %v66 = vlaneseq
    %v67 = vshrl.u32 %v66, 7
    %v68 = vsub.s32 0, %v67
    %v69 = vrot.slane %v64, %v68
    %v70 = vlaneseq
    %v71 = vshrl.u32 %v70, 7
    %v72 = vsub.s32 1, %v71
    %v73 = vrot.slane %v64, %v72
    %v74 = vlaneseq
    %v75 = vshrl.u32 %v74, 7
    %v76 = vsub.s32 2, %v75
    %v77 = vrot.slane %v64, %v76
    %v78 = vlaneseq
    %v79 = vshrl.u32 %v78, 7
    %v80 = vsub.s32 3, %v79
    %v81 = vrot.slane %v64, %v80
    %v87 = vcombine.high %v63, %v63
    %v89 = vunpack.c.l.s4 1983009808
    %v90 = vunpack.c.0.s8 %v89
    %v91 = vlaneseq
    %v92 = vshrl.u32 %v91, 7
    %v93 = vsub.s32 %v90, %v92
    %v94 = vrot.slane %v63, %v93
    %v96 = vunpack.c.l.s4 1983009808
    %v97 = vunpack.c.0.s8 %v96
    %v98 = vlaneseq
    %v99 = vshrl.u32 %v98, 7
    %v100 = vsub.s32 %v97, %v99
    %v101 = vrot.slane %v87, %v100
    %v102 = vcombine.high %v94, %v94
    %v103 = vcombine.high %v101, %v101
    %vm104 = vcmask 15360
    %v106 = vsel %vm104, %v55, 0
    %v109 = vsel %vm104, %v56, 0
    %v112 = vsel %vm104, %v57, 0
    %v115 = vsel %vm104, %v58, 0
    %v118 = vsel %vm104, %v59, 0
    %v121 = vsel %vm104, %v60, 0
    %v124 = vsel %vm104, %v61, 0
    %v127 = vsel %vm104, %v62, 0
    %vm129 = vcmask 1041408
    %v130 = vsel %vm129, %v94, 0
    %v132 = vsel %vm129, %v102, 0
    %v134 = vsel %vm129, %v101, 0
    %v136 = vsel %vm129, %v103, 0
    %138 = vmatprep.subr.mxu0 %v132
    %139 = vmatpush1.msra.mxu0 %v130
    %140 = vmatprep.subr.mxu0 0.0
    %141 = vmatpush1.msra.mxu0 0.0
    %142 = vmatprep.subr.mxu0 0.0
    %143 = vmatpush1.msra.mxu0 0.0
    %144 = vmatprep.subr.mxu0 0.0
    %145 = vmatpush1.msra.mxu0 0.0
    %146 = vmatprep.subr.mxu0 0.0
    %147 = vmatpush1.msra.mxu0 0.0
    %148 = vmatprep.subr.mxu0 0.0
    %149 = vmatpush1.msra.mxu0 0.0
    %150 = vmatprep.subr.mxu0 0.0
    %151 = vmatpush1.msra.mxu0 0.0
    %152 = vmatprep.subr.mxu0 0.0
    %153 = vmatpush1.msra.mxu0 0.0
    %154 = vmatprep.subr.mxu0 0.0
    %155 = vmatpush1.msra.mxu0 0.0
    %156 = vmatprep.subr.mxu0 0.0
    %157 = vmatpush1.msra.mxu0 0.0
    %158 = vmatprep.subr.mxu0 0.0
    %159 = vmatpush1.msra.mxu0 0.0
    %160 = vmatprep.subr.mxu0 0.0
    %161 = vmatpush1.msra.mxu0 0.0
    %162 = vmatprep.subr.mxu0 0.0
    %163 = vmatpush1.msra.mxu0 0.0
    %164 = vmatprep.subr.mxu0 0.0
    %165 = vmatpush1.msra.mxu0 0.0
    %166 = vmatprep.subr.mxu0 0.0
    %167 = vmatpush1.msra.mxu0 0.0
    %168 = vmatprep.subr.mxu0 0.0
    %169 = vmatpush1.msra.mxu0 0.0
    %170 = vmatprep.subr.mxu0 0.0
    %171 = vmatpush1.msra.mxu0 0.0
    %172 = vmatprep.subr.mxu0 0.0
    %173 = vmatpush1.msra.mxu0 0.0
    %174 = vmatprep.subr.mxu0 0.0
    %175 = vmatpush1.msra.mxu0 0.0
    %176 = vmatprep.subr.mxu0 0.0
    %177 = vmatpush1.msra.mxu0 0.0
    %178 = vmatprep.subr.mxu0 0.0
    %179 = vmatpush1.msra.mxu0 0.0
    %180 = vmatprep.subr.mxu0 0.0
    %181 = vmatpush1.msra.mxu0 0.0
    %182 = vmatprep.subr.mxu0 0.0
    %183 = vmatpush1.msra.mxu0 0.0
    %184 = vmatprep.subr.mxu0 0.0
    %185 = vmatpush1.msra.mxu0 0.0
    %186 = vmatprep.subr.mxu0 0.0
    %187 = vmatpush1.msra.mxu0 0.0
    %188 = vmatprep.subr.mxu0 0.0
    %189 = vmatpush1.msra.mxu0 0.0
    %190 = vmatprep.subr.mxu0 0.0
    %191 = vmatpush1.msra.mxu0 0.0
    %192 = vmatprep.subr.mxu0 0.0
    %193 = vmatpush1.msra.mxu0 0.0
    %194 = vmatprep.subr.mxu0 0.0
    %195 = vmatpush1.msra.mxu0 0.0
    %196 = vmatprep.subr.mxu0 0.0
    %197 = vmatpush1.msra.mxu0 0.0
    %198 = vmatprep.subr.mxu0 0.0
    %199 = vmatpush1.msra.mxu0 0.0
    %200 = vmatprep.subr.mxu0 0.0
    %201 = vmatpush1.msra.mxu0 0.0
    %202 = vmatprep.mubr.f32.mxu0 0.0
    %203 = vmatmul.mubr.f32.gmra.mrb[0].mxu0 %v106
    %v204 = vpop.f32.mrb[0].mxu0
    %v205 = vadd.f32 %v69, %v204
    %v206 = vpop.f32.mrb[0].mxu0
    %v207 = vadd.f32 %v73, %v206
    %208 = vmatprep.mubr.f32.mxu0 0.0
    %209 = vmatmul.mubr.f32.gmra.mrb[0].mxu0 %v109
    %v210 = vpop.f32.mrb[0].mxu0
    %v211 = vadd.f32 %v69, %v210
    %v212 = vpop.f32.mrb[0].mxu0
    %v213 = vadd.f32 %v73, %v212
    %214 = vmatprep.mubr.f32.mxu0 0.0
    %215 = vmatmul.mubr.f32.gmra.mrb[0].mxu0 %v112
    %v216 = vpop.f32.mrb[0].mxu0
    %v217 = vadd.f32 %v69, %v216
    %v218 = vpop.f32.mrb[0].mxu0
    %v219 = vadd.f32 %v73, %v218
    %220 = vmatprep.mubr.f32.mxu0 0.0
    %221 = vmatmul.mubr.f32.gmra.mrb[0].mxu0 %v115
    %v222 = vpop.f32.mrb[0].mxu0
    %v223 = vadd.f32 %v69, %v222
    %v224 = vpop.f32.mrb[0].mxu0
    %v225 = vadd.f32 %v73, %v224
    %226 = vmatprep.mubr.f32.mxu0 0.0
    %227 = vmatmul.mubr.f32.gmra.mrb[0].mxu0 %v118
    %v228 = vpop.f32.mrb[0].mxu0
    %v229 = vadd.f32 %v69, %v228
    %v230 = vpop.f32.mrb[0].mxu0
    %v231 = vadd.f32 %v73, %v230
    %232 = vmatprep.mubr.f32.mxu0 0.0
    %233 = vmatmul.mubr.f32.gmra.mrb[0].mxu0 %v121
    %v234 = vpop.f32.mrb[0].mxu0
    %v235 = vadd.f32 %v69, %v234
    %v236 = vpop.f32.mrb[0].mxu0
    %v237 = vadd.f32 %v73, %v236
    %238 = vmatprep.mubr.f32.mxu0 0.0
    %239 = vmatmul.mubr.f32.gmra.mrb[0].mxu0 %v124
    %v240 = vpop.f32.mrb[0].mxu0
    %v241 = vadd.f32 %v69, %v240
    %v242 = vpop.f32.mrb[0].mxu0
    %v243 = vadd.f32 %v73, %v242
    %244 = vmatprep.mubr.f32.mxu0 0.0
    %245 = vmatmul.mubr.f32.gmra.mrb[0].mxu0 %v127
    %v246 = vpop.f32.mrb[0].mxu0
    %v247 = vadd.f32 %v69, %v246
    %v248 = vpop.f32.mrb[0].mxu0
    %v249 = vadd.f32 %v73, %v248
    %250 = vdwg.mxu0
    %251 = vmatprep.subr.mxu0 %v136
    %252 = vmatpush1.msra.mxu0 %v134
    %253 = vmatprep.subr.mxu0 0.0
    %254 = vmatpush1.msra.mxu0 0.0
    %255 = vmatprep.subr.mxu0 0.0
    %256 = vmatpush1.msra.mxu0 0.0
    %257 = vmatprep.subr.mxu0 0.0
    %258 = vmatpush1.msra.mxu0 0.0
    %259 = vmatprep.subr.mxu0 0.0
    %260 = vmatpush1.msra.mxu0 0.0
    %261 = vmatprep.subr.mxu0 0.0
    %262 = vmatpush1.msra.mxu0 0.0
    %263 = vmatprep.subr.mxu0 0.0
    %264 = vmatpush1.msra.mxu0 0.0
    %265 = vmatprep.subr.mxu0 0.0
    %266 = vmatpush1.msra.mxu0 0.0
    %267 = vmatprep.subr.mxu0 0.0
    %268 = vmatpush1.msra.mxu0 0.0
    %269 = vmatprep.subr.mxu0 0.0
    %270 = vmatpush1.msra.mxu0 0.0
    %271 = vmatprep.subr.mxu0 0.0
    %272 = vmatpush1.msra.mxu0 0.0
    %273 = vmatprep.subr.mxu0 0.0
    %274 = vmatpush1.msra.mxu0 0.0
    %275 = vmatprep.subr.mxu0 0.0
    %276 = vmatpush1.msra.mxu0 0.0
    %277 = vmatprep.subr.mxu0 0.0
    %278 = vmatpush1.msra.mxu0 0.0
    %279 = vmatprep.subr.mxu0 0.0
    %280 = vmatpush1.msra.mxu0 0.0
    %281 = vmatprep.subr.mxu0 0.0
    %282 = vmatpush1.msra.mxu0 0.0
    %283 = vmatprep.subr.mxu0 0.0
    %284 = vmatpush1.msra.mxu0 0.0
    %285 = vmatprep.subr.mxu0 0.0
    %286 = vmatpush1.msra.mxu0 0.0
    %287 = vmatprep.subr.mxu0 0.0
    %288 = vmatpush1.msra.mxu0 0.0
    %289 = vmatprep.subr.mxu0 0.0
    %290 = vmatpush1.msra.mxu0 0.0
    %291 = vmatprep.subr.mxu0 0.0
    %292 = vmatpush1.msra.mxu0 0.0
    %293 = vmatprep.subr.mxu0 0.0
    %294 = vmatpush1.msra.mxu0 0.0
    %295 = vmatprep.subr.mxu0 0.0
    %296 = vmatpush1.msra.mxu0 0.0
    %297 = vmatprep.subr.mxu0 0.0
    %298 = vmatpush1.msra.mxu0 0.0
    %299 = vmatprep.subr.mxu0 0.0
    %300 = vmatpush1.msra.mxu0 0.0
    %301 = vmatprep.subr.mxu0 0.0
    %302 = vmatpush1.msra.mxu0 0.0
    %303 = vmatprep.subr.mxu0 0.0
    %304 = vmatpush1.msra.mxu0 0.0
    %305 = vmatprep.subr.mxu0 0.0
    %306 = vmatpush1.msra.mxu0 0.0
    %307 = vmatprep.subr.mxu0 0.0
    %308 = vmatpush1.msra.mxu0 0.0
    %309 = vmatprep.subr.mxu0 0.0
    %310 = vmatpush1.msra.mxu0 0.0
    %311 = vmatprep.subr.mxu0 0.0
    %312 = vmatpush1.msra.mxu0 0.0
    %313 = vmatprep.subr.mxu0 0.0
    %314 = vmatpush1.msra.mxu0 0.0
    %315 = vmatprep.mubr.f32.mxu0 0.0
    %316 = vmatmul.mubr.f32.gmra.mrb[0].mxu0 %v106
    %v317 = vpop.f32.mrb[0].mxu0
    %v318 = vadd.f32 %v77, %v317
    %v319 = vpop.f32.mrb[0].mxu0
    %v320 = vadd.f32 %v81, %v319
    %321 = vmatprep.mubr.f32.mxu0 0.0
    %322 = vmatmul.mubr.f32.gmra.mrb[0].mxu0 %v109
    %v323 = vpop.f32.mrb[0].mxu0
    %v324 = vadd.f32 %v77, %v323
    %v325 = vpop.f32.mrb[0].mxu0
    %v326 = vadd.f32 %v81, %v325
    %327 = vmatprep.mubr.f32.mxu0 0.0
    %328 = vmatmul.mubr.f32.gmra.mrb[0].mxu0 %v112
    %v329 = vpop.f32.mrb[0].mxu0
    %v330 = vadd.f32 %v77, %v329
    %v331 = vpop.f32.mrb[0].mxu0
    %v332 = vadd.f32 %v81, %v331
    %333 = vmatprep.mubr.f32.mxu0 0.0
    %334 = vmatmul.mubr.f32.gmra.mrb[0].mxu0 %v115
    %v335 = vpop.f32.mrb[0].mxu0
    %v336 = vadd.f32 %v77, %v335
    %v337 = vpop.f32.mrb[0].mxu0
    %v338 = vadd.f32 %v81, %v337
    %339 = vmatprep.mubr.f32.mxu0 0.0
    %340 = vmatmul.mubr.f32.gmra.mrb[0].mxu0 %v118
    %v341 = vpop.f32.mrb[0].mxu0
    %v342 = vadd.f32 %v77, %v341
    %v343 = vpop.f32.mrb[0].mxu0
    %v344 = vadd.f32 %v81, %v343
    %345 = vmatprep.mubr.f32.mxu0 0.0
    %346 = vmatmul.mubr.f32.gmra.mrb[0].mxu0 %v121
    %v347 = vpop.f32.mrb[0].mxu0
    %v348 = vadd.f32 %v77, %v347
    %v349 = vpop.f32.mrb[0].mxu0
    %v350 = vadd.f32 %v81, %v349
    %351 = vmatprep.mubr.f32.mxu0 0.0
    %352 = vmatmul.mubr.f32.gmra.mrb[0].mxu0 %v124
    %v353 = vpop.f32.mrb[0].mxu0
    %v354 = vadd.f32 %v77, %v353
    %v355 = vpop.f32.mrb[0].mxu0
    %v356 = vadd.f32 %v81, %v355
    %357 = vmatprep.mubr.f32.mxu0 0.0
    %358 = vmatmul.mubr.f32.gmra.mrb[0].mxu0 %v127
    %v359 = vpop.f32.mrb[0].mxu0
    %v360 = vadd.f32 %v77, %v359
    %v361 = vpop.f32.mrb[0].mxu0
    %v362 = vadd.f32 %v81, %v361
    %363 = vdwg.mxu0
    %v364 = vld [vmem:[%s4] sm:$0xf]
    %v366 = vlaneseq
    %v367 = vshrl.u32 %v366, 7
    %v368 = vsub.s32 0, %v367
    %v369 = vrot.slane %v364, %v368
    %v370 = vlaneseq
    %v371 = vshrl.u32 %v370, 7
    %v372 = vsub.s32 1, %v371
    %v373 = vrot.slane %v364, %v372
    %v374 = vlaneseq
    %v375 = vshrl.u32 %v374, 7
    %v376 = vsub.s32 2, %v375
    %v377 = vrot.slane %v364, %v376
    %v378 = vlaneseq
    %v379 = vshrl.u32 %v378, 7
    %v380 = vsub.s32 3, %v379
    %v381 = vrot.slane %v364, %v380
    %v386 = vld [vmem:[#allocation2] sm:$0xff]
    %v387 = vld [vmem:[#allocation2 + $0x8] sm:$0xff]
    %v388 = vld [vmem:[#allocation2 + $0x10] sm:$0xff]
    %v389 = vld [vmem:[#allocation2 + $0x18] sm:$0xff]
    %v390 = vld [vmem:[#allocation2 + $0x20] sm:$0xff]
    %v391 = vld [vmem:[#allocation2 + $0x28] sm:$0xff]
    %v392 = vld [vmem:[#allocation2 + $0x30] sm:$0xff]
    %v393 = vld [vmem:[#allocation2 + $0x38] sm:$0xff]
    %v394 = vld [vmem:[#allocation2 + $0x40] sm:$0xff]
    %v395 = vld [vmem:[#allocation2 + $0x48] sm:$0xff]
    %v396 = vld [vmem:[#allocation2 + $0x50] sm:$0xff]
    %v397 = vld [vmem:[#allocation2 + $0x58] sm:$0xff]
    %v398 = vld [vmem:[#allocation2 + $0x60] sm:$0xff]
    %v399 = vld [vmem:[#allocation2 + $0x68] sm:$0xff]
    %v400 = vld [vmem:[#allocation2 + $0x70] sm:$0xff]
    %v401 = vld [vmem:[#allocation2 + $0x78] sm:$0xff]
    %v402 = vld [vmem:[#allocation2 + $0x80] sm:$0xff]
    %v403 = vld [vmem:[#allocation2 + $0x88] sm:$0xff]
    %v404 = vld [vmem:[#allocation2 + $0x90] sm:$0xff]
    %v405 = vld [vmem:[#allocation2 + $0x98] sm:$0xff]
    %v406 = vld [vmem:[#allocation2 + $0xa0] sm:$0xff]
    %v407 = vld [vmem:[#allocation2 + $0xa8] sm:$0xff]
    %v408 = vld [vmem:[#allocation2 + $0xb0] sm:$0xff]
    %v409 = vld [vmem:[#allocation2 + $0xb8] sm:$0xff]
    %v410 = vld [vmem:[#allocation2 + $0xc0] sm:$0xff]
    %v411 = vld [vmem:[#allocation2 + $0xc8] sm:$0xff]
    %v412 = vld [vmem:[#allocation2 + $0xd0] sm:$0xff]
    %v413 = vld [vmem:[#allocation2 + $0xd8] sm:$0xff]
    %v414 = vld [vmem:[#allocation2 + $0xe0] sm:$0xff]
    %v415 = vld [vmem:[#allocation2 + $0xe8] sm:$0xff]
    %v416 = vld [vmem:[#allocation2 + $0xf0] sm:$0xff]
    %v417 = vld [vmem:[#allocation2 + $0xf8] sm:$0xff]
    %v418 = vld [vmem:[#allocation2 + $0x100] sm:$0xff]
    %v419 = vld [vmem:[#allocation2 + $0x108] sm:$0xff]
    %v420 = vld [vmem:[#allocation2 + $0x110] sm:$0xff]
    %v421 = vld [vmem:[#allocation2 + $0x118] sm:$0xff]
    %v422 = vld [vmem:[#allocation2 + $0x120] sm:$0xff]
    %v423 = vld [vmem:[#allocation2 + $0x128] sm:$0xff]
    %v424 = vld [vmem:[#allocation2 + $0x130] sm:$0xff]
    %v425 = vld [vmem:[#allocation2 + $0x138] sm:$0xff]
    %v426 = vld [vmem:[#allocation2 + $0x140] sm:$0xff]
    %v427 = vld [vmem:[#allocation2 + $0x148] sm:$0xff]
    %v428 = vld [vmem:[#allocation2 + $0x150] sm:$0xff]
    %v429 = vld [vmem:[#allocation2 + $0x158] sm:$0xff]
    %v430 = vld [vmem:[#allocation2 + $0x160] sm:$0xff]
    %v431 = vld [vmem:[#allocation2 + $0x168] sm:$0xff]
    %v432 = vld [vmem:[#allocation2 + $0x170] sm:$0xff]
    %v433 = vld [vmem:[#allocation2 + $0x178] sm:$0xff]
    %v434 = vld [vmem:[#allocation2 + $0x180] sm:$0xff]
    %v435 = vld [vmem:[#allocation2 + $0x188] sm:$0xff]
    %v436 = vld [vmem:[#allocation2 + $0x190] sm:$0xff]
    %v437 = vld [vmem:[#allocation2 + $0x198] sm:$0xff]
    %v438 = vld [vmem:[#allocation2 + $0x1a0] sm:$0xff]
    %v439 = vld [vmem:[#allocation2 + $0x1a8] sm:$0xff]
    %v440 = vld [vmem:[#allocation2 + $0x1b0] sm:$0xff]
    %v441 = vld [vmem:[#allocation2 + $0x1b8] sm:$0xff]
    %v442 = vld [vmem:[#allocation2 + $0x1c0] sm:$0xff]
    %v443 = vld [vmem:[#allocation2 + $0x1c8] sm:$0xff]
    %v444 = vld [vmem:[#allocation2 + $0x1d0] sm:$0xff]
    %v445 = vld [vmem:[#allocation2 + $0x1d8] sm:$0xff]
    %v446 = vld [vmem:[#allocation2 + $0x1e0] sm:$0xff]
    %v447 = vld [vmem:[#allocation2 + $0x1e8] sm:$0xff]
    %v448 = vld [vmem:[#allocation2 + $0x1f0] sm:$0xff]
    %v449 = vld [vmem:[#allocation2 + $0x1f8] sm:$0xff]
    %v450 = vld [vmem:[#allocation2 + $0x200] sm:$0xff]
    %v451 = vld [vmem:[#allocation2 + $0x208] sm:$0xff]
    %v452 = vld [vmem:[#allocation2 + $0x210] sm:$0xff]
    %v453 = vld [vmem:[#allocation2 + $0x218] sm:$0xff]
    %v454 = vld [vmem:[#allocation2 + $0x220] sm:$0xff]
    %v455 = vld [vmem:[#allocation2 + $0x228] sm:$0xff]
    %v456 = vld [vmem:[#allocation2 + $0x230] sm:$0xff]
    %v457 = vld [vmem:[#allocation2 + $0x238] sm:$0xff]
    %v458 = vld [vmem:[#allocation2 + $0x240] sm:$0xff]
    %v459 = vld [vmem:[#allocation2 + $0x248] sm:$0xff]
    %v460 = vld [vmem:[#allocation2 + $0x250] sm:$0xff]
    %v461 = vld [vmem:[#allocation2 + $0x258] sm:$0xff]
    %v462 = vld [vmem:[#allocation2 + $0x260] sm:$0xff]
    %v463 = vld [vmem:[#allocation2 + $0x268] sm:$0xff]
    %v464 = vld [vmem:[#allocation2 + $0x270] sm:$0xff]
    %v465 = vld [vmem:[#allocation2 + $0x278] sm:$0xff]
    %v466 = vld [vmem:[#allocation2 + $0x280] sm:$0xff]
    %v467 = vld [vmem:[#allocation2 + $0x288] sm:$0xff]
    %v468 = vld [vmem:[#allocation2 + $0x290] sm:$0xff]
    %v469 = vld [vmem:[#allocation2 + $0x298] sm:$0xff]
    %v470 = vld [vmem:[#allocation2 + $0x2a0] sm:$0xff]
    %v471 = vld [vmem:[#allocation2 + $0x2a8] sm:$0xff]
    %v472 = vld [vmem:[#allocation2 + $0x2b0] sm:$0xff]
    %v473 = vld [vmem:[#allocation2 + $0x2b8] sm:$0xff]
    %v474 = vld [vmem:[#allocation2 + $0x2c0] sm:$0xff]
    %v475 = vld [vmem:[#allocation2 + $0x2c8] sm:$0xff]
    %v476 = vld [vmem:[#allocation2 + $0x2d0] sm:$0xff]
    %v477 = vld [vmem:[#allocation2 + $0x2d8] sm:$0xff]
    %v478 = vld [vmem:[#allocation2 + $0x2e0] sm:$0xff]
    %v479 = vld [vmem:[#allocation2 + $0x2e8] sm:$0xff]
    %v480 = vld [vmem:[#allocation2 + $0x2f0] sm:$0xff]
    %v481 = vld [vmem:[#allocation2 + $0x2f8] sm:$0xff]
    %v482 = vld [vmem:[#allocation2 + $0x300] sm:$0xff]
    %v483 = vld [vmem:[#allocation2 + $0x308] sm:$0xff]
    %v484 = vld [vmem:[#allocation2 + $0x310] sm:$0xff]
    %v485 = vld [vmem:[#allocation2 + $0x318] sm:$0xff]
    %v486 = vld [vmem:[#allocation2 + $0x320] sm:$0xff]
    %v487 = vld [vmem:[#allocation2 + $0x328] sm:$0xff]
    %v488 = vld [vmem:[#allocation2 + $0x330] sm:$0xff]
    %v489 = vld [vmem:[#allocation2 + $0x338] sm:$0xff]
    %v490 = vld [vmem:[#allocation2 + $0x340] sm:$0xff]
    %v491 = vld [vmem:[#allocation2 + $0x348] sm:$0xff]
    %v492 = vld [vmem:[#allocation2 + $0x350] sm:$0xff]
    %v493 = vld [vmem:[#allocation2 + $0x358] sm:$0xff]
    %v494 = vld [vmem:[#allocation2 + $0x360] sm:$0xff]
    %v495 = vld [vmem:[#allocation2 + $0x368] sm:$0xff]
    %v496 = vld [vmem:[#allocation2 + $0x370] sm:$0xff]
    %v497 = vld [vmem:[#allocation2 + $0x378] sm:$0xff]
    %v498 = vld [vmem:[#allocation2 + $0x380] sm:$0xff]
    %v499 = vld [vmem:[#allocation2 + $0x388] sm:$0xff]
    %v500 = vld [vmem:[#allocation2 + $0x390] sm:$0xff]
    %v501 = vld [vmem:[#allocation2 + $0x398] sm:$0xff]
    %v502 = vld [vmem:[#allocation2 + $0x3a0] sm:$0xff]
    %v503 = vld [vmem:[#allocation2 + $0x3a8] sm:$0xff]
    %v504 = vld [vmem:[#allocation2 + $0x3b0] sm:$0xff]
    %v505 = vld [vmem:[#allocation2 + $0x3b8] sm:$0xff]
    %v506 = vld [vmem:[#allocation2 + $0x3c0] sm:$0xff]
    %v507 = vld [vmem:[#allocation2 + $0x3c8] sm:$0xff]
    %v508 = vld [vmem:[#allocation2 + $0x3d0] sm:$0xff]
    %v509 = vld [vmem:[#allocation2 + $0x3d8] sm:$0xff]
    %v510 = vld [vmem:[#allocation2 + $0x3e0] sm:$0xff]
    %v511 = vld [vmem:[#allocation2 + $0x3e8] sm:$0xff]
    %v512 = vld [vmem:[#allocation2 + $0x3f0] sm:$0xff]
    %v513 = vld [vmem:[#allocation2 + $0x3f8] sm:$0xff]
    %v514 = vld [vmem:[#allocation2 + $0x400] sm:$0xff]
    %v515 = vld [vmem:[#allocation2 + $0x408] sm:$0xff]
    %v516 = vld [vmem:[#allocation2 + $0x410] sm:$0xff]
    %v517 = vld [vmem:[#allocation2 + $0x418] sm:$0xff]
    %v518 = vld [vmem:[#allocation2 + $0x420] sm:$0xff]
    %v519 = vld [vmem:[#allocation2 + $0x428] sm:$0xff]
    %v520 = vld [vmem:[#allocation2 + $0x430] sm:$0xff]
    %v521 = vld [vmem:[#allocation2 + $0x438] sm:$0xff]
    %v522 = vld [vmem:[#allocation2 + $0x440] sm:$0xff]
    %v523 = vld [vmem:[#allocation2 + $0x448] sm:$0xff]
    %v524 = vld [vmem:[#allocation2 + $0x450] sm:$0xff]
    %v525 = vld [vmem:[#allocation2 + $0x458] sm:$0xff]
    %v526 = vld [vmem:[#allocation2 + $0x460] sm:$0xff]
    %v527 = vld [vmem:[#allocation2 + $0x468] sm:$0xff]
    %v528 = vld [vmem:[#allocation2 + $0x470] sm:$0xff]
    %v529 = vld [vmem:[#allocation2 + $0x478] sm:$0xff]
    %v530 = vld [vmem:[#allocation2 + $0x480] sm:$0xff]
    %v531 = vld [vmem:[#allocation2 + $0x488] sm:$0xff]
    %v532 = vld [vmem:[#allocation2 + $0x490] sm:$0xff]
    %v533 = vld [vmem:[#allocation2 + $0x498] sm:$0xff]
    %v534 = vld [vmem:[#allocation2 + $0x4a0] sm:$0xff]
    %v535 = vld [vmem:[#allocation2 + $0x4a8] sm:$0xff]
    %v536 = vld [vmem:[#allocation2 + $0x4b0] sm:$0xff]
    %v537 = vld [vmem:[#allocation2 + $0x4b8] sm:$0xff]
    %v538 = vld [vmem:[#allocation2 + $0x4c0] sm:$0xff]
    %v539 = vld [vmem:[#allocation2 + $0x4c8] sm:$0xff]
    %v540 = vld [vmem:[#allocation2 + $0x4d0] sm:$0xff]
    %v541 = vld [vmem:[#allocation2 + $0x4d8] sm:$0xff]
    %v542 = vld [vmem:[#allocation2 + $0x4e0] sm:$0xff]
    %v543 = vld [vmem:[#allocation2 + $0x4e8] sm:$0xff]
    %v544 = vld [vmem:[#allocation2 + $0x4f0] sm:$0xff]
    %v545 = vld [vmem:[#allocation2 + $0x4f8] sm:$0xff]
    %v546 = vld [vmem:[#allocation2 + $0x500] sm:$0xff]
    %v547 = vld [vmem:[#allocation2 + $0x508] sm:$0xff]
    %v548 = vld [vmem:[#allocation2 + $0x510] sm:$0xff]
    %v549 = vld [vmem:[#allocation2 + $0x518] sm:$0xff]
    %v550 = vld [vmem:[#allocation2 + $0x520] sm:$0xff]
    %v551 = vld [vmem:[#allocation2 + $0x528] sm:$0xff]
    %v552 = vld [vmem:[#allocation2 + $0x530] sm:$0xff]
    %v553 = vld [vmem:[#allocation2 + $0x538] sm:$0xff]
    %v554 = vld [vmem:[#allocation2 + $0x540] sm:$0xff]
    %v555 = vld [vmem:[#allocation2 + $0x548] sm:$0xff]
    %v556 = vld [vmem:[#allocation2 + $0x550] sm:$0xff]
    %v557 = vld [vmem:[#allocation2 + $0x558] sm:$0xff]
    %v558 = vld [vmem:[#allocation2 + $0x560] sm:$0xff]
    %v559 = vld [vmem:[#allocation2 + $0x568] sm:$0xff]
    %v560 = vld [vmem:[#allocation2 + $0x570] sm:$0xff]
    %v561 = vld [vmem:[#allocation2 + $0x578] sm:$0xff]
    %v562 = vld [vmem:[#allocation2 + $0x580] sm:$0xff]
    %v563 = vld [vmem:[#allocation2 + $0x588] sm:$0xff]
    %v564 = vld [vmem:[#allocation2 + $0x590] sm:$0xff]
    %v565 = vld [vmem:[#allocation2 + $0x598] sm:$0xff]
    %v566 = vld [vmem:[#allocation2 + $0x5a0] sm:$0xff]
    %v567 = vld [vmem:[#allocation2 + $0x5a8] sm:$0xff]
    %v568 = vld [vmem:[#allocation2 + $0x5b0] sm:$0xff]
    %v569 = vld [vmem:[#allocation2 + $0x5b8] sm:$0xff]
    %v570 = vld [vmem:[#allocation2 + $0x5c0] sm:$0xff]
    %v571 = vld [vmem:[#allocation2 + $0x5c8] sm:$0xff]
    %v572 = vld [vmem:[#allocation2 + $0x5d0] sm:$0xff]
    %v573 = vld [vmem:[#allocation2 + $0x5d8] sm:$0xff]
    %v574 = vld [vmem:[#allocation2 + $0x5e0] sm:$0xff]
    %v575 = vld [vmem:[#allocation2 + $0x5e8] sm:$0xff]
    %v576 = vld [vmem:[#allocation2 + $0x5f0] sm:$0xff]
    %v577 = vld [vmem:[#allocation2 + $0x5f8] sm:$0xff]
    %v578 = vld [vmem:[#allocation2 + $0x600] sm:$0xff]
    %v579 = vld [vmem:[#allocation2 + $0x608] sm:$0xff]
    %v580 = vld [vmem:[#allocation2 + $0x610] sm:$0xff]
    %v581 = vld [vmem:[#allocation2 + $0x618] sm:$0xff]
    %v582 = vld [vmem:[#allocation2 + $0x620] sm:$0xff]
    %v583 = vld [vmem:[#allocation2 + $0x628] sm:$0xff]
    %v584 = vld [vmem:[#allocation2 + $0x630] sm:$0xff]
    %v585 = vld [vmem:[#allocation2 + $0x638] sm:$0xff]
    %v586 = vld [vmem:[#allocation2 + $0x640] sm:$0xff]
    %v587 = vld [vmem:[#allocation2 + $0x648] sm:$0xff]
    %v588 = vld [vmem:[#allocation2 + $0x650] sm:$0xff]
    %v589 = vld [vmem:[#allocation2 + $0x658] sm:$0xff]
    %v590 = vld [vmem:[#allocation2 + $0x660] sm:$0xff]
    %v591 = vld [vmem:[#allocation2 + $0x668] sm:$0xff]
    %v592 = vld [vmem:[#allocation2 + $0x670] sm:$0xff]
    %v593 = vld [vmem:[#allocation2 + $0x678] sm:$0xff]
    %v594 = vld [vmem:[#allocation2 + $0x680] sm:$0xff]
    %v595 = vld [vmem:[#allocation2 + $0x688] sm:$0xff]
    %v596 = vld [vmem:[#allocation2 + $0x690] sm:$0xff]
    %v597 = vld [vmem:[#allocation2 + $0x698] sm:$0xff]
    %v598 = vld [vmem:[#allocation2 + $0x6a0] sm:$0xff]
    %v599 = vld [vmem:[#allocation2 + $0x6a8] sm:$0xff]
    %v600 = vld [vmem:[#allocation2 + $0x6b0] sm:$0xff]
    %v601 = vld [vmem:[#allocation2 + $0x6b8] sm:$0xff]
    %v602 = vld [vmem:[#allocation2 + $0x6c0] sm:$0xff]
    %v603 = vld [vmem:[#allocation2 + $0x6c8] sm:$0xff]
    %v604 = vld [vmem:[#allocation2 + $0x6d0] sm:$0xff]
    %v605 = vld [vmem:[#allocation2 + $0x6d8] sm:$0xff]
    %v606 = vld [vmem:[#allocation2 + $0x6e0] sm:$0xff]
    %v607 = vld [vmem:[#allocation2 + $0x6e8] sm:$0xff]
    %v608 = vld [vmem:[#allocation2 + $0x6f0] sm:$0xff]
    %v609 = vld [vmem:[#allocation2 + $0x6f8] sm:$0xff]
    %v610 = vld [vmem:[#allocation2 + $0x700] sm:$0xff]
    %v611 = vld [vmem:[#allocation2 + $0x708] sm:$0xff]
    %v612 = vld [vmem:[#allocation2 + $0x710] sm:$0xff]
    %v613 = vld [vmem:[#allocation2 + $0x718] sm:$0xff]
    %v614 = vld [vmem:[#allocation2 + $0x720] sm:$0xff]
    %v615 = vld [vmem:[#allocation2 + $0x728] sm:$0xff]
    %v616 = vld [vmem:[#allocation2 + $0x730] sm:$0xff]
    %v617 = vld [vmem:[#allocation2 + $0x738] sm:$0xff]
    %v618 = vld [vmem:[#allocation2 + $0x740] sm:$0xff]
    %v619 = vld [vmem:[#allocation2 + $0x748] sm:$0xff]
    %v620 = vld [vmem:[#allocation2 + $0x750] sm:$0xff]
    %v621 = vld [vmem:[#allocation2 + $0x758] sm:$0xff]
    %v622 = vld [vmem:[#allocation2 + $0x760] sm:$0xff]
    %v623 = vld [vmem:[#allocation2 + $0x768] sm:$0xff]
    %v624 = vld [vmem:[#allocation2 + $0x770] sm:$0xff]
    %v625 = vld [vmem:[#allocation2 + $0x778] sm:$0xff]
    %v626 = vld [vmem:[#allocation2 + $0x780] sm:$0xff]
    %v627 = vld [vmem:[#allocation2 + $0x788] sm:$0xff]
    %v628 = vld [vmem:[#allocation2 + $0x790] sm:$0xff]
    %v629 = vld [vmem:[#allocation2 + $0x798] sm:$0xff]
    %v630 = vld [vmem:[#allocation2 + $0x7a0] sm:$0xff]
    %v631 = vld [vmem:[#allocation2 + $0x7a8] sm:$0xff]
    %v632 = vld [vmem:[#allocation2 + $0x7b0] sm:$0xff]
    %v633 = vld [vmem:[#allocation2 + $0x7b8] sm:$0xff]
    %v634 = vld [vmem:[#allocation2 + $0x7c0] sm:$0xff]
    %v635 = vld [vmem:[#allocation2 + $0x7c8] sm:$0xff]
    %v636 = vld [vmem:[#allocation2 + $0x7d0] sm:$0xff]
    %v637 = vld [vmem:[#allocation2 + $0x7d8] sm:$0xff]
    %v638 = vld [vmem:[#allocation2 + $0x7e0] sm:$0xff]
    %v639 = vld [vmem:[#allocation2 + $0x7e8] sm:$0xff]
    %v640 = vld [vmem:[#allocation2 + $0x7f0] sm:$0xff]
    %v641 = vld [vmem:[#allocation2 + $0x7f8] sm:$0xff]
    %642 = vmatprep.subr.mxu0 %v387
    %643 = vmatpush1.msra.mxu0 %v386
    %644 = vmatprep.subr.mxu0 %v395
    %645 = vmatpush1.msra.mxu0 %v394
    %646 = vmatprep.subr.mxu0 %v403
    %647 = vmatpush1.msra.mxu0 %v402
    %648 = vmatprep.subr.mxu0 %v411
    %649 = vmatpush1.msra.mxu0 %v410
    %650 = vmatprep.subr.mxu0 %v419
    %651 = vmatpush1.msra.mxu0 %v418
    %652 = vmatprep.subr.mxu0 %v427
    %653 = vmatpush1.msra.mxu0 %v426
    %654 = vmatprep.subr.mxu0 %v435
    %655 = vmatpush1.msra.mxu0 %v434
    %656 = vmatprep.subr.mxu0 %v443
    %657 = vmatpush1.msra.mxu0 %v442
    %658 = vmatprep.subr.mxu0 %v451
    %659 = vmatpush1.msra.mxu0 %v450
    %660 = vmatprep.subr.mxu0 %v459
    %661 = vmatpush1.msra.mxu0 %v458
    %662 = vmatprep.subr.mxu0 %v467
    %663 = vmatpush1.msra.mxu0 %v466
    %664 = vmatprep.subr.mxu0 %v475
    %665 = vmatpush1.msra.mxu0 %v474
    %666 = vmatprep.subr.mxu0 %v483
    %667 = vmatpush1.msra.mxu0 %v482
    %668 = vmatprep.subr.mxu0 %v491
    %669 = vmatpush1.msra.mxu0 %v490
    %670 = vmatprep.subr.mxu0 %v499
    %671 = vmatpush1.msra.mxu0 %v498
    %672 = vmatprep.subr.mxu0 %v507
    %673 = vmatpush1.msra.mxu0 %v506
    %674 = vmatprep.subr.mxu0 %v515
    %675 = vmatpush1.msra.mxu0 %v514
    %676 = vmatprep.subr.mxu0 %v523
    %677 = vmatpush1.msra.mxu0 %v522
    %678 = vmatprep.subr.mxu0 %v531
    %679 = vmatpush1.msra.mxu0 %v530
    %680 = vmatprep.subr.mxu0 %v539
    %681 = vmatpush1.msra.mxu0 %v538
    %682 = vmatprep.subr.mxu0 %v547
    %683 = vmatpush1.msra.mxu0 %v546
    %684 = vmatprep.subr.mxu0 %v555
    %685 = vmatpush1.msra.mxu0 %v554
    %686 = vmatprep.subr.mxu0 %v563
    %687 = vmatpush1.msra.mxu0 %v562
    %688 = vmatprep.subr.mxu0 %v571
    %689 = vmatpush1.msra.mxu0 %v570
    %690 = vmatprep.subr.mxu0 %v579
    %691 = vmatpush1.msra.mxu0 %v578
    %692 = vmatprep.subr.mxu0 %v587
    %693 = vmatpush1.msra.mxu0 %v586
    %694 = vmatprep.subr.mxu0 %v595
    %695 = vmatpush1.msra.mxu0 %v594
    %696 = vmatprep.subr.mxu0 %v603
    %697 = vmatpush1.msra.mxu0 %v602
    %698 = vmatprep.subr.mxu0 %v611
    %699 = vmatpush1.msra.mxu0 %v610
    %700 = vmatprep.subr.mxu0 %v619
    %701 = vmatpush1.msra.mxu0 %v618
    %702 = vmatprep.subr.mxu0 %v627
    %703 = vmatpush1.msra.mxu0 %v626
    %704 = vmatprep.subr.mxu0 %v635
    %705 = vmatpush1.msra.mxu0 %v634
    %706 = vmatprep.mubr.f32.mxu0 0.0
    %707 = vmatmul.mubr.f32.gmra.mrb[0].mxu0 0.0
    %v708 = vpop.f32.mrb[0].mxu0
    %v709 = vadd.f32 0.0, %v708
    %v710 = vpop.f32.mrb[0].mxu0
    %v711 = vadd.f32 0.0, %v710
    %712 = vdwg.mxu0
    %713 = vmatprep.subr.mxu0 %v389
    %714 = vmatpush1.msra.mxu0 %v388
    %715 = vmatprep.subr.mxu0 %v397
    %716 = vmatpush1.msra.mxu0 %v396
    %717 = vmatprep.subr.mxu0 %v405
    %718 = vmatpush1.msra.mxu0 %v404
    %719 = vmatprep.subr.mxu0 %v413
    %720 = vmatpush1.msra.mxu0 %v412
    %721 = vmatprep.subr.mxu0 %v421
    %722 = vmatpush1.msra.mxu0 %v420
    %723 = vmatprep.subr.mxu0 %v429
    %724 = vmatpush1.msra.mxu0 %v428
    %725 = vmatprep.subr.mxu0 %v437
    %726 = vmatpush1.msra.mxu0 %v436
    %727 = vmatprep.subr.mxu0 %v445
    %728 = vmatpush1.msra.mxu0 %v444
    %729 = vmatprep.subr.mxu0 %v453
    %730 = vmatpush1.msra.mxu0 %v452
    %731 = vmatprep.subr.mxu0 %v461
    %732 = vmatpush1.msra.mxu0 %v460
    %733 = vmatprep.subr.mxu0 %v469
    %734 = vmatpush1.msra.mxu0 %v468
    %735 = vmatprep.subr.mxu0 %v477
    %736 = vmatpush1.msra.mxu0 %v476
    %737 = vmatprep.subr.mxu0 %v485
    %738 = vmatpush1.msra.mxu0 %v484
    %739 = vmatprep.subr.mxu0 %v493
    %740 = vmatpush1.msra.mxu0 %v492
    %741 = vmatprep.subr.mxu0 %v501
    %742 = vmatpush1.msra.mxu0 %v500
    %743 = vmatprep.subr.mxu0 %v509
    %744 = vmatpush1.msra.mxu0 %v508
    %745 = vmatprep.subr.mxu0 %v517
    %746 = vmatpush1.msra.mxu0 %v516
    %747 = vmatprep.subr.mxu0 %v525
    %748 = vmatpush1.msra.mxu0 %v524
    %749 = vmatprep.subr.mxu0 %v533
    %750 = vmatpush1.msra.mxu0 %v532
    %751 = vmatprep.subr.mxu0 %v541
    %752 = vmatpush1.msra.mxu0 %v540
    %753 = vmatprep.subr.mxu0 %v549
    %754 = vmatpush1.msra.mxu0 %v548
    %755 = vmatprep.subr.mxu0 %v557
    %756 = vmatpush1.msra.mxu0 %v556
    %757 = vmatprep.subr.mxu0 %v565
    %758 = vmatpush1.msra.mxu0 %v564
    %759 = vmatprep.subr.mxu0 %v573
    %760 = vmatpush1.msra.mxu0 %v572
    %761 = vmatprep.subr.mxu0 %v581
    %762 = vmatpush1.msra.mxu0 %v580
    %763 = vmatprep.subr.mxu0 %v589
    %764 = vmatpush1.msra.mxu0 %v588
    %765 = vmatprep.subr.mxu0 %v597
    %766 = vmatpush1.msra.mxu0 %v596
    %767 = vmatprep.subr.mxu0 %v605
    %768 = vmatpush1.msra.mxu0 %v604
    %769 = vmatprep.subr.mxu0 %v613
    %770 = vmatpush1.msra.mxu0 %v612
    %771 = vmatprep.subr.mxu0 %v621
    %772 = vmatpush1.msra.mxu0 %v620
    %773 = vmatprep.subr.mxu0 %v629
    %774 = vmatpush1.msra.mxu0 %v628
    %775 = vmatprep.subr.mxu0 %v637
    %776 = vmatpush1.msra.mxu0 %v636
    %777 = vmatprep.mubr.f32.mxu0 0.0
    %778 = vmatmul.mubr.f32.gmra.mrb[0].mxu0 0.0
    %v779 = vpop.f32.mrb[0].mxu0
    %v780 = vadd.f32 0.0, %v779
    %v781 = vpop.f32.mrb[0].mxu0
    %v782 = vadd.f32 0.0, %v781
    %783 = vdwg.mxu0
    %v784 = vadd.f32 %v205, %v709
    %v785 = vadd.f32 %v207, %v711
    %v786 = vadd.f32 %v318, %v780
    %v787 = vadd.f32 %v320, %v782
    %v788 = vmul.f32 %v784, 0.5
    %v789 = vtanh.pop %v788
    %v790 = vmul.f32 %v789, 0.5
    %v791 = vadd.f32 %v790, 0.5
    %v792 = vmul.f32 %v785, 0.5
    %v793 = vtanh.pop %v792
    %v794 = vmul.f32 %v793, 0.5
    %v795 = vadd.f32 %v794, 0.5
    %v796 = vtanh.pop %v786
    %v797 = vmul.f32 %v787, 0.5
    %v798 = vtanh.pop %v797
    %v799 = vmul.f32 %v798, 0.5
    %v800 = vadd.f32 %v799, 0.5
    %v801 = vmul.f32 %v795, 0.0
    %v802 = vmul.f32 %v791, %v796
    %v803 = vadd.f32 %v801, %v802
    %v804 = vtanh.pop %v803
    %v805 = vmul.f32 %v800, %v804
    %806 = vmatprep.subr.mxu0 %v387
    %807 = vmatpush1.msra.mxu0 %v386
    %808 = vmatprep.subr.mxu0 %v395
    %809 = vmatpush1.msra.mxu0 %v394
    %810 = vmatprep.subr.mxu0 %v403
    %811 = vmatpush1.msra.mxu0 %v402
    %812 = vmatprep.subr.mxu0 %v411
    %813 = vmatpush1.msra.mxu0 %v410
    %814 = vmatprep.subr.mxu0 %v419
    %815 = vmatpush1.msra.mxu0 %v418
    %816 = vmatprep.subr.mxu0 %v427
    %817 = vmatpush1.msra.mxu0 %v426
    %818 = vmatprep.subr.mxu0 %v435
    %819 = vmatpush1.msra.mxu0 %v434
    %820 = vmatprep.subr.mxu0 %v443
    %821 = vmatpush1.msra.mxu0 %v442
    %822 = vmatprep.subr.mxu0 %v451
    %823 = vmatpush1.msra.mxu0 %v450
    %824 = vmatprep.subr.mxu0 %v459
    %825 = vmatpush1.msra.mxu0 %v458
    %826 = vmatprep.subr.mxu0 %v467
    %827 = vmatpush1.msra.mxu0 %v466
    %828 = vmatprep.subr.mxu0 %v475
    %829 = vmatpush1.msra.mxu0 %v474
    %830 = vmatprep.subr.mxu0 %v483
    %831 = vmatpush1.msra.mxu0 %v482
    %832 = vmatprep.subr.mxu0 %v491
    %833 = vmatpush1.msra.mxu0 %v490
    %834 = vmatprep.subr.mxu0 %v499
    %835 = vmatpush1.msra.mxu0 %v498
    %836 = vmatprep.subr.mxu0 %v507
    %837 = vmatpush1.msra.mxu0 %v506
    %838 = vmatprep.subr.mxu0 %v515
    %839 = vmatpush1.msra.mxu0 %v514
    %840 = vmatprep.subr.mxu0 %v523
    %841 = vmatpush1.msra.mxu0 %v522
    %842 = vmatprep.subr.mxu0 %v531
    %843 = vmatpush1.msra.mxu0 %v530
    %844 = vmatprep.subr.mxu0 %v539
    %845 = vmatpush1.msra.mxu0 %v538
    %846 = vmatprep.subr.mxu0 %v547
    %847 = vmatpush1.msra.mxu0 %v546
    %848 = vmatprep.subr.mxu0 %v555
    %849 = vmatpush1.msra.mxu0 %v554
    %850 = vmatprep.subr.mxu0 %v563
    %851 = vmatpush1.msra.mxu0 %v562
    %852 = vmatprep.subr.mxu0 %v571
    %853 = vmatpush1.msra.mxu0 %v570
    %854 = vmatprep.subr.mxu0 %v579
    %855 = vmatpush1.msra.mxu0 %v578
    %856 = vmatprep.subr.mxu0 %v587
    %857 = vmatpush1.msra.mxu0 %v586
    %858 = vmatprep.subr.mxu0 %v595
    %859 = vmatpush1.msra.mxu0 %v594
    %860 = vmatprep.subr.mxu0 %v603
    %861 = vmatpush1.msra.mxu0 %v602
    %862 = vmatprep.subr.mxu0 %v611
    %863 = vmatpush1.msra.mxu0 %v610
    %864 = vmatprep.subr.mxu0 %v619
    %865 = vmatpush1.msra.mxu0 %v618
    %866 = vmatprep.subr.mxu0 %v627
    %867 = vmatpush1.msra.mxu0 %v626
    %868 = vmatprep.subr.mxu0 %v635
    %869 = vmatpush1.msra.mxu0 %v634
    %870 = vmatprep.mubr.f32.mxu0 0.0
    %871 = vmatmul.mubr.f32.gmra.mrb[0].mxu0 %v805
    %v872 = vpop.f32.mrb[0].mxu0
    %v873 = vadd.f32 0.0, %v872
    %v874 = vpop.f32.mrb[0].mxu0
    %v875 = vadd.f32 0.0, %v874
    %876 = vdwg.mxu0
    %877 = vmatprep.subr.mxu0 %v389
    %878 = vmatpush1.msra.mxu0 %v388
    %879 = vmatprep.subr.mxu0 %v397
    %880 = vmatpush1.msra.mxu0 %v396
    %881 = vmatprep.subr.mxu0 %v405
    %882 = vmatpush1.msra.mxu0 %v404
    %883 = vmatprep.subr.mxu0 %v413
    %884 = vmatpush1.msra.mxu0 %v412
    %885 = vmatprep.subr.mxu0 %v421
    %886 = vmatpush1.msra.mxu0 %v420
    %887 = vmatprep.subr.mxu0 %v429
    %888 = vmatpush1.msra.mxu0 %v428
    %889 = vmatprep.subr.mxu0 %v437
    %890 = vmatpush1.msra.mxu0 %v436
    %891 = vmatprep.subr.mxu0 %v445
    %892 = vmatpush1.msra.mxu0 %v444
    %893 = vmatprep.subr.mxu0 %v453
    %894 = vmatpush1.msra.mxu0 %v452
    %895 = vmatprep.subr.mxu0 %v461
    %896 = vmatpush1.msra.mxu0 %v460
    %897 = vmatprep.subr.mxu0 %v469
    %898 = vmatpush1.msra.mxu0 %v468
    %899 = vmatprep.subr.mxu0 %v477
    %900 = vmatpush1.msra.mxu0 %v476
    %901 = vmatprep.subr.mxu0 %v485
    %902 = vmatpush1.msra.mxu0 %v484
    %903 = vmatprep.subr.mxu0 %v493
    %904 = vmatpush1.msra.mxu0 %v492
    %905 = vmatprep.subr.mxu0 %v501
    %906 = vmatpush1.msra.mxu0 %v500
    %907 = vmatprep.subr.mxu0 %v509
    %908 = vmatpush1.msra.mxu0 %v508
    %909 = vmatprep.subr.mxu0 %v517
    %910 = vmatpush1.msra.mxu0 %v516
    %911 = vmatprep.subr.mxu0 %v525
    %912 = vmatpush1.msra.mxu0 %v524
    %913 = vmatprep.subr.mxu0 %v533
    %914 = vmatpush1.msra.mxu0 %v532
    %915 = vmatprep.subr.mxu0 %v541
    %916 = vmatpush1.msra.mxu0 %v540
    %917 = vmatprep.subr.mxu0 %v549
    %918 = vmatpush1.msra.mxu0 %v548
    %919 = vmatprep.subr.mxu0 %v557
    %920 = vmatpush1.msra.mxu0 %v556
    %921 = vmatprep.subr.mxu0 %v565
    %922 = vmatpush1.msra.mxu0 %v564
    %923 = vmatprep.subr.mxu0 %v573
    %924 = vmatpush1.msra.mxu0 %v572
    %925 = vmatprep.subr.mxu0 %v581
    %926 = vmatpush1.msra.mxu0 %v580
    %927 = vmatprep.subr.mxu0 %v589
    %928 = vmatpush1.msra.mxu0 %v588
    %929 = vmatprep.subr.mxu0 %v597
    %930 = vmatpush1.msra.mxu0 %v596
    %931 = vmatprep.subr.mxu0 %v605
    %932 = vmatpush1.msra.mxu0 %v604
    %933 = vmatprep.subr.mxu0 %v613
    %934 = vmatpush1.msra.mxu0 %v612
    %935 = vmatprep.subr.mxu0 %v621
    %936 = vmatpush1.msra.mxu0 %v620
    %937 = vmatprep.subr.mxu0 %v629
    %938 = vmatpush1.msra.mxu0 %v628
    %939 = vmatprep.subr.mxu0 %v637
    %940 = vmatpush1.msra.mxu0 %v636
    %941 = vmatprep.mubr.f32.mxu0 0.0
    %942 = vmatmul.mubr.f32.gmra.mrb[0].mxu0 %v805
    %v943 = vpop.f32.mrb[0].mxu0
    %v944 = vadd.f32 0.0, %v943
    %v945 = vpop.f32.mrb[0].mxu0
    %v946 = vadd.f32 0.0, %v945
    %947 = vdwg.mxu0
    %948 = vmatprep.subr.mxu0 %v391
    %949 = vmatpush1.msra.mxu0 %v390
    %950 = vmatprep.subr.mxu0 %v399
    %951 = vmatpush1.msra.mxu0 %v398
    %952 = vmatprep.subr.mxu0 %v407
    %953 = vmatpush1.msra.mxu0 %v406
    %954 = vmatprep.subr.mxu0 %v415
    %955 = vmatpush1.msra.mxu0 %v414
    %956 = vmatprep.subr.mxu0 %v423
    %957 = vmatpush1.msra.mxu0 %v422
    %958 = vmatprep.subr.mxu0 %v431
    %959 = vmatpush1.msra.mxu0 %v430
    %960 = vmatprep.subr.mxu0 %v439
    %961 = vmatpush1.msra.mxu0 %v438
    %962 = vmatprep.subr.mxu0 %v447
    %963 = vmatpush1.msra.mxu0 %v446
    %964 = vmatprep.subr.mxu0 %v455
    %965 = vmatpush1.msra.mxu0 %v454
    %966 = vmatprep.subr.mxu0 %v463
    %967 = vmatpush1.msra.mxu0 %v462
    %968 = vmatprep.subr.mxu0 %v471
    %969 = vmatpush1.msra.mxu0 %v470
    %970 = vmatprep.subr.mxu0 %v479
    %971 = vmatpush1.msra.mxu0 %v478
    %972 = vmatprep.subr.mxu0 %v487
    %973 = vmatpush1.msra.mxu0 %v486
    %974 = vmatprep.subr.mxu0 %v495
    %975 = vmatpush1.msra.mxu0 %v494
    %976 = vmatprep.subr.mxu0 %v503
    %977 = vmatpush1.msra.mxu0 %v502
    %978 = vmatprep.subr.mxu0 %v511
    %979 = vmatpush1.msra.mxu0 %v510
    %980 = vmatprep.subr.mxu0 %v519
    %981 = vmatpush1.msra.mxu0 %v518
    %982 = vmatprep.subr.mxu0 %v527
    %983 = vmatpush1.msra.mxu0 %v526
    %984 = vmatprep.subr.mxu0 %v535
    %985 = vmatpush1.msra.mxu0 %v534
    %986 = vmatprep.subr.mxu0 %v543
    %987 = vmatpush1.msra.mxu0 %v542
    %988 = vmatprep.subr.mxu0 %v551
    %989 = vmatpush1.msra.mxu0 %v550
    %990 = vmatprep.subr.mxu0 %v559
    %991 = vmatpush1.msra.mxu0 %v558
    %992 = vmatprep.subr.mxu0 %v567
    %993 = vmatpush1.msra.mxu0 %v566
    %994 = vmatprep.subr.mxu0 %v575
    %995 = vmatpush1.msra.mxu0 %v574
    %996 = vmatprep.subr.mxu0 %v583
    %997 = vmatpush1.msra.mxu0 %v582
    %998 = vmatprep.subr.mxu0 %v591
    %999 = vmatpush1.msra.mxu0 %v590
    %1000 = vmatprep.subr.mxu0 %v599
    %1001 = vmatpush1.msra.mxu0 %v598
    %1002 = vmatprep.subr.mxu0 %v607
    %1003 = vmatpush1.msra.mxu0 %v606
    %1004 = vmatprep.subr.mxu0 %v615
    %1005 = vmatpush1.msra.mxu0 %v614
    %1006 = vmatprep.subr.mxu0 %v623
    %1007 = vmatpush1.msra.mxu0 %v622
    %1008 = vmatprep.subr.mxu0 %v631
    %1009 = vmatpush1.msra.mxu0 %v630
    %1010 = vmatprep.subr.mxu0 %v639
    %1011 = vmatpush1.msra.mxu0 %v638
    %1012 = vmatprep.mubr.f32.mxu0 0.0
    %1013 = vmatmul.mubr.f32.gmra.mrb[0].mxu0 %v805
    %v1014 = vpop.f32.mrb[0].mxu0
    %v1015 = vadd.f32 0.0, %v1014
    %v1016 = vpop.f32.mrb[0].mxu0
    %v1017 = vadd.f32 0.0, %v1016
    %1018 = vdwg.mxu0
    %1019 = vmatprep.subr.mxu0 %v393
    %1020 = vmatpush1.msra.mxu0 %v392
    %1021 = vmatprep.subr.mxu0 %v401
    %1022 = vmatpush1.msra.mxu0 %v400
    %1023 = vmatprep.subr.mxu0 %v409
    %1024 = vmatpush1.msra.mxu0 %v408
    %1025 = vmatprep.subr.mxu0 %v417
    %1026 = vmatpush1.msra.mxu0 %v416
    %1027 = vmatprep.subr.mxu0 %v425
    %1028 = vmatpush1.msra.mxu0 %v424
    %1029 = vmatprep.subr.mxu0 %v433
    %1030 = vmatpush1.msra.mxu0 %v432
    %1031 = vmatprep.subr.mxu0 %v441
    %1032 = vmatpush1.msra.mxu0 %v440
    %1033 = vmatprep.subr.mxu0 %v449
    %1034 = vmatpush1.msra.mxu0 %v448
    %1035 = vmatprep.subr.mxu0 %v457
    %1036 = vmatpush1.msra.mxu0 %v456
    %1037 = vmatprep.subr.mxu0 %v465
    %1038 = vmatpush1.msra.mxu0 %v464
    %1039 = vmatprep.subr.mxu0 %v473
    %1040 = vmatpush1.msra.mxu0 %v472
    %1041 = vmatprep.subr.mxu0 %v481
    %1042 = vmatpush1.msra.mxu0 %v480
    %1043 = vmatprep.subr.mxu0 %v489
    %1044 = vmatpush1.msra.mxu0 %v488
    %1045 = vmatprep.subr.mxu0 %v497
    %1046 = vmatpush1.msra.mxu0 %v496
    %1047 = vmatprep.subr.mxu0 %v505
    %1048 = vmatpush1.msra.mxu0 %v504
    %1049 = vmatprep.subr.mxu0 %v513
    %1050 = vmatpush1.msra.mxu0 %v512
    %1051 = vmatprep.subr.mxu0 %v521
    %1052 = vmatpush1.msra.mxu0 %v520
    %1053 = vmatprep.subr.mxu0 %v529
    %1054 = vmatpush1.msra.mxu0 %v528
    %1055 = vmatprep.subr.mxu0 %v537
    %1056 = vmatpush1.msra.mxu0 %v536
    %1057 = vmatprep.subr.mxu0 %v545
    %1058 = vmatpush1.msra.mxu0 %v544
    %1059 = vmatprep.subr.mxu0 %v553
    %1060 = vmatpush1.msra.mxu0 %v552
    %1061 = vmatprep.subr.mxu0 %v561
    %1062 = vmatpush1.msra.mxu0 %v560
    %1063 = vmatprep.subr.mxu0 %v569
    %1064 = vmatpush1.msra.mxu0 %v568
    %1065 = vmatprep.subr.mxu0 %v577
    %1066 = vmatpush1.msra.mxu0 %v576
    %1067 = vmatprep.subr.mxu0 %v585
    %1068 = vmatpush1.msra.mxu0 %v584
    %1069 = vmatprep.subr.mxu0 %v593
    %1070 = vmatpush1.msra.mxu0 %v592
    %1071 = vmatprep.subr.mxu0 %v601
    %1072 = vmatpush1.msra.mxu0 %v600
    %1073 = vmatprep.subr.mxu0 %v609
    %1074 = vmatpush1.msra.mxu0 %v608
    %1075 = vmatprep.subr.mxu0 %v617
    %1076 = vmatpush1.msra.mxu0 %v616
    %1077 = vmatprep.subr.mxu0 %v625
    %1078 = vmatpush1.msra.mxu0 %v624
    %1079 = vmatprep.subr.mxu0 %v633
    %1080 = vmatpush1.msra.mxu0 %v632
    %1081 = vmatprep.subr.mxu0 %v641
    %1082 = vmatpush1.msra.mxu0 %v640
    %1083 = vmatprep.mubr.f32.mxu0 0.0
    %1084 = vmatmul.mubr.f32.gmra.mrb[0].mxu0 %v805
    %v1085 = vpop.f32.mrb[0].mxu0
    %v1086 = vadd.f32 0.0, %v1085
    %v1087 = vpop.f32.mrb[0].mxu0
    %v1088 = vadd.f32 0.0, %v1087
    %1089 = vdwg.mxu0
    %v1090 = vadd.f32 %v1015, %v369
    %v1091 = vadd.f32 %v1017, %v373
    %v1092 = vadd.f32 %v1086, %v377
    %v1093 = vadd.f32 %v1088, %v381
    %v1094 = vmul.f32 %v1090, 0.5
    %v1095 = vtanh.pop %v1094
    %v1096 = vmul.f32 %v1095, 0.5
    %v1097 = vadd.f32 %v1096, 0.5
    %v1098 = vmul.f32 %v1091, 0.5
    %v1099 = vtanh.pop %v1098
    %v1100 = vmul.f32 %v1099, 0.5
    %v1101 = vadd.f32 %v1100, 0.5
    %v1102 = vtanh.pop %v1092
    %v1103 = vmul.f32 %v1093, 0.5
    %v1104 = vtanh.pop %v1103
    %v1105 = vmul.f32 %v1104, 0.5
    %v1106 = vadd.f32 %v1105, 0.5
    %v1107 = vmul.f32 %v1101, 0.0
    %v1108 = vmul.f32 %v1097, %v1102
    %v1109 = vadd.f32 %v1107, %v1108
    %v1110 = vtanh.pop %v1109
    %v1111 = vmul.f32 %v1106, %v1110
    %v1112 = vadd.f32 %v211, %v873
    %v1113 = vadd.f32 %v213, %v875
    %v1114 = vadd.f32 %v324, %v944
    %v1115 = vadd.f32 %v326, %v946
    %v1116 = vmul.f32 %v1112, 0.5
    %v1117 = vtanh.pop %v1116
    %v1118 = vmul.f32 %v1117, 0.5
    %v1119 = vadd.f32 %v1118, 0.5
    %v1120 = vmul.f32 %v1113, 0.5
    %v1121 = vtanh.pop %v1120
    %v1122 = vmul.f32 %v1121, 0.5
    %v1123 = vadd.f32 %v1122, 0.5
    %v1124 = vtanh.pop %v1114
    %v1125 = vmul.f32 %v1115, 0.5
    %v1126 = vtanh.pop %v1125
    %v1127 = vmul.f32 %v1126, 0.5
    %v1128 = vadd.f32 %v1127, 0.5
    %v1129 = vmul.f32 %v1123, %v803
    %v1130 = vmul.f32 %v1119, %v1124
    %v1131 = vadd.f32 %v1129, %v1130
    %v1132 = vtanh.pop %v1131
    %v1133 = vmul.f32 %v1128, %v1132
    %1134 = vmatprep.subr.mxu0 %v387
    %1135 = vmatpush1.msra.mxu0 %v386
    %1136 = vmatprep.subr.mxu0 %v395
    %1137 = vmatpush1.msra.mxu0 %v394
    %1138 = vmatprep.subr.mxu0 %v403
    %1139 = vmatpush1.msra.mxu0 %v402
    %1140 = vmatprep.subr.mxu0 %v411
    %1141 = vmatpush1.msra.mxu0 %v410
    %1142 = vmatprep.subr.mxu0 %v419
    %1143 = vmatpush1.msra.mxu0 %v418
    %1144 = vmatprep.subr.mxu0 %v427
    %1145 = vmatpush1.msra.mxu0 %v426
    %1146 = vmatprep.subr.mxu0 %v435
    %1147 = vmatpush1.msra.mxu0 %v434
    %1148 = vmatprep.subr.mxu0 %v443
    %1149 = vmatpush1.msra.mxu0 %v442
    %1150 = vmatprep.subr.mxu0 %v451
    %1151 = vmatpush1.msra.mxu0 %v450
    %1152 = vmatprep.subr.mxu0 %v459
    %1153 = vmatpush1.msra.mxu0 %v458
    %1154 = vmatprep.subr.mxu0 %v467
    %1155 = vmatpush1.msra.mxu0 %v466
    %1156 = vmatprep.subr.mxu0 %v475
    %1157 = vmatpush1.msra.mxu0 %v474
    %1158 = vmatprep.subr.mxu0 %v483
    %1159 = vmatpush1.msra.mxu0 %v482
    %1160 = vmatprep.subr.mxu0 %v491
    %1161 = vmatpush1.msra.mxu0 %v490
    %1162 = vmatprep.subr.mxu0 %v499
    %1163 = vmatpush1.msra.mxu0 %v498
    %1164 = vmatprep.subr.mxu0 %v507
    %1165 = vmatpush1.msra.mxu0 %v506
    %1166 = vmatprep.subr.mxu0 %v515
    %1167 = vmatpush1.msra.mxu0 %v514
    %1168 = vmatprep.subr.mxu0 %v523
    %1169 = vmatpush1.msra.mxu0 %v522
    %1170 = vmatprep.subr.mxu0 %v531
    %1171 = vmatpush1.msra.mxu0 %v530
    %1172 = vmatprep.subr.mxu0 %v539
    %1173 = vmatpush1.msra.mxu0 %v538
    %1174 = vmatprep.subr.mxu0 %v547
    %1175 = vmatpush1.msra.mxu0 %v546
    %1176 = vmatprep.subr.mxu0 %v555
    %1177 = vmatpush1.msra.mxu0 %v554
    %1178 = vmatprep.subr.mxu0 %v563
    %1179 = vmatpush1.msra.mxu0 %v562
    %1180 = vmatprep.subr.mxu0 %v571
    %1181 = vmatpush1.msra.mxu0 %v570
    %1182 = vmatprep.subr.mxu0 %v579
    %1183 = vmatpush1.msra.mxu0 %v578
    %1184 = vmatprep.subr.mxu0 %v587
    %1185 = vmatpush1.msra.mxu0 %v586
    %1186 = vmatprep.subr.mxu0 %v595
    %1187 = vmatpush1.msra.mxu0 %v594
    %1188 = vmatprep.subr.mxu0 %v603
    %1189 = vmatpush1.msra.mxu0 %v602
    %1190 = vmatprep.subr.mxu0 %v611
    %1191 = vmatpush1.msra.mxu0 %v610
    %1192 = vmatprep.subr.mxu0 %v619
    %1193 = vmatpush1.msra.mxu0 %v618
    %1194 = vmatprep.subr.mxu0 %v627
    %1195 = vmatpush1.msra.mxu0 %v626
    %1196 = vmatprep.subr.mxu0 %v635
    %1197 = vmatpush1.msra.mxu0 %v634
    %1198 = vmatprep.mubr.f32.mxu0 %v1111
    %1199 = vmatmul.mubr.f32.gmra.mrb[0].mxu0 %v1133
    %v1200 = vpop.f32.mrb[0].mxu0
    %v1201 = vadd.f32 0.0, %v1200
    %v1202 = vpop.f32.mrb[0].mxu0
    %v1203 = vadd.f32 0.0, %v1202
    %1204 = vdwg.mxu0
    %1205 = vmatprep.subr.mxu0 %v389
    %1206 = vmatpush1.msra.mxu0 %v388
    %1207 = vmatprep.subr.mxu0 %v397
    %1208 = vmatpush1.msra.mxu0 %v396
    %1209 = vmatprep.subr.mxu0 %v405
    %1210 = vmatpush1.msra.mxu0 %v404
    %1211 = vmatprep.subr.mxu0 %v413
    %1212 = vmatpush1.msra.mxu0 %v412
    %1213 = vmatprep.subr.mxu0 %v421
    %1214 = vmatpush1.msra.mxu0 %v420
    %1215 = vmatprep.subr.mxu0 %v429
    %1216 = vmatpush1.msra.mxu0 %v428
    %1217 = vmatprep.subr.mxu0 %v437
    %1218 = vmatpush1.msra.mxu0 %v436
    %1219 = vmatprep.subr.mxu0 %v445
    %1220 = vmatpush1.msra.mxu0 %v444
    %1221 = vmatprep.subr.mxu0 %v453
    %1222 = vmatpush1.msra.mxu0 %v452
    %1223 = vmatprep.subr.mxu0 %v461
    %1224 = vmatpush1.msra.mxu0 %v460
    %1225 = vmatprep.subr.mxu0 %v469
    %1226 = vmatpush1.msra.mxu0 %v468
    %1227 = vmatprep.subr.mxu0 %v477
    %1228 = vmatpush1.msra.mxu0 %v476
    %1229 = vmatprep.subr.mxu0 %v485
    %1230 = vmatpush1.msra.mxu0 %v484
    %1231 = vmatprep.subr.mxu0 %v493
    %1232 = vmatpush1.msra.mxu0 %v492
    %1233 = vmatprep.subr.mxu0 %v501
    %1234 = vmatpush1.msra.mxu0 %v500
    %1235 = vmatprep.subr.mxu0 %v509
    %1236 = vmatpush1.msra.mxu0 %v508
    %1237 = vmatprep.subr.mxu0 %v517
    %1238 = vmatpush1.msra.mxu0 %v516
    %1239 = vmatprep.subr.mxu0 %v525
    %1240 = vmatpush1.msra.mxu0 %v524
    %1241 = vmatprep.subr.mxu0 %v533
    %1242 = vmatpush1.msra.mxu0 %v532
    %1243 = vmatprep.subr.mxu0 %v541
    %1244 = vmatpush1.msra.mxu0 %v540
    %1245 = vmatprep.subr.mxu0 %v549
    %1246 = vmatpush1.msra.mxu0 %v548
    %1247 = vmatprep.subr.mxu0 %v557
    %1248 = vmatpush1.msra.mxu0 %v556
    %1249 = vmatprep.subr.mxu0 %v565
    %1250 = vmatpush1.msra.mxu0 %v564
    %1251 = vmatprep.subr.mxu0 %v573
    %1252 = vmatpush1.msra.mxu0 %v572
    %1253 = vmatprep.subr.mxu0 %v581
    %1254 = vmatpush1.msra.mxu0 %v580
    %1255 = vmatprep.subr.mxu0 %v589
    %1256 = vmatpush1.msra.mxu0 %v588
    %1257 = vmatprep.subr.mxu0 %v597
    %1258 = vmatpush1.msra.mxu0 %v596
    %1259 = vmatprep.subr.mxu0 %v605
    %1260 = vmatpush1.msra.mxu0 %v604
    %1261 = vmatprep.subr.mxu0 %v613
    %1262 = vmatpush1.msra.mxu0 %v612
    %1263 = vmatprep.subr.mxu0 %v621
    %1264 = vmatpush1.msra.mxu0 %v620
    %1265 = vmatprep.subr.mxu0 %v629
    %1266 = vmatpush1.msra.mxu0 %v628
    %1267 = vmatprep.subr.mxu0 %v637
    %1268 = vmatpush1.msra.mxu0 %v636
    %1269 = vmatprep.mubr.f32.mxu0 %v1111
    %1270 = vmatmul.mubr.f32.gmra.mrb[0].mxu0 %v1133
    %v1271 = vpop.f32.mrb[0].mxu0
    %v1272 = vadd.f32 0.0, %v1271
    %v1273 = vpop.f32.mrb[0].mxu0
    %v1274 = vadd.f32 0.0, %v1273
    %1275 = vdwg.mxu0
    %1276 = vmatprep.subr.mxu0 %v391
    %1277 = vmatpush1.msra.mxu0 %v390
    %1278 = vmatprep.subr.mxu0 %v399
    %1279 = vmatpush1.msra.mxu0 %v398
    %1280 = vmatprep.subr.mxu0 %v407
    %1281 = vmatpush1.msra.mxu0 %v406
    %1282 = vmatprep.subr.mxu0 %v415
    %1283 = vmatpush1.msra.mxu0 %v414
    %1284 = vmatprep.subr.mxu0 %v423
    %1285 = vmatpush1.msra.mxu0 %v422
    %1286 = vmatprep.subr.mxu0 %v431
    %1287 = vmatpush1.msra.mxu0 %v430
    %1288 = vmatprep.subr.mxu0 %v439
    %1289 = vmatpush1.msra.mxu0 %v438
    %1290 = vmatprep.subr.mxu0 %v447
    %1291 = vmatpush1.msra.mxu0 %v446
    %1292 = vmatprep.subr.mxu0 %v455
    %1293 = vmatpush1.msra.mxu0 %v454
    %1294 = vmatprep.subr.mxu0 %v463
    %1295 = vmatpush1.msra.mxu0 %v462
    %1296 = vmatprep.subr.mxu0 %v471
    %1297 = vmatpush1.msra.mxu0 %v470
    %1298 = vmatprep.subr.mxu0 %v479
    %1299 = vmatpush1.msra.mxu0 %v478
    %1300 = vmatprep.subr.mxu0 %v487
    %1301 = vmatpush1.msra.mxu0 %v486
    %1302 = vmatprep.subr.mxu0 %v495
    %1303 = vmatpush1.msra.mxu0 %v494
    %1304 = vmatprep.subr.mxu0 %v503
    %1305 = vmatpush1.msra.mxu0 %v502
    %1306 = vmatprep.subr.mxu0 %v511
    %1307 = vmatpush1.msra.mxu0 %v510
    %1308 = vmatprep.subr.mxu0 %v519
    %1309 = vmatpush1.msra.mxu0 %v518
    %1310 = vmatprep.subr.mxu0 %v527
    %1311 = vmatpush1.msra.mxu0 %v526
    %1312 = vmatprep.subr.mxu0 %v535
    %1313 = vmatpush1.msra.mxu0 %v534
    %1314 = vmatprep.subr.mxu0 %v543
    %1315 = vmatpush1.msra.mxu0 %v542
    %1316 = vmatprep.subr.mxu0 %v551
    %1317 = vmatpush1.msra.mxu0 %v550
    %1318 = vmatprep.subr.mxu0 %v559
    %1319 = vmatpush1.msra.mxu0 %v558
    %1320 = vmatprep.subr.mxu0 %v567
    %1321 = vmatpush1.msra.mxu0 %v566
    %1322 = vmatprep.subr.mxu0 %v575
    %1323 = vmatpush1.msra.mxu0 %v574
    %1324 = vmatprep.subr.mxu0 %v583
    %1325 = vmatpush1.msra.mxu0 %v582
    %1326 = vmatprep.subr.mxu0 %v591
    %1327 = vmatpush1.msra.mxu0 %v590
    %1328 = vmatprep.subr.mxu0 %v599
    %1329 = vmatpush1.msra.mxu0 %v598
    %1330 = vmatprep.subr.mxu0 %v607
    %1331 = vmatpush1.msra.mxu0 %v606
    %1332 = vmatprep.subr.mxu0 %v615
    %1333 = vmatpush1.msra.mxu0 %v614
    %1334 = vmatprep.subr.mxu0 %v623
    %1335 = vmatpush1.msra.mxu0 %v622
    %1336 = vmatprep.subr.mxu0 %v631
    %1337 = vmatpush1.msra.mxu0 %v630
    %1338 = vmatprep.subr.mxu0 %v639
    %1339 = vmatpush1.msra.mxu0 %v638
    %1340 = vmatprep.mubr.f32.mxu0 %v1111
    %1341 = vmatmul.mubr.f32.gmra.mrb[0].mxu0 %v1133
    %v1342 = vpop.f32.mrb[0].mxu0
    %v1343 = vadd.f32 0.0, %v1342
    %v1344 = vpop.f32.mrb[0].mxu0
    %v1345 = vadd.f32 0.0, %v1344
    %1346 = vdwg.mxu0
    %1347 = vmatprep.subr.mxu0 %v393
    %1348 = vmatpush1.msra.mxu0 %v392
    %1349 = vmatprep.subr.mxu0 %v401
    %1350 = vmatpush1.msra.mxu0 %v400
    %1351 = vmatprep.subr.mxu0 %v409
    %1352 = vmatpush1.msra.mxu0 %v408
    %1353 = vmatprep.subr.mxu0 %v417
    %1354 = vmatpush1.msra.mxu0 %v416
    %1355 = vmatprep.subr.mxu0 %v425
    %1356 = vmatpush1.msra.mxu0 %v424
    %1357 = vmatprep.subr.mxu0 %v433
    %1358 = vmatpush1.msra.mxu0 %v432
    %1359 = vmatprep.subr.mxu0 %v441
    %1360 = vmatpush1.msra.mxu0 %v440
    %1361 = vmatprep.subr.mxu0 %v449
    %1362 = vmatpush1.msra.mxu0 %v448
    %1363 = vmatprep.subr.mxu0 %v457
    %1364 = vmatpush1.msra.mxu0 %v456
    %1365 = vmatprep.subr.mxu0 %v465
    %1366 = vmatpush1.msra.mxu0 %v464
    %1367 = vmatprep.subr.mxu0 %v473
    %1368 = vmatpush1.msra.mxu0 %v472
    %1369 = vmatprep.subr.mxu0 %v481
    %1370 = vmatpush1.msra.mxu0 %v480
    %1371 = vmatprep.subr.mxu0 %v489
    %1372 = vmatpush1.msra.mxu0 %v488
    %1373 = vmatprep.subr.mxu0 %v497
    %1374 = vmatpush1.msra.mxu0 %v496
    %1375 = vmatprep.subr.mxu0 %v505
    %1376 = vmatpush1.msra.mxu0 %v504
    %1377 = vmatprep.subr.mxu0 %v513
    %1378 = vmatpush1.msra.mxu0 %v512
    %1379 = vmatprep.subr.mxu0 %v521
    %1380 = vmatpush1.msra.mxu0 %v520
    %1381 = vmatprep.subr.mxu0 %v529
    %1382 = vmatpush1.msra.mxu0 %v528
    %1383 = vmatprep.subr.mxu0 %v537
    %1384 = vmatpush1.msra.mxu0 %v536
    %1385 = vmatprep.subr.mxu0 %v545
    %1386 = vmatpush1.msra.mxu0 %v544
    %1387 = vmatprep.subr.mxu0 %v553
    %1388 = vmatpush1.msra.mxu0 %v552
    %1389 = vmatprep.subr.mxu0 %v561
    %1390 = vmatpush1.msra.mxu0 %v560
    %1391 = vmatprep.subr.mxu0 %v569
    %1392 = vmatpush1.msra.mxu0 %v568
    %1393 = vmatprep.subr.mxu0 %v577
    %1394 = vmatpush1.msra.mxu0 %v576
    %1395 = vmatprep.subr.mxu0 %v585
    %1396 = vmatpush1.msra.mxu0 %v584
    %1397 = vmatprep.subr.mxu0 %v593
    %1398 = vmatpush1.msra.mxu0 %v592
    %1399 = vmatprep.subr.mxu0 %v601
    %1400 = vmatpush1.msra.mxu0 %v600
    %1401 = vmatprep.subr.mxu0 %v609
    %1402 = vmatpush1.msra.mxu0 %v608
    %1403 = vmatprep.subr.mxu0 %v617
    %1404 = vmatpush1.msra.mxu0 %v616
    %1405 = vmatprep.subr.mxu0 %v625
    %1406 = vmatpush1.msra.mxu0 %v624
    %1407 = vmatprep.subr.mxu0 %v633
    %1408 = vmatpush1.msra.mxu0 %v632
    %1409 = vmatprep.subr.mxu0 %v641
    %1410 = vmatpush1.msra.mxu0 %v640
    %1411 = vmatprep.mubr.f32.mxu0 %v1111
    %1412 = vmatmul.mubr.f32.gmra.mrb[0].mxu0 %v1133
    %v1413 = vpop.f32.mrb[0].mxu0
    %v1414 = vadd.f32 0.0, %v1413
    %v1415 = vpop.f32.mrb[0].mxu0
    %v1416 = vadd.f32 0.0, %v1415
    %1417 = vdwg.mxu0
    %v1418 = vadd.f32 %v1343, %v369
    %v1419 = vadd.f32 %v1345, %v373
    %v1420 = vadd.f32 %v1414, %v377
    %v1421 = vadd.f32 %v1416, %v381
    %v1422 = vmul.f32 %v1418, 0.5
    %v1423 = vtanh.pop %v1422
    %v1424 = vmul.f32 %v1423, 0.5
    %v1425 = vadd.f32 %v1424, 0.5
    %v1426 = vmul.f32 %v1419, 0.5
    %v1427 = vtanh.pop %v1426
    %v1428 = vmul.f32 %v1427, 0.5
    %v1429 = vadd.f32 %v1428, 0.5
    %v1430 = vtanh.pop %v1420
    %v1431 = vmul.f32 %v1421, 0.5
    %v1432 = vtanh.pop %v1431
    %v1433 = vmul.f32 %v1432, 0.5
    %v1434 = vadd.f32 %v1433, 0.5
    %v1435 = vmul.f32 %v1429, %v1109
    %v1436 = vmul.f32 %v1425, %v1430
    %v1437 = vadd.f32 %v1435, %v1436
    %v1438 = vtanh.pop %v1437
    %v1439 = vmul.f32 %v1434, %v1438
    %v1440 = vadd.f32 %v217, %v1201
    %v1441 = vadd.f32 %v219, %v1203
    %v1442 = vadd.f32 %v330, %v1272
    %v1443 = vadd.f32 %v332, %v1274
    %v1444 = vmul.f32 %v1440, 0.5
    %v1445 = vtanh.pop %v1444
    %v1446 = vmul.f32 %v1445, 0.5
    %v1447 = vadd.f32 %v1446, 0.5
    %v1448 = vmul.f32 %v1441, 0.5
    %v1449 = vtanh.pop %v1448
    %v1450 = vmul.f32 %v1449, 0.5
    %v1451 = vadd.f32 %v1450, 0.5
    %v1452 = vtanh.pop %v1442
    %v1453 = vmul.f32 %v1443, 0.5
    %v1454 = vtanh.pop %v1453
    %v1455 = vmul.f32 %v1454, 0.5
    %v1456 = vadd.f32 %v1455, 0.5
    %v1457 = vmul.f32 %v1451, %v1131
    %v1458 = vmul.f32 %v1447, %v1452
    %v1459 = vadd.f32 %v1457, %v1458
    %v1460 = vtanh.pop %v1459
    %v1461 = vmul.f32 %v1456, %v1460
    %1462 = vmatprep.subr.mxu0 %v387
    %1463 = vmatpush1.msra.mxu0 %v386
    %1464 = vmatprep.subr.mxu0 %v395
    %1465 = vmatpush1.msra.mxu0 %v394
    %1466 = vmatprep.subr.mxu0 %v403
    %1467 = vmatpush1.msra.mxu0 %v402
    %1468 = vmatprep.subr.mxu0 %v411
    %1469 = vmatpush1.msra.mxu0 %v410
    %1470 = vmatprep.subr.mxu0 %v419
    %1471 = vmatpush1.msra.mxu0 %v418
    %1472 = vmatprep.subr.mxu0 %v427
    %1473 = vmatpush1.msra.mxu0 %v426
    %1474 = vmatprep.subr.mxu0 %v435
    %1475 = vmatpush1.msra.mxu0 %v434
    %1476 = vmatprep.subr.mxu0 %v443
    %1477 = vmatpush1.msra.mxu0 %v442
    %1478 = vmatprep.subr.mxu0 %v451
    %1479 = vmatpush1.msra.mxu0 %v450
    %1480 = vmatprep.subr.mxu0 %v459
    %1481 = vmatpush1.msra.mxu0 %v458
    %1482 = vmatprep.subr.mxu0 %v467
    %1483 = vmatpush1.msra.mxu0 %v466
    %1484 = vmatprep.subr.mxu0 %v475
    %1485 = vmatpush1.msra.mxu0 %v474
    %1486 = vmatprep.subr.mxu0 %v483
    %1487 = vmatpush1.msra.mxu0 %v482
    %1488 = vmatprep.subr.mxu0 %v491
    %1489 = vmatpush1.msra.mxu0 %v490
    %1490 = vmatprep.subr.mxu0 %v499
    %1491 = vmatpush1.msra.mxu0 %v498
    %1492 = vmatprep.subr.mxu0 %v507
    %1493 = vmatpush1.msra.mxu0 %v506
    %1494 = vmatprep.subr.mxu0 %v515
    %1495 = vmatpush1.msra.mxu0 %v514
    %1496 = vmatprep.subr.mxu0 %v523
    %1497 = vmatpush1.msra.mxu0 %v522
    %1498 = vmatprep.subr.mxu0 %v531
    %1499 = vmatpush1.msra.mxu0 %v530
    %1500 = vmatprep.subr.mxu0 %v539
    %1501 = vmatpush1.msra.mxu0 %v538
    %1502 = vmatprep.subr.mxu0 %v547
    %1503 = vmatpush1.msra.mxu0 %v546
    %1504 = vmatprep.subr.mxu0 %v555
    %1505 = vmatpush1.msra.mxu0 %v554
    %1506 = vmatprep.subr.mxu0 %v563
    %1507 = vmatpush1.msra.mxu0 %v562
    %1508 = vmatprep.subr.mxu0 %v571
    %1509 = vmatpush1.msra.mxu0 %v570
    %1510 = vmatprep.subr.mxu0 %v579
    %1511 = vmatpush1.msra.mxu0 %v578
    %1512 = vmatprep.subr.mxu0 %v587
    %1513 = vmatpush1.msra.mxu0 %v586
    %1514 = vmatprep.subr.mxu0 %v595
    %1515 = vmatpush1.msra.mxu0 %v594
    %1516 = vmatprep.subr.mxu0 %v603
    %1517 = vmatpush1.msra.mxu0 %v602
    %1518 = vmatprep.subr.mxu0 %v611
    %1519 = vmatpush1.msra.mxu0 %v610
    %1520 = vmatprep.subr.mxu0 %v619
    %1521 = vmatpush1.msra.mxu0 %v618
    %1522 = vmatprep.subr.mxu0 %v627
    %1523 = vmatpush1.msra.mxu0 %v626
    %1524 = vmatprep.subr.mxu0 %v635
    %1525 = vmatpush1.msra.mxu0 %v634
    %1526 = vmatprep.mubr.f32.mxu0 %v1439
    %1527 = vmatmul.mubr.f32.gmra.mrb[0].mxu0 %v1461
    %v1528 = vpop.f32.mrb[0].mxu0
    %v1529 = vadd.f32 0.0, %v1528
    %v1530 = vpop.f32.mrb[0].mxu0
    %v1531 = vadd.f32 0.0, %v1530
    %1532 = vdwg.mxu0
    %1533 = vmatprep.subr.mxu0 %v389
    %1534 = vmatpush1.msra.mxu0 %v388
    %1535 = vmatprep.subr.mxu0 %v397
    %1536 = vmatpush1.msra.mxu0 %v396
    %1537 = vmatprep.subr.mxu0 %v405
    %1538 = vmatpush1.msra.mxu0 %v404
    %1539 = vmatprep.subr.mxu0 %v413
    %1540 = vmatpush1.msra.mxu0 %v412
    %1541 = vmatprep.subr.mxu0 %v421
    %1542 = vmatpush1.msra.mxu0 %v420
    %1543 = vmatprep.subr.mxu0 %v429
    %1544 = vmatpush1.msra.mxu0 %v428
    %1545 = vmatprep.subr.mxu0 %v437
    %1546 = vmatpush1.msra.mxu0 %v436
    %1547 = vmatprep.subr.mxu0 %v445
    %1548 = vmatpush1.msra.mxu0 %v444
    %1549 = vmatprep.subr.mxu0 %v453
    %1550 = vmatpush1.msra.mxu0 %v452
    %1551 = vmatprep.subr.mxu0 %v461
    %1552 = vmatpush1.msra.mxu0 %v460
    %1553 = vmatprep.subr.mxu0 %v469
    %1554 = vmatpush1.msra.mxu0 %v468
    %1555 = vmatprep.subr.mxu0 %v477
    %1556 = vmatpush1.msra.mxu0 %v476
    %1557 = vmatprep.subr.mxu0 %v485
    %1558 = vmatpush1.msra.mxu0 %v484
    %1559 = vmatprep.subr.mxu0 %v493
    %1560 = vmatpush1.msra.mxu0 %v492
    %1561 = vmatprep.subr.mxu0 %v501
    %1562 = vmatpush1.msra.mxu0 %v500
    %1563 = vmatprep.subr.mxu0 %v509
    %1564 = vmatpush1.msra.mxu0 %v508
    %1565 = vmatprep.subr.mxu0 %v517
    %1566 = vmatpush1.msra.mxu0 %v516
    %1567 = vmatprep.subr.mxu0 %v525
    %1568 = vmatpush1.msra.mxu0 %v524
    %1569 = vmatprep.subr.mxu0 %v533
    %1570 = vmatpush1.msra.mxu0 %v532
    %1571 = vmatprep.subr.mxu0 %v541
    %1572 = vmatpush1.msra.mxu0 %v540
    %1573 = vmatprep.subr.mxu0 %v549
    %1574 = vmatpush1.msra.mxu0 %v548
    %1575 = vmatprep.subr.mxu0 %v557
    %1576 = vmatpush1.msra.mxu0 %v556
    %1577 = vmatprep.subr.mxu0 %v565
    %1578 = vmatpush1.msra.mxu0 %v564
    %1579 = vmatprep.subr.mxu0 %v573
    %1580 = vmatpush1.msra.mxu0 %v572
    %1581 = vmatprep.subr.mxu0 %v581
    %1582 = vmatpush1.msra.mxu0 %v580
    %1583 = vmatprep.subr.mxu0 %v589
    %1584 = vmatpush1.msra.mxu0 %v588
    %1585 = vmatprep.subr.mxu0 %v597
    %1586 = vmatpush1.msra.mxu0 %v596
    %1587 = vmatprep.subr.mxu0 %v605
    %1588 = vmatpush1.msra.mxu0 %v604
    %1589 = vmatprep.subr.mxu0 %v613
    %1590 = vmatpush1.msra.mxu0 %v612
    %1591 = vmatprep.subr.mxu0 %v621
    %1592 = vmatpush1.msra.mxu0 %v620
    %1593 = vmatprep.subr.mxu0 %v629
    %1594 = vmatpush1.msra.mxu0 %v628
    %1595 = vmatprep.subr.mxu0 %v637
    %1596 = vmatpush1.msra.mxu0 %v636
    %1597 = vmatprep.mubr.f32.mxu0 %v1439
    %1598 = vmatmul.mubr.f32.gmra.mrb[0].mxu0 %v1461
    %v1599 = vpop.f32.mrb[0].mxu0
    %v1600 = vadd.f32 0.0, %v1599
    %v1601 = vpop.f32.mrb[0].mxu0
    %v1602 = vadd.f32 0.0, %v1601
    %1603 = vdwg.mxu0
    %1604 = vmatprep.subr.mxu0 %v391
    %1605 = vmatpush1.msra.mxu0 %v390
    %1606 = vmatprep.subr.mxu0 %v399
    %1607 = vmatpush1.msra.mxu0 %v398
    %1608 = vmatprep.subr.mxu0 %v407
    %1609 = vmatpush1.msra.mxu0 %v406
    %1610 = vmatprep.subr.mxu0 %v415
    %1611 = vmatpush1.msra.mxu0 %v414
    %1612 = vmatprep.subr.mxu0 %v423
    %1613 = vmatpush1.msra.mxu0 %v422
    %1614 = vmatprep.subr.mxu0 %v431
    %1615 = vmatpush1.msra.mxu0 %v430
    %1616 = vmatprep.subr.mxu0 %v439
    %1617 = vmatpush1.msra.mxu0 %v438
    %1618 = vmatprep.subr.mxu0 %v447
    %1619 = vmatpush1.msra.mxu0 %v446
    %1620 = vmatprep.subr.mxu0 %v455
    %1621 = vmatpush1.msra.mxu0 %v454
    %1622 = vmatprep.subr.mxu0 %v463
    %1623 = vmatpush1.msra.mxu0 %v462
    %1624 = vmatprep.subr.mxu0 %v471
    %1625 = vmatpush1.msra.mxu0 %v470
    %1626 = vmatprep.subr.mxu0 %v479
    %1627 = vmatpush1.msra.mxu0 %v478
    %1628 = vmatprep.subr.mxu0 %v487
    %1629 = vmatpush1.msra.mxu0 %v486
    %1630 = vmatprep.subr.mxu0 %v495
    %1631 = vmatpush1.msra.mxu0 %v494
    %1632 = vmatprep.subr.mxu0 %v503
    %1633 = vmatpush1.msra.mxu0 %v502
    %1634 = vmatprep.subr.mxu0 %v511
    %1635 = vmatpush1.msra.mxu0 %v510
    %1636 = vmatprep.subr.mxu0 %v519
    %1637 = vmatpush1.msra.mxu0 %v518
    %1638 = vmatprep.subr.mxu0 %v527
    %1639 = vmatpush1.msra.mxu0 %v526
    %1640 = vmatprep.subr.mxu0 %v535
    %1641 = vmatpush1.msra.mxu0 %v534
    %1642 = vmatprep.subr.mxu0 %v543
    %1643 = vmatpush1.msra.mxu0 %v542
    %1644 = vmatprep.subr.mxu0 %v551
    %1645 = vmatpush1.msra.mxu0 %v550
    %1646 = vmatprep.subr.mxu0 %v559
    %1647 = vmatpush1.msra.mxu0 %v558
    %1648 = vmatprep.subr.mxu0 %v567
    %1649 = vmatpush1.msra.mxu0 %v566
    %1650 = vmatprep.subr.mxu0 %v575
    %1651 = vmatpush1.msra.mxu0 %v574
    %1652 = vmatprep.subr.mxu0 %v583
    %1653 = vmatpush1.msra.mxu0 %v582
    %1654 = vmatprep.subr.mxu0 %v591
    %1655 = vmatpush1.msra.mxu0 %v590
    %1656 = vmatprep.subr.mxu0 %v599
    %1657 = vmatpush1.msra.mxu0 %v598
    %1658 = vmatprep.subr.mxu0 %v607
    %1659 = vmatpush1.msra.mxu0 %v606
    %1660 = vmatprep.subr.mxu0 %v615
    %1661 = vmatpush1.msra.mxu0 %v614
    %1662 = vmatprep.subr.mxu0 %v623
    %1663 = vmatpush1.msra.mxu0 %v622
    %1664 = vmatprep.subr.mxu0 %v631
    %1665 = vmatpush1.msra.mxu0 %v630
    %1666 = vmatprep.subr.mxu0 %v639
    %1667 = vmatpush1.msra.mxu0 %v638
    %1668 = vmatprep.mubr.f32.mxu0 %v1439
    %1669 = vmatmul.mubr.f32.gmra.mrb[0].mxu0 %v1461
    %v1670 = vpop.f32.mrb[0].mxu0
    %v1671 = vadd.f32 0.0, %v1670
    %v1672 = vpop.f32.mrb[0].mxu0
    %v1673 = vadd.f32 0.0, %v1672
    %1674 = vdwg.mxu0
    %1675 = vmatprep.subr.mxu0 %v393
    %1676 = vmatpush1.msra.mxu0 %v392
    %1677 = vmatprep.subr.mxu0 %v401
    %1678 = vmatpush1.msra.mxu0 %v400
    %1679 = vmatprep.subr.mxu0 %v409
    %1680 = vmatpush1.msra.mxu0 %v408
    %1681 = vmatprep.subr.mxu0 %v417
    %1682 = vmatpush1.msra.mxu0 %v416
    %1683 = vmatprep.subr.mxu0 %v425
    %1684 = vmatpush1.msra.mxu0 %v424
    %1685 = vmatprep.subr.mxu0 %v433
    %1686 = vmatpush1.msra.mxu0 %v432
    %1687 = vmatprep.subr.mxu0 %v441
    %1688 = vmatpush1.msra.mxu0 %v440
    %1689 = vmatprep.subr.mxu0 %v449
    %1690 = vmatpush1.msra.mxu0 %v448
    %1691 = vmatprep.subr.mxu0 %v457
    %1692 = vmatpush1.msra.mxu0 %v456
    %1693 = vmatprep.subr.mxu0 %v465
    %1694 = vmatpush1.msra.mxu0 %v464
    %1695 = vmatprep.subr.mxu0 %v473
    %1696 = vmatpush1.msra.mxu0 %v472
    %1697 = vmatprep.subr.mxu0 %v481
    %1698 = vmatpush1.msra.mxu0 %v480
    %1699 = vmatprep.subr.mxu0 %v489
    %1700 = vmatpush1.msra.mxu0 %v488
    %1701 = vmatprep.subr.mxu0 %v497
    %1702 = vmatpush1.msra.mxu0 %v496
    %1703 = vmatprep.subr.mxu0 %v505
    %1704 = vmatpush1.msra.mxu0 %v504
    %1705 = vmatprep.subr.mxu0 %v513
    %1706 = vmatpush1.msra.mxu0 %v512
    %1707 = vmatprep.subr.mxu0 %v521
    %1708 = vmatpush1.msra.mxu0 %v520
    %1709 = vmatprep.subr.mxu0 %v529
    %1710 = vmatpush1.msra.mxu0 %v528
    %1711 = vmatprep.subr.mxu0 %v537
    %1712 = vmatpush1.msra.mxu0 %v536
    %1713 = vmatprep.subr.mxu0 %v545
    %1714 = vmatpush1.msra.mxu0 %v544
    %1715 = vmatprep.subr.mxu0 %v553
    %1716 = vmatpush1.msra.mxu0 %v552
    %1717 = vmatprep.subr.mxu0 %v561
    %1718 = vmatpush1.msra.mxu0 %v560
    %1719 = vmatprep.subr.mxu0 %v569
    %1720 = vmatpush1.msra.mxu0 %v568
    %1721 = vmatprep.subr.mxu0 %v577
    %1722 = vmatpush1.msra.mxu0 %v576
    %1723 = vmatprep.subr.mxu0 %v585
    %1724 = vmatpush1.msra.mxu0 %v584
    %1725 = vmatprep.subr.mxu0 %v593
    %1726 = vmatpush1.msra.mxu0 %v592
    %1727 = vmatprep.subr.mxu0 %v601
    %1728 = vmatpush1.msra.mxu0 %v600
    %1729 = vmatprep.subr.mxu0 %v609
    %1730 = vmatpush1.msra.mxu0 %v608
    %1731 = vmatprep.subr.mxu0 %v617
    %1732 = vmatpush1.msra.mxu0 %v616
    %1733 = vmatprep.subr.mxu0 %v625
    %1734 = vmatpush1.msra.mxu0 %v624
    %1735 = vmatprep.subr.mxu0 %v633
    %1736 = vmatpush1.msra.mxu0 %v632
    %1737 = vmatprep.subr.mxu0 %v641
    %1738 = vmatpush1.msra.mxu0 %v640
    %1739 = vmatprep.mubr.f32.mxu0 %v1439
    %1740 = vmatmul.mubr.f32.gmra.mrb[0].mxu0 %v1461
    %v1741 = vpop.f32.mrb[0].mxu0
    %v1742 = vadd.f32 0.0, %v1741
    %v1743 = vpop.f32.mrb[0].mxu0
    %v1744 = vadd.f32 0.0, %v1743
    %1745 = vdwg.mxu0
    %v1746 = vadd.f32 %v1671, %v369
    %v1747 = vadd.f32 %v1673, %v373
    %v1748 = vadd.f32 %v1742, %v377
    %v1749 = vadd.f32 %v1744, %v381
    %v1750 = vmul.f32 %v1746, 0.5
    %v1751 = vtanh.pop %v1750
    %v1752 = vmul.f32 %v1751, 0.5
    %v1753 = vadd.f32 %v1752, 0.5
    %v1754 = vmul.f32 %v1747, 0.5
    %v1755 = vtanh.pop %v1754
    %v1756 = vmul.f32 %v1755, 0.5
    %v1757 = vadd.f32 %v1756, 0.5
    %v1758 = vtanh.pop %v1748
    %v1759 = vmul.f32 %v1749, 0.5
    %v1760 = vtanh.pop %v1759
    %v1761 = vmul.f32 %v1760, 0.5
    %v1762 = vadd.f32 %v1761, 0.5
    %v1763 = vmul.f32 %v1757, %v1437
    %v1764 = vmul.f32 %v1753, %v1758
    %v1765 = vadd.f32 %v1763, %v1764
    %v1766 = vtanh.pop %v1765
    %v1767 = vmul.f32 %v1762, %v1766
    %v1768 = vadd.f32 %v223, %v1529
    %v1769 = vadd.f32 %v225, %v1531
    %v1770 = vadd.f32 %v336, %v1600
    %v1771 = vadd.f32 %v338, %v1602
    %v1772 = vmul.f32 %v1768, 0.5
    %v1773 = vtanh.pop %v1772
    %v1774 = vmul.f32 %v1773, 0.5
    %v1775 = vadd.f32 %v1774, 0.5
    %v1776 = vmul.f32 %v1769, 0.5
    %v1777 = vtanh.pop %v1776
    %v1778 = vmul.f32 %v1777, 0.5
    %v1779 = vadd.f32 %v1778, 0.5
    %v1780 = vtanh.pop %v1770
    %v1781 = vmul.f32 %v1771, 0.5
    %v1782 = vtanh.pop %v1781
    %v1783 = vmul.f32 %v1782, 0.5
    %v1784 = vadd.f32 %v1783, 0.5
    %v1785 = vmul.f32 %v1779, %v1459
    %v1786 = vmul.f32 %v1775, %v1780
    %v1787 = vadd.f32 %v1785, %v1786
    %v1788 = vtanh.pop %v1787
    %v1789 = vmul.f32 %v1784, %v1788
    %1790 = vmatprep.subr.mxu0 %v387
    %1791 = vmatpush1.msra.mxu0 %v386
    %1792 = vmatprep.subr.mxu0 %v395
    %1793 = vmatpush1.msra.mxu0 %v394
    %1794 = vmatprep.subr.mxu0 %v403
    %1795 = vmatpush1.msra.mxu0 %v402
    %1796 = vmatprep.subr.mxu0 %v411
    %1797 = vmatpush1.msra.mxu0 %v410
    %1798 = vmatprep.subr.mxu0 %v419
    %1799 = vmatpush1.msra.mxu0 %v418
    %1800 = vmatprep.subr.mxu0 %v427
    %1801 = vmatpush1.msra.mxu0 %v426
    %1802 = vmatprep.subr.mxu0 %v435
    %1803 = vmatpush1.msra.mxu0 %v434
    %1804 = vmatprep.subr.mxu0 %v443
    %1805 = vmatpush1.msra.mxu0 %v442
    %1806 = vmatprep.subr.mxu0 %v451
    %1807 = vmatpush1.msra.mxu0 %v450
    %1808 = vmatprep.subr.mxu0 %v459
    %1809 = vmatpush1.msra.mxu0 %v458
    %1810 = vmatprep.subr.mxu0 %v467
    %1811 = vmatpush1.msra.mxu0 %v466
    %1812 = vmatprep.subr.mxu0 %v475
    %1813 = vmatpush1.msra.mxu0 %v474
    %1814 = vmatprep.subr.mxu0 %v483
    %1815 = vmatpush1.msra.mxu0 %v482
    %1816 = vmatprep.subr.mxu0 %v491
    %1817 = vmatpush1.msra.mxu0 %v490
    %1818 = vmatprep.subr.mxu0 %v499
    %1819 = vmatpush1.msra.mxu0 %v498
    %1820 = vmatprep.subr.mxu0 %v507
    %1821 = vmatpush1.msra.mxu0 %v506
    %1822 = vmatprep.subr.mxu0 %v515
    %1823 = vmatpush1.msra.mxu0 %v514
    %1824 = vmatprep.subr.mxu0 %v523
    %1825 = vmatpush1.msra.mxu0 %v522
    %1826 = vmatprep.subr.mxu0 %v531
    %1827 = vmatpush1.msra.mxu0 %v530
    %1828 = vmatprep.subr.mxu0 %v539
    %1829 = vmatpush1.msra.mxu0 %v538
    %1830 = vmatprep.subr.mxu0 %v547
    %1831 = vmatpush1.msra.mxu0 %v546
    %1832 = vmatprep.subr.mxu0 %v555
    %1833 = vmatpush1.msra.mxu0 %v554
    %1834 = vmatprep.subr.mxu0 %v563
    %1835 = vmatpush1.msra.mxu0 %v562
    %1836 = vmatprep.subr.mxu0 %v571
    %1837 = vmatpush1.msra.mxu0 %v570
    %1838 = vmatprep.subr.mxu0 %v579
    %1839 = vmatpush1.msra.mxu0 %v578
    %1840 = vmatprep.subr.mxu0 %v587
    %1841 = vmatpush1.msra.mxu0 %v586
    %1842 = vmatprep.subr.mxu0 %v595
    %1843 = vmatpush1.msra.mxu0 %v594
    %1844 = vmatprep.subr.mxu0 %v603
    %1845 = vmatpush1.msra.mxu0 %v602
    %1846 = vmatprep.subr.mxu0 %v611
    %1847 = vmatpush1.msra.mxu0 %v610
    %1848 = vmatprep.subr.mxu0 %v619
    %1849 = vmatpush1.msra.mxu0 %v618
    %1850 = vmatprep.subr.mxu0 %v627
    %1851 = vmatpush1.msra.mxu0 %v626
    %1852 = vmatprep.subr.mxu0 %v635
    %1853 = vmatpush1.msra.mxu0 %v634
    %1854 = vmatprep.mubr.f32.mxu0 %v1767
    %1855 = vmatmul.mubr.f32.gmra.mrb[0].mxu0 %v1789
    %v1856 = vpop.f32.mrb[0].mxu0
    %v1857 = vadd.f32 0.0, %v1856
    %v1858 = vpop.f32.mrb[0].mxu0
    %v1859 = vadd.f32 0.0, %v1858
    %1860 = vdwg.mxu0
    %1861 = vmatprep.subr.mxu0 %v389
    %1862 = vmatpush1.msra.mxu0 %v388
    %1863 = vmatprep.subr.mxu0 %v397
    %1864 = vmatpush1.msra.mxu0 %v396
    %1865 = vmatprep.subr.mxu0 %v405
    %1866 = vmatpush1.msra.mxu0 %v404
    %1867 = vmatprep.subr.mxu0 %v413
    %1868 = vmatpush1.msra.mxu0 %v412
    %1869 = vmatprep.subr.mxu0 %v421
    %1870 = vmatpush1.msra.mxu0 %v420
    %1871 = vmatprep.subr.mxu0 %v429
    %1872 = vmatpush1.msra.mxu0 %v428
    %1873 = vmatprep.subr.mxu0 %v437
    %1874 = vmatpush1.msra.mxu0 %v436
    %1875 = vmatprep.subr.mxu0 %v445
    %1876 = vmatpush1.msra.mxu0 %v444
    %1877 = vmatprep.subr.mxu0 %v453
    %1878 = vmatpush1.msra.mxu0 %v452
    %1879 = vmatprep.subr.mxu0 %v461
    %1880 = vmatpush1.msra.mxu0 %v460
    %1881 = vmatprep.subr.mxu0 %v469
    %1882 = vmatpush1.msra.mxu0 %v468
    %1883 = vmatprep.subr.mxu0 %v477
    %1884 = vmatpush1.msra.mxu0 %v476
    %1885 = vmatprep.subr.mxu0 %v485
    %1886 = vmatpush1.msra.mxu0 %v484
    %1887 = vmatprep.subr.mxu0 %v493
    %1888 = vmatpush1.msra.mxu0 %v492
    %1889 = vmatprep.subr.mxu0 %v501
    %1890 = vmatpush1.msra.mxu0 %v500
    %1891 = vmatprep.subr.mxu0 %v509
    %1892 = vmatpush1.msra.mxu0 %v508
    %1893 = vmatprep.subr.mxu0 %v517
    %1894 = vmatpush1.msra.mxu0 %v516
    %1895 = vmatprep.subr.mxu0 %v525
    %1896 = vmatpush1.msra.mxu0 %v524
    %1897 = vmatprep.subr.mxu0 %v533
    %1898 = vmatpush1.msra.mxu0 %v532
    %1899 = vmatprep.subr.mxu0 %v541
    %1900 = vmatpush1.msra.mxu0 %v540
    %1901 = vmatprep.subr.mxu0 %v549
    %1902 = vmatpush1.msra.mxu0 %v548
    %1903 = vmatprep.subr.mxu0 %v557
    %1904 = vmatpush1.msra.mxu0 %v556
    %1905 = vmatprep.subr.mxu0 %v565
    %1906 = vmatpush1.msra.mxu0 %v564
    %1907 = vmatprep.subr.mxu0 %v573
    %1908 = vmatpush1.msra.mxu0 %v572
    %1909 = vmatprep.subr.mxu0 %v581
    %1910 = vmatpush1.msra.mxu0 %v580
    %1911 = vmatprep.subr.mxu0 %v589
    %1912 = vmatpush1.msra.mxu0 %v588
    %1913 = vmatprep.subr.mxu0 %v597
    %1914 = vmatpush1.msra.mxu0 %v596
    %1915 = vmatprep.subr.mxu0 %v605
    %1916 = vmatpush1.msra.mxu0 %v604
    %1917 = vmatprep.subr.mxu0 %v613
    %1918 = vmatpush1.msra.mxu0 %v612
    %1919 = vmatprep.subr.mxu0 %v621
    %1920 = vmatpush1.msra.mxu0 %v620
    %1921 = vmatprep.subr.mxu0 %v629
    %1922 = vmatpush1.msra.mxu0 %v628
    %1923 = vmatprep.subr.mxu0 %v637
    %1924 = vmatpush1.msra.mxu0 %v636
    %1925 = vmatprep.mubr.f32.mxu0 %v1767
    %1926 = vmatmul.mubr.f32.gmra.mrb[0].mxu0 %v1789
    %v1927 = vpop.f32.mrb[0].mxu0
    %v1928 = vadd.f32 0.0, %v1927
    %v1929 = vpop.f32.mrb[0].mxu0
    %v1930 = vadd.f32 0.0, %v1929
    %1931 = vdwg.mxu0
    %1932 = vmatprep.subr.mxu0 %v391
    %1933 = vmatpush1.msra.mxu0 %v390
    %1934 = vmatprep.subr.mxu0 %v399
    %1935 = vmatpush1.msra.mxu0 %v398
    %1936 = vmatprep.subr.mxu0 %v407
    %1937 = vmatpush1.msra.mxu0 %v406
    %1938 = vmatprep.subr.mxu0 %v415
    %1939 = vmatpush1.msra.mxu0 %v414
    %1940 = vmatprep.subr.mxu0 %v423
    %1941 = vmatpush1.msra.mxu0 %v422
    %1942 = vmatprep.subr.mxu0 %v431
    %1943 = vmatpush1.msra.mxu0 %v430
    %1944 = vmatprep.subr.mxu0 %v439
    %1945 = vmatpush1.msra.mxu0 %v438
    %1946 = vmatprep.subr.mxu0 %v447
    %1947 = vmatpush1.msra.mxu0 %v446
    %1948 = vmatprep.subr.mxu0 %v455
    %1949 = vmatpush1.msra.mxu0 %v454
    %1950 = vmatprep.subr.mxu0 %v463
    %1951 = vmatpush1.msra.mxu0 %v462
    %1952 = vmatprep.subr.mxu0 %v471
    %1953 = vmatpush1.msra.mxu0 %v470
    %1954 = vmatprep.subr.mxu0 %v479
    %1955 = vmatpush1.msra.mxu0 %v478
    %1956 = vmatprep.subr.mxu0 %v487
    %1957 = vmatpush1.msra.mxu0 %v486
    %1958 = vmatprep.subr.mxu0 %v495
    %1959 = vmatpush1.msra.mxu0 %v494
    %1960 = vmatprep.subr.mxu0 %v503
    %1961 = vmatpush1.msra.mxu0 %v502
    %1962 = vmatprep.subr.mxu0 %v511
    %1963 = vmatpush1.msra.mxu0 %v510
    %1964 = vmatprep.subr.mxu0 %v519
    %1965 = vmatpush1.msra.mxu0 %v518
    %1966 = vmatprep.subr.mxu0 %v527
    %1967 = vmatpush1.msra.mxu0 %v526
    %1968 = vmatprep.subr.mxu0 %v535
    %1969 = vmatpush1.msra.mxu0 %v534
    %1970 = vmatprep.subr.mxu0 %v543
    %1971 = vmatpush1.msra.mxu0 %v542
    %1972 = vmatprep.subr.mxu0 %v551
    %1973 = vmatpush1.msra.mxu0 %v550
    %1974 = vmatprep.subr.mxu0 %v559
    %1975 = vmatpush1.msra.mxu0 %v558
    %1976 = vmatprep.subr.mxu0 %v567
    %1977 = vmatpush1.msra.mxu0 %v566
    %1978 = vmatprep.subr.mxu0 %v575
    %1979 = vmatpush1.msra.mxu0 %v574
    %1980 = vmatprep.subr.mxu0 %v583
    %1981 = vmatpush1.msra.mxu0 %v582
    %1982 = vmatprep.subr.mxu0 %v591
    %1983 = vmatpush1.msra.mxu0 %v590
    %1984 = vmatprep.subr.mxu0 %v599
    %1985 = vmatpush1.msra.mxu0 %v598
    %1986 = vmatprep.subr.mxu0 %v607
    %1987 = vmatpush1.msra.mxu0 %v606
    %1988 = vmatprep.subr.mxu0 %v615
    %1989 = vmatpush1.msra.mxu0 %v614
    %1990 = vmatprep.subr.mxu0 %v623
    %1991 = vmatpush1.msra.mxu0 %v622
    %1992 = vmatprep.subr.mxu0 %v631
    %1993 = vmatpush1.msra.mxu0 %v630
    %1994 = vmatprep.subr.mxu0 %v639
    %1995 = vmatpush1.msra.mxu0 %v638
    %1996 = vmatprep.mubr.f32.mxu0 %v1767
    %1997 = vmatmul.mubr.f32.gmra.mrb[0].mxu0 %v1789
    %v1998 = vpop.f32.mrb[0].mxu0
    %v1999 = vadd.f32 0.0, %v1998
    %v2000 = vpop.f32.mrb[0].mxu0
    %v2001 = vadd.f32 0.0, %v2000
    %2002 = vdwg.mxu0
    %2003 = vmatprep.subr.mxu0 %v393
    %2004 = vmatpush1.msra.mxu0 %v392
    %2005 = vmatprep.subr.mxu0 %v401
    %2006 = vmatpush1.msra.mxu0 %v400
    %2007 = vmatprep.subr.mxu0 %v409
    %2008 = vmatpush1.msra.mxu0 %v408
    %2009 = vmatprep.subr.mxu0 %v417
    %2010 = vmatpush1.msra.mxu0 %v416
    %2011 = vmatprep.subr.mxu0 %v425
    %2012 = vmatpush1.msra.mxu0 %v424
    %2013 = vmatprep.subr.mxu0 %v433
    %2014 = vmatpush1.msra.mxu0 %v432
    %2015 = vmatprep.subr.mxu0 %v441
    %2016 = vmatpush1.msra.mxu0 %v440
    %2017 = vmatprep.subr.mxu0 %v449
    %2018 = vmatpush1.msra.mxu0 %v448
    %2019 = vmatprep.subr.mxu0 %v457
    %2020 = vmatpush1.msra.mxu0 %v456
    %2021 = vmatprep.subr.mxu0 %v465
    %2022 = vmatpush1.msra.mxu0 %v464
    %2023 = vmatprep.subr.mxu0 %v473
    %2024 = vmatpush1.msra.mxu0 %v472
    %2025 = vmatprep.subr.mxu0 %v481
    %2026 = vmatpush1.msra.mxu0 %v480
    %2027 = vmatprep.subr.mxu0 %v489
    %2028 = vmatpush1.msra.mxu0 %v488
    %2029 = vmatprep.subr.mxu0 %v497
    %2030 = vmatpush1.msra.mxu0 %v496
    %2031 = vmatprep.subr.mxu0 %v505
    %2032 = vmatpush1.msra.mxu0 %v504
    %2033 = vmatprep.subr.mxu0 %v513
    %2034 = vmatpush1.msra.mxu0 %v512
    %2035 = vmatprep.subr.mxu0 %v521
    %2036 = vmatpush1.msra.mxu0 %v520
    %2037 = vmatprep.subr.mxu0 %v529
    %2038 = vmatpush1.msra.mxu0 %v528
    %2039 = vmatprep.subr.mxu0 %v537
    %2040 = vmatpush1.msra.mxu0 %v536
    %2041 = vmatprep.subr.mxu0 %v545
    %2042 = vmatpush1.msra.mxu0 %v544
    %2043 = vmatprep.subr.mxu0 %v553
    %2044 = vmatpush1.msra.mxu0 %v552
    %2045 = vmatprep.subr.mxu0 %v561
    %2046 = vmatpush1.msra.mxu0 %v560
    %2047 = vmatprep.subr.mxu0 %v569
    %2048 = vmatpush1.msra.mxu0 %v568
    %2049 = vmatprep.subr.mxu0 %v577
    %2050 = vmatpush1.msra.mxu0 %v576
    %2051 = vmatprep.subr.mxu0 %v585
    %2052 = vmatpush1.msra.mxu0 %v584
    %2053 = vmatprep.subr.mxu0 %v593
    %2054 = vmatpush1.msra.mxu0 %v592
    %2055 = vmatprep.subr.mxu0 %v601
    %2056 = vmatpush1.msra.mxu0 %v600
    %2057 = vmatprep.subr.mxu0 %v609
    %2058 = vmatpush1.msra.mxu0 %v608
    %2059 = vmatprep.subr.mxu0 %v617
    %2060 = vmatpush1.msra.mxu0 %v616
    %2061 = vmatprep.subr.mxu0 %v625
    %2062 = vmatpush1.msra.mxu0 %v624
    %2063 = vmatprep.subr.mxu0 %v633
    %2064 = vmatpush1.msra.mxu0 %v632
    %2065 = vmatprep.subr.mxu0 %v641
    %2066 = vmatpush1.msra.mxu0 %v640
    %2067 = vmatprep.mubr.f32.mxu0 %v1767
    %2068 = vmatmul.mubr.f32.gmra.mrb[0].mxu0 %v1789
    %v2069 = vpop.f32.mrb[0].mxu0
    %v2070 = vadd.f32 0.0, %v2069
    %v2071 = vpop.f32.mrb[0].mxu0
    %v2072 = vadd.f32 0.0, %v2071
    %2073 = vdwg.mxu0
    %v2074 = vadd.f32 %v1999, %v369
    %v2075 = vadd.f32 %v2001, %v373
    %v2076 = vadd.f32 %v2070, %v377
    %v2077 = vadd.f32 %v2072, %v381
    %v2078 = vmul.f32 %v2074, 0.5
    %v2079 = vtanh.pop %v2078
    %v2080 = vmul.f32 %v2079, 0.5
    %v2081 = vadd.f32 %v2080, 0.5
    %v2082 = vmul.f32 %v2075, 0.5
    %v2083 = vtanh.pop %v2082
    %v2084 = vmul.f32 %v2083, 0.5
    %v2085 = vadd.f32 %v2084, 0.5
    %v2086 = vtanh.pop %v2076
    %v2087 = vmul.f32 %v2077, 0.5
    %v2088 = vtanh.pop %v2087
    %v2089 = vmul.f32 %v2088, 0.5
    %v2090 = vadd.f32 %v2089, 0.5
    %v2091 = vmul.f32 %v2085, %v1765
    %v2092 = vmul.f32 %v2081, %v2086
    %v2093 = vadd.f32 %v2091, %v2092
    %v2094 = vtanh.pop %v2093
    %v2095 = vmul.f32 %v2090, %v2094
    %v2096 = vadd.f32 %v229, %v1857
    %v2097 = vadd.f32 %v231, %v1859
    %v2098 = vadd.f32 %v342, %v1928
    %v2099 = vadd.f32 %v344, %v1930
    %v2100 = vmul.f32 %v2096, 0.5
    %v2101 = vtanh.pop %v2100
    %v2102 = vmul.f32 %v2101, 0.5
    %v2103 = vadd.f32 %v2102, 0.5
    %v2104 = vmul.f32 %v2097, 0.5
    %v2105 = vtanh.pop %v2104
    %v2106 = vmul.f32 %v2105, 0.5
    %v2107 = vadd.f32 %v2106, 0.5
    %v2108 = vtanh.pop %v2098
    %v2109 = vmul.f32 %v2099, 0.5
    %v2110 = vtanh.pop %v2109
    %v2111 = vmul.f32 %v2110, 0.5
    %v2112 = vadd.f32 %v2111, 0.5
    %v2113 = vmul.f32 %v2107, %v1787
    %v2114 = vmul.f32 %v2103, %v2108
    %v2115 = vadd.f32 %v2113, %v2114
    %v2116 = vtanh.pop %v2115
    %v2117 = vmul.f32 %v2112, %v2116
    %2118 = vmatprep.subr.mxu0 %v387
    %2119 = vmatpush1.msra.mxu0 %v386
    %2120 = vmatprep.subr.mxu0 %v395
    %2121 = vmatpush1.msra.mxu0 %v394
    %2122 = vmatprep.subr.mxu0 %v403
    %2123 = vmatpush1.msra.mxu0 %v402
    %2124 = vmatprep.subr.mxu0 %v411
    %2125 = vmatpush1.msra.mxu0 %v410
    %2126 = vmatprep.subr.mxu0 %v419
    %2127 = vmatpush1.msra.mxu0 %v418
    %2128 = vmatprep.subr.mxu0 %v427
    %2129 = vmatpush1.msra.mxu0 %v426
    %2130 = vmatprep.subr.mxu0 %v435
    %2131 = vmatpush1.msra.mxu0 %v434
    %2132 = vmatprep.subr.mxu0 %v443
    %2133 = vmatpush1.msra.mxu0 %v442
    %2134 = vmatprep.subr.mxu0 %v451
    %2135 = vmatpush1.msra.mxu0 %v450
    %2136 = vmatprep.subr.mxu0 %v459
    %2137 = vmatpush1.msra.mxu0 %v458
    %2138 = vmatprep.subr.mxu0 %v467
    %2139 = vmatpush1.msra.mxu0 %v466
    %2140 = vmatprep.subr.mxu0 %v475
    %2141 = vmatpush1.msra.mxu0 %v474
    %2142 = vmatprep.subr.mxu0 %v483
    %2143 = vmatpush1.msra.mxu0 %v482
    %2144 = vmatprep.subr.mxu0 %v491
    %2145 = vmatpush1.msra.mxu0 %v490
    %2146 = vmatprep.subr.mxu0 %v499
    %2147 = vmatpush1.msra.mxu0 %v498
    %2148 = vmatprep.subr.mxu0 %v507
    %2149 = vmatpush1.msra.mxu0 %v506
    %2150 = vmatprep.subr.mxu0 %v515
    %2151 = vmatpush1.msra.mxu0 %v514
    %2152 = vmatprep.subr.mxu0 %v523
    %2153 = vmatpush1.msra.mxu0 %v522
    %2154 = vmatprep.subr.mxu0 %v531
    %2155 = vmatpush1.msra.mxu0 %v530
    %2156 = vmatprep.subr.mxu0 %v539
    %2157 = vmatpush1.msra.mxu0 %v538
    %2158 = vmatprep.subr.mxu0 %v547
    %2159 = vmatpush1.msra.mxu0 %v546
    %2160 = vmatprep.subr.mxu0 %v555
    %2161 = vmatpush1.msra.mxu0 %v554
    %2162 = vmatprep.subr.mxu0 %v563
    %2163 = vmatpush1.msra.mxu0 %v562
    %2164 = vmatprep.subr.mxu0 %v571
    %2165 = vmatpush1.msra.mxu0 %v570
    %2166 = vmatprep.subr.mxu0 %v579
    %2167 = vmatpush1.msra.mxu0 %v578
    %2168 = vmatprep.subr.mxu0 %v587
    %2169 = vmatpush1.msra.mxu0 %v586
    %2170 = vmatprep.subr.mxu0 %v595
    %2171 = vmatpush1.msra.mxu0 %v594
    %2172 = vmatprep.subr.mxu0 %v603
    %2173 = vmatpush1.msra.mxu0 %v602
    %2174 = vmatprep.subr.mxu0 %v611
    %2175 = vmatpush1.msra.mxu0 %v610
    %2176 = vmatprep.subr.mxu0 %v619
    %2177 = vmatpush1.msra.mxu0 %v618
    %2178 = vmatprep.subr.mxu0 %v627
    %2179 = vmatpush1.msra.mxu0 %v626
    %2180 = vmatprep.subr.mxu0 %v635
    %2181 = vmatpush1.msra.mxu0 %v634
    %2182 = vmatprep.mubr.f32.mxu0 %v2095
    %2183 = vmatmul.mubr.f32.gmra.mrb[0].mxu0 %v2117
    %v2184 = vpop.f32.mrb[0].mxu0
    %v2185 = vadd.f32 0.0, %v2184
    %v2186 = vpop.f32.mrb[0].mxu0
    %v2187 = vadd.f32 0.0, %v2186
    %2188 = vdwg.mxu0
    %2189 = vmatprep.subr.mxu0 %v389
    %2190 = vmatpush1.msra.mxu0 %v388
    %2191 = vmatprep.subr.mxu0 %v397
    %2192 = vmatpush1.msra.mxu0 %v396
    %2193 = vmatprep.subr.mxu0 %v405
    %2194 = vmatpush1.msra.mxu0 %v404
    %2195 = vmatprep.subr.mxu0 %v413
    %2196 = vmatpush1.msra.mxu0 %v412
    %2197 = vmatprep.subr.mxu0 %v421
    %2198 = vmatpush1.msra.mxu0 %v420
    %2199 = vmatprep.subr.mxu0 %v429
    %2200 = vmatpush1.msra.mxu0 %v428
    %2201 = vmatprep.subr.mxu0 %v437
    %2202 = vmatpush1.msra.mxu0 %v436
    %2203 = vmatprep.subr.mxu0 %v445
    %2204 = vmatpush1.msra.mxu0 %v444
    %2205 = vmatprep.subr.mxu0 %v453
    %2206 = vmatpush1.msra.mxu0 %v452
    %2207 = vmatprep.subr.mxu0 %v461
    %2208 = vmatpush1.msra.mxu0 %v460
    %2209 = vmatprep.subr.mxu0 %v469
    %2210 = vmatpush1.msra.mxu0 %v468
    %2211 = vmatprep.subr.mxu0 %v477
    %2212 = vmatpush1.msra.mxu0 %v476
    %2213 = vmatprep.subr.mxu0 %v485
    %2214 = vmatpush1.msra.mxu0 %v484
    %2215 = vmatprep.subr.mxu0 %v493
    %2216 = vmatpush1.msra.mxu0 %v492
    %2217 = vmatprep.subr.mxu0 %v501
    %2218 = vmatpush1.msra.mxu0 %v500
    %2219 = vmatprep.subr.mxu0 %v509
    %2220 = vmatpush1.msra.mxu0 %v508
    %2221 = vmatprep.subr.mxu0 %v517
    %2222 = vmatpush1.msra.mxu0 %v516
    %2223 = vmatprep.subr.mxu0 %v525
    %2224 = vmatpush1.msra.mxu0 %v524
    %2225 = vmatprep.subr.mxu0 %v533
    %2226 = vmatpush1.msra.mxu0 %v532
    %2227 = vmatprep.subr.mxu0 %v541
    %2228 = vmatpush1.msra.mxu0 %v540
    %2229 = vmatprep.subr.mxu0 %v549
    %2230 = vmatpush1.msra.mxu0 %v548
    %2231 = vmatprep.subr.mxu0 %v557
    %2232 = vmatpush1.msra.mxu0 %v556
    %2233 = vmatprep.subr.mxu0 %v565
    %2234 = vmatpush1.msra.mxu0 %v564
    %2235 = vmatprep.subr.mxu0 %v573
    %2236 = vmatpush1.msra.mxu0 %v572
    %2237 = vmatprep.subr.mxu0 %v581
    %2238 = vmatpush1.msra.mxu0 %v580
    %2239 = vmatprep.subr.mxu0 %v589
    %2240 = vmatpush1.msra.mxu0 %v588
    %2241 = vmatprep.subr.mxu0 %v597
    %2242 = vmatpush1.msra.mxu0 %v596
    %2243 = vmatprep.subr.mxu0 %v605
    %2244 = vmatpush1.msra.mxu0 %v604
    %2245 = vmatprep.subr.mxu0 %v613
    %2246 = vmatpush1.msra.mxu0 %v612
    %2247 = vmatprep.subr.mxu0 %v621
    %2248 = vmatpush1.msra.mxu0 %v620
    %2249 = vmatprep.subr.mxu0 %v629
    %2250 = vmatpush1.msra.mxu0 %v628
    %2251 = vmatprep.subr.mxu0 %v637
    %2252 = vmatpush1.msra.mxu0 %v636
    %2253 = vmatprep.mubr.f32.mxu0 %v2095
    %2254 = vmatmul.mubr.f32.gmra.mrb[0].mxu0 %v2117
    %v2255 = vpop.f32.mrb[0].mxu0
    %v2256 = vadd.f32 0.0, %v2255
    %v2257 = vpop.f32.mrb[0].mxu0
    %v2258 = vadd.f32 0.0, %v2257
    %2259 = vdwg.mxu0
    %2260 = vmatprep.subr.mxu0 %v391
    %2261 = vmatpush1.msra.mxu0 %v390
    %2262 = vmatprep.subr.mxu0 %v399
    %2263 = vmatpush1.msra.mxu0 %v398
    %2264 = vmatprep.subr.mxu0 %v407
    %2265 = vmatpush1.msra.mxu0 %v406
    %2266 = vmatprep.subr.mxu0 %v415
    %2267 = vmatpush1.msra.mxu0 %v414
    %2268 = vmatprep.subr.mxu0 %v423
    %2269 = vmatpush1.msra.mxu0 %v422
    %2270 = vmatprep.subr.mxu0 %v431
    %2271 = vmatpush1.msra.mxu0 %v430
    %2272 = vmatprep.subr.mxu0 %v439
    %2273 = vmatpush1.msra.mxu0 %v438
    %2274 = vmatprep.subr.mxu0 %v447
    %2275 = vmatpush1.msra.mxu0 %v446
    %2276 = vmatprep.subr.mxu0 %v455
    %2277 = vmatpush1.msra.mxu0 %v454
    %2278 = vmatprep.subr.mxu0 %v463
    %2279 = vmatpush1.msra.mxu0 %v462
    %2280 = vmatprep.subr.mxu0 %v471
    %2281 = vmatpush1.msra.mxu0 %v470
    %2282 = vmatprep.subr.mxu0 %v479
    %2283 = vmatpush1.msra.mxu0 %v478
    %2284 = vmatprep.subr.mxu0 %v487
    %2285 = vmatpush1.msra.mxu0 %v486
    %2286 = vmatprep.subr.mxu0 %v495
    %2287 = vmatpush1.msra.mxu0 %v494
    %2288 = vmatprep.subr.mxu0 %v503
    %2289 = vmatpush1.msra.mxu0 %v502
    %2290 = vmatprep.subr.mxu0 %v511
    %2291 = vmatpush1.msra.mxu0 %v510
    %2292 = vmatprep.subr.mxu0 %v519
    %2293 = vmatpush1.msra.mxu0 %v518
    %2294 = vmatprep.subr.mxu0 %v527
    %2295 = vmatpush1.msra.mxu0 %v526
    %2296 = vmatprep.subr.mxu0 %v535
    %2297 = vmatpush1.msra.mxu0 %v534
    %2298 = vmatprep.subr.mxu0 %v543
    %2299 = vmatpush1.msra.mxu0 %v542
    %2300 = vmatprep.subr.mxu0 %v551
    %2301 = vmatpush1.msra.mxu0 %v550
    %2302 = vmatprep.subr.mxu0 %v559
    %2303 = vmatpush1.msra.mxu0 %v558
    %2304 = vmatprep.subr.mxu0 %v567
    %2305 = vmatpush1.msra.mxu0 %v566
    %2306 = vmatprep.subr.mxu0 %v575
    %2307 = vmatpush1.msra.mxu0 %v574
    %2308 = vmatprep.subr.mxu0 %v583
    %2309 = vmatpush1.msra.mxu0 %v582
    %2310 = vmatprep.subr.mxu0 %v591
    %2311 = vmatpush1.msra.mxu0 %v590
    %2312 = vmatprep.subr.mxu0 %v599
    %2313 = vmatpush1.msra.mxu0 %v598
    %2314 = vmatprep.subr.mxu0 %v607
    %2315 = vmatpush1.msra.mxu0 %v606
    %2316 = vmatprep.subr.mxu0 %v615
    %2317 = vmatpush1.msra.mxu0 %v614
    %2318 = vmatprep.subr.mxu0 %v623
    %2319 = vmatpush1.msra.mxu0 %v622
    %2320 = vmatprep.subr.mxu0 %v631
    %2321 = vmatpush1.msra.mxu0 %v630
    %2322 = vmatprep.subr.mxu0 %v639
    %2323 = vmatpush1.msra.mxu0 %v638
    %2324 = vmatprep.mubr.f32.mxu0 %v2095
    %2325 = vmatmul.mubr.f32.gmra.mrb[0].mxu0 %v2117
    %v2326 = vpop.f32.mrb[0].mxu0
    %v2327 = vadd.f32 0.0, %v2326
    %v2328 = vpop.f32.mrb[0].mxu0
    %v2329 = vadd.f32 0.0, %v2328
    %2330 = vdwg.mxu0
    %2331 = vmatprep.subr.mxu0 %v393
    %2332 = vmatpush1.msra.mxu0 %v392
    %2333 = vmatprep.subr.mxu0 %v401
    %2334 = vmatpush1.msra.mxu0 %v400
    %2335 = vmatprep.subr.mxu0 %v409
    %2336 = vmatpush1.msra.mxu0 %v408
    %2337 = vmatprep.subr.mxu0 %v417
    %2338 = vmatpush1.msra.mxu0 %v416
    %2339 = vmatprep.subr.mxu0 %v425
    %2340 = vmatpush1.msra.mxu0 %v424
    %2341 = vmatprep.subr.mxu0 %v433
    %2342 = vmatpush1.msra.mxu0 %v432
    %2343 = vmatprep.subr.mxu0 %v441
    %2344 = vmatpush1.msra.mxu0 %v440
    %2345 = vmatprep.subr.mxu0 %v449
    %2346 = vmatpush1.msra.mxu0 %v448
    %2347 = vmatprep.subr.mxu0 %v457
    %2348 = vmatpush1.msra.mxu0 %v456
    %2349 = vmatprep.subr.mxu0 %v465
    %2350 = vmatpush1.msra.mxu0 %v464
    %2351 = vmatprep.subr.mxu0 %v473
    %2352 = vmatpush1.msra.mxu0 %v472
    %2353 = vmatprep.subr.mxu0 %v481
    %2354 = vmatpush1.msra.mxu0 %v480
    %2355 = vmatprep.subr.mxu0 %v489
    %2356 = vmatpush1.msra.mxu0 %v488
    %2357 = vmatprep.subr.mxu0 %v497
    %2358 = vmatpush1.msra.mxu0 %v496
    %2359 = vmatprep.subr.mxu0 %v505
    %2360 = vmatpush1.msra.mxu0 %v504
    %2361 = vmatprep.subr.mxu0 %v513
    %2362 = vmatpush1.msra.mxu0 %v512
    %2363 = vmatprep.subr.mxu0 %v521
    %2364 = vmatpush1.msra.mxu0 %v520
    %2365 = vmatprep.subr.mxu0 %v529
    %2366 = vmatpush1.msra.mxu0 %v528
    %2367 = vmatprep.subr.mxu0 %v537
    %2368 = vmatpush1.msra.mxu0 %v536
    %2369 = vmatprep.subr.mxu0 %v545
    %2370 = vmatpush1.msra.mxu0 %v544
    %2371 = vmatprep.subr.mxu0 %v553
    %2372 = vmatpush1.msra.mxu0 %v552
    %2373 = vmatprep.subr.mxu0 %v561
    %2374 = vmatpush1.msra.mxu0 %v560
    %2375 = vmatprep.subr.mxu0 %v569
    %2376 = vmatpush1.msra.mxu0 %v568
    %2377 = vmatprep.subr.mxu0 %v577
    %2378 = vmatpush1.msra.mxu0 %v576
    %2379 = vmatprep.subr.mxu0 %v585
    %2380 = vmatpush1.msra.mxu0 %v584
    %2381 = vmatprep.subr.mxu0 %v593
    %2382 = vmatpush1.msra.mxu0 %v592
    %2383 = vmatprep.subr.mxu0 %v601
    %2384 = vmatpush1.msra.mxu0 %v600
    %2385 = vmatprep.subr.mxu0 %v609
    %2386 = vmatpush1.msra.mxu0 %v608
    %2387 = vmatprep.subr.mxu0 %v617
    %2388 = vmatpush1.msra.mxu0 %v616
    %2389 = vmatprep.subr.mxu0 %v625
    %2390 = vmatpush1.msra.mxu0 %v624
    %2391 = vmatprep.subr.mxu0 %v633
    %2392 = vmatpush1.msra.mxu0 %v632
    %2393 = vmatprep.subr.mxu0 %v641
    %2394 = vmatpush1.msra.mxu0 %v640
    %2395 = vmatprep.mubr.f32.mxu0 %v2095
    %2396 = vmatmul.mubr.f32.gmra.mrb[0].mxu0 %v2117
    %v2397 = vpop.f32.mrb[0].mxu0
    %v2398 = vadd.f32 0.0, %v2397
    %v2399 = vpop.f32.mrb[0].mxu0
    %v2400 = vadd.f32 0.0, %v2399
    %2401 = vdwg.mxu0
    %v2402 = vadd.f32 %v2327, %v369
    %v2403 = vadd.f32 %v2329, %v373
    %v2404 = vadd.f32 %v2398, %v377
    %v2405 = vadd.f32 %v2400, %v381
    %v2406 = vmul.f32 %v2402, 0.5
    %v2407 = vtanh.pop %v2406
    %v2408 = vmul.f32 %v2407, 0.5
    %v2409 = vadd.f32 %v2408, 0.5
    %v2410 = vmul.f32 %v2403, 0.5
    %v2411 = vtanh.pop %v2410
    %v2412 = vmul.f32 %v2411, 0.5
    %v2413 = vadd.f32 %v2412, 0.5
    %v2414 = vtanh.pop %v2404
    %v2415 = vmul.f32 %v2405, 0.5
    %v2416 = vtanh.pop %v2415
    %v2417 = vmul.f32 %v2416, 0.5
    %v2418 = vadd.f32 %v2417, 0.5
    %v2419 = vmul.f32 %v2413, %v2093
    %v2420 = vmul.f32 %v2409, %v2414
    %v2421 = vadd.f32 %v2419, %v2420
    %v2422 = vtanh.pop %v2421
    %v2423 = vmul.f32 %v2418, %v2422
    %v2424 = vadd.f32 %v235, %v2185
    %v2425 = vadd.f32 %v237, %v2187
    %v2426 = vadd.f32 %v348, %v2256
    %v2427 = vadd.f32 %v350, %v2258
    %v2428 = vmul.f32 %v2424, 0.5
    %v2429 = vtanh.pop %v2428
    %v2430 = vmul.f32 %v2429, 0.5
    %v2431 = vadd.f32 %v2430, 0.5
    %v2432 = vmul.f32 %v2425, 0.5
    %v2433 = vtanh.pop %v2432
    %v2434 = vmul.f32 %v2433, 0.5
    %v2435 = vadd.f32 %v2434, 0.5
    %v2436 = vtanh.pop %v2426
    %v2437 = vmul.f32 %v2427, 0.5
    %v2438 = vtanh.pop %v2437
    %v2439 = vmul.f32 %v2438, 0.5
    %v2440 = vadd.f32 %v2439, 0.5
    %v2441 = vmul.f32 %v2435, %v2115
    %v2442 = vmul.f32 %v2431, %v2436
    %v2443 = vadd.f32 %v2441, %v2442
    %v2444 = vtanh.pop %v2443
    %v2445 = vmul.f32 %v2440, %v2444
    %2446 = vmatprep.subr.mxu0 %v387
    %2447 = vmatpush1.msra.mxu0 %v386
    %2448 = vmatprep.subr.mxu0 %v395
    %2449 = vmatpush1.msra.mxu0 %v394
    %2450 = vmatprep.subr.mxu0 %v403
    %2451 = vmatpush1.msra.mxu0 %v402
    %2452 = vmatprep.subr.mxu0 %v411
    %2453 = vmatpush1.msra.mxu0 %v410
    %2454 = vmatprep.subr.mxu0 %v419
    %2455 = vmatpush1.msra.mxu0 %v418
    %2456 = vmatprep.subr.mxu0 %v427
    %2457 = vmatpush1.msra.mxu0 %v426
    %2458 = vmatprep.subr.mxu0 %v435
    %2459 = vmatpush1.msra.mxu0 %v434
    %2460 = vmatprep.subr.mxu0 %v443
    %2461 = vmatpush1.msra.mxu0 %v442
    %2462 = vmatprep.subr.mxu0 %v451
    %2463 = vmatpush1.msra.mxu0 %v450
    %2464 = vmatprep.subr.mxu0 %v459
    %2465 = vmatpush1.msra.mxu0 %v458
    %2466 = vmatprep.subr.mxu0 %v467
    %2467 = vmatpush1.msra.mxu0 %v466
    %2468 = vmatprep.subr.mxu0 %v475
    %2469 = vmatpush1.msra.mxu0 %v474
    %2470 = vmatprep.subr.mxu0 %v483
    %2471 = vmatpush1.msra.mxu0 %v482
    %2472 = vmatprep.subr.mxu0 %v491
    %2473 = vmatpush1.msra.mxu0 %v490
    %2474 = vmatprep.subr.mxu0 %v499
    %2475 = vmatpush1.msra.mxu0 %v498
    %2476 = vmatprep.subr.mxu0 %v507
    %2477 = vmatpush1.msra.mxu0 %v506
    %2478 = vmatprep.subr.mxu0 %v515
    %2479 = vmatpush1.msra.mxu0 %v514
    %2480 = vmatprep.subr.mxu0 %v523
    %2481 = vmatpush1.msra.mxu0 %v522
    %2482 = vmatprep.subr.mxu0 %v531
    %2483 = vmatpush1.msra.mxu0 %v530
    %2484 = vmatprep.subr.mxu0 %v539
    %2485 = vmatpush1.msra.mxu0 %v538
    %2486 = vmatprep.subr.mxu0 %v547
    %2487 = vmatpush1.msra.mxu0 %v546
    %2488 = vmatprep.subr.mxu0 %v555
    %2489 = vmatpush1.msra.mxu0 %v554
    %2490 = vmatprep.subr.mxu0 %v563
    %2491 = vmatpush1.msra.mxu0 %v562
    %2492 = vmatprep.subr.mxu0 %v571
    %2493 = vmatpush1.msra.mxu0 %v570
    %2494 = vmatprep.subr.mxu0 %v579
    %2495 = vmatpush1.msra.mxu0 %v578
    %2496 = vmatprep.subr.mxu0 %v587
    %2497 = vmatpush1.msra.mxu0 %v586
    %2498 = vmatprep.subr.mxu0 %v595
    %2499 = vmatpush1.msra.mxu0 %v594
    %2500 = vmatprep.subr.mxu0 %v603
    %2501 = vmatpush1.msra.mxu0 %v602
    %2502 = vmatprep.subr.mxu0 %v611
    %2503 = vmatpush1.msra.mxu0 %v610
    %2504 = vmatprep.subr.mxu0 %v619
    %2505 = vmatpush1.msra.mxu0 %v618
    %2506 = vmatprep.subr.mxu0 %v627
    %2507 = vmatpush1.msra.mxu0 %v626
    %2508 = vmatprep.subr.mxu0 %v635
    %2509 = vmatpush1.msra.mxu0 %v634
    %2510 = vmatprep.mubr.f32.mxu0 %v2423
    %2511 = vmatmul.mubr.f32.gmra.mrb[0].mxu0 %v2445
    %v2512 = vpop.f32.mrb[0].mxu0
    %v2513 = vadd.f32 0.0, %v2512
    %v2514 = vpop.f32.mrb[0].mxu0
    %v2515 = vadd.f32 0.0, %v2514
    %2516 = vdwg.mxu0
    %2517 = vmatprep.subr.mxu0 %v389
    %2518 = vmatpush1.msra.mxu0 %v388
    %2519 = vmatprep.subr.mxu0 %v397
    %2520 = vmatpush1.msra.mxu0 %v396
    %2521 = vmatprep.subr.mxu0 %v405
    %2522 = vmatpush1.msra.mxu0 %v404
    %2523 = vmatprep.subr.mxu0 %v413
    %2524 = vmatpush1.msra.mxu0 %v412
    %2525 = vmatprep.subr.mxu0 %v421
    %2526 = vmatpush1.msra.mxu0 %v420
    %2527 = vmatprep.subr.mxu0 %v429
    %2528 = vmatpush1.msra.mxu0 %v428
    %2529 = vmatprep.subr.mxu0 %v437
    %2530 = vmatpush1.msra.mxu0 %v436
    %2531 = vmatprep.subr.mxu0 %v445
    %2532 = vmatpush1.msra.mxu0 %v444
    %2533 = vmatprep.subr.mxu0 %v453
    %2534 = vmatpush1.msra.mxu0 %v452
    %2535 = vmatprep.subr.mxu0 %v461
    %2536 = vmatpush1.msra.mxu0 %v460
    %2537 = vmatprep.subr.mxu0 %v469
    %2538 = vmatpush1.msra.mxu0 %v468
    %2539 = vmatprep.subr.mxu0 %v477
    %2540 = vmatpush1.msra.mxu0 %v476
    %2541 = vmatprep.subr.mxu0 %v485
    %2542 = vmatpush1.msra.mxu0 %v484
    %2543 = vmatprep.subr.mxu0 %v493
    %2544 = vmatpush1.msra.mxu0 %v492
    %2545 = vmatprep.subr.mxu0 %v501
    %2546 = vmatpush1.msra.mxu0 %v500
    %2547 = vmatprep.subr.mxu0 %v509
    %2548 = vmatpush1.msra.mxu0 %v508
    %2549 = vmatprep.subr.mxu0 %v517
    %2550 = vmatpush1.msra.mxu0 %v516
    %2551 = vmatprep.subr.mxu0 %v525
    %2552 = vmatpush1.msra.mxu0 %v524
    %2553 = vmatprep.subr.mxu0 %v533
    %2554 = vmatpush1.msra.mxu0 %v532
    %2555 = vmatprep.subr.mxu0 %v541
    %2556 = vmatpush1.msra.mxu0 %v540
    %2557 = vmatprep.subr.mxu0 %v549
    %2558 = vmatpush1.msra.mxu0 %v548
    %2559 = vmatprep.subr.mxu0 %v557
    %2560 = vmatpush1.msra.mxu0 %v556
    %2561 = vmatprep.subr.mxu0 %v565
    %2562 = vmatpush1.msra.mxu0 %v564
    %2563 = vmatprep.subr.mxu0 %v573
    %2564 = vmatpush1.msra.mxu0 %v572
    %2565 = vmatprep.subr.mxu0 %v581
    %2566 = vmatpush1.msra.mxu0 %v580
    %2567 = vmatprep.subr.mxu0 %v589
    %2568 = vmatpush1.msra.mxu0 %v588
    %2569 = vmatprep.subr.mxu0 %v597
    %2570 = vmatpush1.msra.mxu0 %v596
    %2571 = vmatprep.subr.mxu0 %v605
    %2572 = vmatpush1.msra.mxu0 %v604
    %2573 = vmatprep.subr.mxu0 %v613
    %2574 = vmatpush1.msra.mxu0 %v612
    %2575 = vmatprep.subr.mxu0 %v621
    %2576 = vmatpush1.msra.mxu0 %v620
    %2577 = vmatprep.subr.mxu0 %v629
    %2578 = vmatpush1.msra.mxu0 %v628
    %2579 = vmatprep.subr.mxu0 %v637
    %2580 = vmatpush1.msra.mxu0 %v636
    %2581 = vmatprep.mubr.f32.mxu0 %v2423
    %2582 = vmatmul.mubr.f32.gmra.mrb[0].mxu0 %v2445
    %v2583 = vpop.f32.mrb[0].mxu0
    %v2584 = vadd.f32 0.0, %v2583
    %v2585 = vpop.f32.mrb[0].mxu0
    %v2586 = vadd.f32 0.0, %v2585
    %2587 = vdwg.mxu0
    %2588 = vmatprep.subr.mxu0 %v391
    %2589 = vmatpush1.msra.mxu0 %v390
    %2590 = vmatprep.subr.mxu0 %v399
    %2591 = vmatpush1.msra.mxu0 %v398
    %2592 = vmatprep.subr.mxu0 %v407
    %2593 = vmatpush1.msra.mxu0 %v406
    %2594 = vmatprep.subr.mxu0 %v415
    %2595 = vmatpush1.msra.mxu0 %v414
    %2596 = vmatprep.subr.mxu0 %v423
    %2597 = vmatpush1.msra.mxu0 %v422
    %2598 = vmatprep.subr.mxu0 %v431
    %2599 = vmatpush1.msra.mxu0 %v430
    %2600 = vmatprep.subr.mxu0 %v439
    %2601 = vmatpush1.msra.mxu0 %v438
    %2602 = vmatprep.subr.mxu0 %v447
    %2603 = vmatpush1.msra.mxu0 %v446
    %2604 = vmatprep.subr.mxu0 %v455
    %2605 = vmatpush1.msra.mxu0 %v454
    %2606 = vmatprep.subr.mxu0 %v463
    %2607 = vmatpush1.msra.mxu0 %v462
    %2608 = vmatprep.subr.mxu0 %v471
    %2609 = vmatpush1.msra.mxu0 %v470
    %2610 = vmatprep.subr.mxu0 %v479
    %2611 = vmatpush1.msra.mxu0 %v478
    %2612 = vmatprep.subr.mxu0 %v487
    %2613 = vmatpush1.msra.mxu0 %v486
    %2614 = vmatprep.subr.mxu0 %v495
    %2615 = vmatpush1.msra.mxu0 %v494
    %2616 = vmatprep.subr.mxu0 %v503
    %2617 = vmatpush1.msra.mxu0 %v502
    %2618 = vmatprep.subr.mxu0 %v511
    %2619 = vmatpush1.msra.mxu0 %v510
    %2620 = vmatprep.subr.mxu0 %v519
    %2621 = vmatpush1.msra.mxu0 %v518
    %2622 = vmatprep.subr.mxu0 %v527
    %2623 = vmatpush1.msra.mxu0 %v526
    %2624 = vmatprep.subr.mxu0 %v535
    %2625 = vmatpush1.msra.mxu0 %v534
    %2626 = vmatprep.subr.mxu0 %v543
    %2627 = vmatpush1.msra.mxu0 %v542
    %2628 = vmatprep.subr.mxu0 %v551
    %2629 = vmatpush1.msra.mxu0 %v550
    %2630 = vmatprep.subr.mxu0 %v559
    %2631 = vmatpush1.msra.mxu0 %v558
    %2632 = vmatprep.subr.mxu0 %v567
    %2633 = vmatpush1.msra.mxu0 %v566
    %2634 = vmatprep.subr.mxu0 %v575
    %2635 = vmatpush1.msra.mxu0 %v574
    %2636 = vmatprep.subr.mxu0 %v583
    %2637 = vmatpush1.msra.mxu0 %v582
    %2638 = vmatprep.subr.mxu0 %v591
    %2639 = vmatpush1.msra.mxu0 %v590
    %2640 = vmatprep.subr.mxu0 %v599
    %2641 = vmatpush1.msra.mxu0 %v598
    %2642 = vmatprep.subr.mxu0 %v607
    %2643 = vmatpush1.msra.mxu0 %v606
    %2644 = vmatprep.subr.mxu0 %v615
    %2645 = vmatpush1.msra.mxu0 %v614
    %2646 = vmatprep.subr.mxu0 %v623
    %2647 = vmatpush1.msra.mxu0 %v622
    %2648 = vmatprep.subr.mxu0 %v631
    %2649 = vmatpush1.msra.mxu0 %v630
    %2650 = vmatprep.subr.mxu0 %v639
    %2651 = vmatpush1.msra.mxu0 %v638
    %2652 = vmatprep.mubr.f32.mxu0 %v2423
    %2653 = vmatmul.mubr.f32.gmra.mrb[0].mxu0 %v2445
    %v2654 = vpop.f32.mrb[0].mxu0
    %v2655 = vadd.f32 0.0, %v2654
    %v2656 = vpop.f32.mrb[0].mxu0
    %v2657 = vadd.f32 0.0, %v2656
    %2658 = vdwg.mxu0
    %2659 = vmatprep.subr.mxu0 %v393
    %2660 = vmatpush1.msra.mxu0 %v392
    %2661 = vmatprep.subr.mxu0 %v401
    %2662 = vmatpush1.msra.mxu0 %v400
    %2663 = vmatprep.subr.mxu0 %v409
    %2664 = vmatpush1.msra.mxu0 %v408
    %2665 = vmatprep.subr.mxu0 %v417
    %2666 = vmatpush1.msra.mxu0 %v416
    %2667 = vmatprep.subr.mxu0 %v425
    %2668 = vmatpush1.msra.mxu0 %v424
    %2669 = vmatprep.subr.mxu0 %v433
    %2670 = vmatpush1.msra.mxu0 %v432
    %2671 = vmatprep.subr.mxu0 %v441
    %2672 = vmatpush1.msra.mxu0 %v440
    %2673 = vmatprep.subr.mxu0 %v449
    %2674 = vmatpush1.msra.mxu0 %v448
    %2675 = vmatprep.subr.mxu0 %v457
    %2676 = vmatpush1.msra.mxu0 %v456
    %2677 = vmatprep.subr.mxu0 %v465
    %2678 = vmatpush1.msra.mxu0 %v464
    %2679 = vmatprep.subr.mxu0 %v473
    %2680 = vmatpush1.msra.mxu0 %v472
    %2681 = vmatprep.subr.mxu0 %v481
    %2682 = vmatpush1.msra.mxu0 %v480
    %2683 = vmatprep.subr.mxu0 %v489
    %2684 = vmatpush1.msra.mxu0 %v488
    %2685 = vmatprep.subr.mxu0 %v497
    %2686 = vmatpush1.msra.mxu0 %v496
    %2687 = vmatprep.subr.mxu0 %v505
    %2688 = vmatpush1.msra.mxu0 %v504
    %2689 = vmatprep.subr.mxu0 %v513
    %2690 = vmatpush1.msra.mxu0 %v512
    %2691 = vmatprep.subr.mxu0 %v521
    %2692 = vmatpush1.msra.mxu0 %v520
    %2693 = vmatprep.subr.mxu0 %v529
    %2694 = vmatpush1.msra.mxu0 %v528
    %2695 = vmatprep.subr.mxu0 %v537
    %2696 = vmatpush1.msra.mxu0 %v536
    %2697 = vmatprep.subr.mxu0 %v545
    %2698 = vmatpush1.msra.mxu0 %v544
    %2699 = vmatprep.subr.mxu0 %v553
    %2700 = vmatpush1.msra.mxu0 %v552
    %2701 = vmatprep.subr.mxu0 %v561
    %2702 = vmatpush1.msra.mxu0 %v560
    %2703 = vmatprep.subr.mxu0 %v569
    %2704 = vmatpush1.msra.mxu0 %v568
    %2705 = vmatprep.subr.mxu0 %v577
    %2706 = vmatpush1.msra.mxu0 %v576
    %2707 = vmatprep.subr.mxu0 %v585
    %2708 = vmatpush1.msra.mxu0 %v584
    %2709 = vmatprep.subr.mxu0 %v593
    %2710 = vmatpush1.msra.mxu0 %v592
    %2711 = vmatprep.subr.mxu0 %v601
    %2712 = vmatpush1.msra.mxu0 %v600
    %2713 = vmatprep.subr.mxu0 %v609
    %2714 = vmatpush1.msra.mxu0 %v608
    %2715 = vmatprep.subr.mxu0 %v617
    %2716 = vmatpush1.msra.mxu0 %v616
    %2717 = vmatprep.subr.mxu0 %v625
    %2718 = vmatpush1.msra.mxu0 %v624
    %2719 = vmatprep.subr.mxu0 %v633
    %2720 = vmatpush1.msra.mxu0 %v632
    %2721 = vmatprep.subr.mxu0 %v641
    %2722 = vmatpush1.msra.mxu0 %v640
    %2723 = vmatprep.mubr.f32.mxu0 %v2423
    %2724 = vmatmul.mubr.f32.gmra.mrb[0].mxu0 %v2445
    %v2725 = vpop.f32.mrb[0].mxu0
    %v2726 = vadd.f32 0.0, %v2725
    %v2727 = vpop.f32.mrb[0].mxu0
    %v2728 = vadd.f32 0.0, %v2727
    %2729 = vdwg.mxu0
    %v2730 = vadd.f32 %v2655, %v369
    %v2731 = vadd.f32 %v2657, %v373
    %v2732 = vadd.f32 %v2726, %v377
    %v2733 = vadd.f32 %v2728, %v381
    %v2734 = vmul.f32 %v2730, 0.5
    %v2735 = vtanh.pop %v2734
    %v2736 = vmul.f32 %v2735, 0.5
    %v2737 = vadd.f32 %v2736, 0.5
    %v2738 = vmul.f32 %v2731, 0.5
    %v2739 = vtanh.pop %v2738
    %v2740 = vmul.f32 %v2739, 0.5
    %v2741 = vadd.f32 %v2740, 0.5
    %v2742 = vtanh.pop %v2732
    %v2743 = vmul.f32 %v2733, 0.5
    %v2744 = vtanh.pop %v2743
    %v2745 = vmul.f32 %v2744, 0.5
    %v2746 = vadd.f32 %v2745, 0.5
    %v2747 = vmul.f32 %v2741, %v2421
    %v2748 = vmul.f32 %v2737, %v2742
    %v2749 = vadd.f32 %v2747, %v2748
    %v2750 = vtanh.pop %v2749
    %v2751 = vmul.f32 %v2746, %v2750
    %v2752 = vadd.f32 %v241, %v2513
    %v2753 = vadd.f32 %v243, %v2515
    %v2754 = vadd.f32 %v354, %v2584
    %v2755 = vadd.f32 %v356, %v2586
    %v2756 = vmul.f32 %v2752, 0.5
    %v2757 = vtanh.pop %v2756
    %v2758 = vmul.f32 %v2757, 0.5
    %v2759 = vadd.f32 %v2758, 0.5
    %v2760 = vmul.f32 %v2753, 0.5
    %v2761 = vtanh.pop %v2760
    %v2762 = vmul.f32 %v2761, 0.5
    %v2763 = vadd.f32 %v2762, 0.5
    %v2764 = vtanh.pop %v2754
    %v2765 = vmul.f32 %v2755, 0.5
    %v2766 = vtanh.pop %v2765
    %v2767 = vmul.f32 %v2766, 0.5
    %v2768 = vadd.f32 %v2767, 0.5
    %v2769 = vmul.f32 %v2763, %v2443
    %v2770 = vmul.f32 %v2759, %v2764
    %v2771 = vadd.f32 %v2769, %v2770
    %v2772 = vtanh.pop %v2771
    %v2773 = vmul.f32 %v2768, %v2772
    %2774 = vmatprep.subr.mxu0 %v387
    %2775 = vmatpush1.msra.mxu0 %v386
    %2776 = vmatprep.subr.mxu0 %v395
    %2777 = vmatpush1.msra.mxu0 %v394
    %2778 = vmatprep.subr.mxu0 %v403
    %2779 = vmatpush1.msra.mxu0 %v402
    %2780 = vmatprep.subr.mxu0 %v411
    %2781 = vmatpush1.msra.mxu0 %v410
    %2782 = vmatprep.subr.mxu0 %v419
    %2783 = vmatpush1.msra.mxu0 %v418
    %2784 = vmatprep.subr.mxu0 %v427
    %2785 = vmatpush1.msra.mxu0 %v426
    %2786 = vmatprep.subr.mxu0 %v435
    %2787 = vmatpush1.msra.mxu0 %v434
    %2788 = vmatprep.subr.mxu0 %v443
    %2789 = vmatpush1.msra.mxu0 %v442
    %2790 = vmatprep.subr.mxu0 %v451
    %2791 = vmatpush1.msra.mxu0 %v450
    %2792 = vmatprep.subr.mxu0 %v459
    %2793 = vmatpush1.msra.mxu0 %v458
    %2794 = vmatprep.subr.mxu0 %v467
    %2795 = vmatpush1.msra.mxu0 %v466
    %2796 = vmatprep.subr.mxu0 %v475
    %2797 = vmatpush1.msra.mxu0 %v474
    %2798 = vmatprep.subr.mxu0 %v483
    %2799 = vmatpush1.msra.mxu0 %v482
    %2800 = vmatprep.subr.mxu0 %v491
    %2801 = vmatpush1.msra.mxu0 %v490
    %2802 = vmatprep.subr.mxu0 %v499
    %2803 = vmatpush1.msra.mxu0 %v498
    %2804 = vmatprep.subr.mxu0 %v507
    %2805 = vmatpush1.msra.mxu0 %v506
    %2806 = vmatprep.subr.mxu0 %v515
    %2807 = vmatpush1.msra.mxu0 %v514
    %2808 = vmatprep.subr.mxu0 %v523
    %2809 = vmatpush1.msra.mxu0 %v522
    %2810 = vmatprep.subr.mxu0 %v531
    %2811 = vmatpush1.msra.mxu0 %v530
    %2812 = vmatprep.subr.mxu0 %v539
    %2813 = vmatpush1.msra.mxu0 %v538
    %2814 = vmatprep.subr.mxu0 %v547
    %2815 = vmatpush1.msra.mxu0 %v546
    %2816 = vmatprep.subr.mxu0 %v555
    %2817 = vmatpush1.msra.mxu0 %v554
    %2818 = vmatprep.subr.mxu0 %v563
    %2819 = vmatpush1.msra.mxu0 %v562
    %2820 = vmatprep.subr.mxu0 %v571
    %2821 = vmatpush1.msra.mxu0 %v570
    %2822 = vmatprep.subr.mxu0 %v579
    %2823 = vmatpush1.msra.mxu0 %v578
    %2824 = vmatprep.subr.mxu0 %v587
    %2825 = vmatpush1.msra.mxu0 %v586
    %2826 = vmatprep.subr.mxu0 %v595
    %2827 = vmatpush1.msra.mxu0 %v594
    %2828 = vmatprep.subr.mxu0 %v603
    %2829 = vmatpush1.msra.mxu0 %v602
    %2830 = vmatprep.subr.mxu0 %v611
    %2831 = vmatpush1.msra.mxu0 %v610
    %2832 = vmatprep.subr.mxu0 %v619
    %2833 = vmatpush1.msra.mxu0 %v618
    %2834 = vmatprep.subr.mxu0 %v627
    %2835 = vmatpush1.msra.mxu0 %v626
    %2836 = vmatprep.subr.mxu0 %v635
    %2837 = vmatpush1.msra.mxu0 %v634
    %2838 = vmatprep.mubr.f32.mxu0 %v2751
    %2839 = vmatmul.mubr.f32.gmra.mrb[0].mxu0 %v2773
    %v2840 = vpop.f32.mrb[0].mxu0
    %v2841 = vadd.f32 0.0, %v2840
    %v2842 = vpop.f32.mrb[0].mxu0
    %v2843 = vadd.f32 0.0, %v2842
    %2844 = vdwg.mxu0
    %2845 = vmatprep.subr.mxu0 %v389
    %2846 = vmatpush1.msra.mxu0 %v388
    %2847 = vmatprep.subr.mxu0 %v397
    %2848 = vmatpush1.msra.mxu0 %v396
    %2849 = vmatprep.subr.mxu0 %v405
    %2850 = vmatpush1.msra.mxu0 %v404
    %2851 = vmatprep.subr.mxu0 %v413
    %2852 = vmatpush1.msra.mxu0 %v412
    %2853 = vmatprep.subr.mxu0 %v421
    %2854 = vmatpush1.msra.mxu0 %v420
    %2855 = vmatprep.subr.mxu0 %v429
    %2856 = vmatpush1.msra.mxu0 %v428
    %2857 = vmatprep.subr.mxu0 %v437
    %2858 = vmatpush1.msra.mxu0 %v436
    %2859 = vmatprep.subr.mxu0 %v445
    %2860 = vmatpush1.msra.mxu0 %v444
    %2861 = vmatprep.subr.mxu0 %v453
    %2862 = vmatpush1.msra.mxu0 %v452
    %2863 = vmatprep.subr.mxu0 %v461
    %2864 = vmatpush1.msra.mxu0 %v460
    %2865 = vmatprep.subr.mxu0 %v469
    %2866 = vmatpush1.msra.mxu0 %v468
    %2867 = vmatprep.subr.mxu0 %v477
    %2868 = vmatpush1.msra.mxu0 %v476
    %2869 = vmatprep.subr.mxu0 %v485
    %2870 = vmatpush1.msra.mxu0 %v484
    %2871 = vmatprep.subr.mxu0 %v493
    %2872 = vmatpush1.msra.mxu0 %v492
    %2873 = vmatprep.subr.mxu0 %v501
    %2874 = vmatpush1.msra.mxu0 %v500
    %2875 = vmatprep.subr.mxu0 %v509
    %2876 = vmatpush1.msra.mxu0 %v508
    %2877 = vmatprep.subr.mxu0 %v517
    %2878 = vmatpush1.msra.mxu0 %v516
    %2879 = vmatprep.subr.mxu0 %v525
    %2880 = vmatpush1.msra.mxu0 %v524
    %2881 = vmatprep.subr.mxu0 %v533
    %2882 = vmatpush1.msra.mxu0 %v532
    %2883 = vmatprep.subr.mxu0 %v541
    %2884 = vmatpush1.msra.mxu0 %v540
    %2885 = vmatprep.subr.mxu0 %v549
    %2886 = vmatpush1.msra.mxu0 %v548
    %2887 = vmatprep.subr.mxu0 %v557
    %2888 = vmatpush1.msra.mxu0 %v556
    %2889 = vmatprep.subr.mxu0 %v565
    %2890 = vmatpush1.msra.mxu0 %v564
    %2891 = vmatprep.subr.mxu0 %v573
    %2892 = vmatpush1.msra.mxu0 %v572
    %2893 = vmatprep.subr.mxu0 %v581
    %2894 = vmatpush1.msra.mxu0 %v580
    %2895 = vmatprep.subr.mxu0 %v589
    %2896 = vmatpush1.msra.mxu0 %v588
    %2897 = vmatprep.subr.mxu0 %v597
    %2898 = vmatpush1.msra.mxu0 %v596
    %2899 = vmatprep.subr.mxu0 %v605
    %2900 = vmatpush1.msra.mxu0 %v604
    %2901 = vmatprep.subr.mxu0 %v613
    %2902 = vmatpush1.msra.mxu0 %v612
    %2903 = vmatprep.subr.mxu0 %v621
    %2904 = vmatpush1.msra.mxu0 %v620
    %2905 = vmatprep.subr.mxu0 %v629
    %2906 = vmatpush1.msra.mxu0 %v628
    %2907 = vmatprep.subr.mxu0 %v637
    %2908 = vmatpush1.msra.mxu0 %v636
    %2909 = vmatprep.mubr.f32.mxu0 %v2751
    %2910 = vmatmul.mubr.f32.gmra.mrb[0].mxu0 %v2773
    %v2911 = vpop.f32.mrb[0].mxu0
    %v2912 = vadd.f32 0.0, %v2911
    %v2913 = vpop.f32.mrb[0].mxu0
    %v2914 = vadd.f32 0.0, %v2913
    %2915 = vdwg.mxu0
    %2916 = vmatprep.subr.mxu0 %v391
    %2917 = vmatpush1.msra.mxu0 %v390
    %2918 = vmatprep.subr.mxu0 %v399
    %2919 = vmatpush1.msra.mxu0 %v398
    %2920 = vmatprep.subr.mxu0 %v407
    %2921 = vmatpush1.msra.mxu0 %v406
    %2922 = vmatprep.subr.mxu0 %v415
    %2923 = vmatpush1.msra.mxu0 %v414
    %2924 = vmatprep.subr.mxu0 %v423
    %2925 = vmatpush1.msra.mxu0 %v422
    %2926 = vmatprep.subr.mxu0 %v431
    %2927 = vmatpush1.msra.mxu0 %v430
    %2928 = vmatprep.subr.mxu0 %v439
    %2929 = vmatpush1.msra.mxu0 %v438
    %2930 = vmatprep.subr.mxu0 %v447
    %2931 = vmatpush1.msra.mxu0 %v446
    %2932 = vmatprep.subr.mxu0 %v455
    %2933 = vmatpush1.msra.mxu0 %v454
    %2934 = vmatprep.subr.mxu0 %v463
    %2935 = vmatpush1.msra.mxu0 %v462
    %2936 = vmatprep.subr.mxu0 %v471
    %2937 = vmatpush1.msra.mxu0 %v470
    %2938 = vmatprep.subr.mxu0 %v479
    %2939 = vmatpush1.msra.mxu0 %v478
    %2940 = vmatprep.subr.mxu0 %v487
    %2941 = vmatpush1.msra.mxu0 %v486
    %2942 = vmatprep.subr.mxu0 %v495
    %2943 = vmatpush1.msra.mxu0 %v494
    %2944 = vmatprep.subr.mxu0 %v503
    %2945 = vmatpush1.msra.mxu0 %v502
    %2946 = vmatprep.subr.mxu0 %v511
    %2947 = vmatpush1.msra.mxu0 %v510
    %2948 = vmatprep.subr.mxu0 %v519
    %2949 = vmatpush1.msra.mxu0 %v518
    %2950 = vmatprep.subr.mxu0 %v527
    %2951 = vmatpush1.msra.mxu0 %v526
    %2952 = vmatprep.subr.mxu0 %v535
    %2953 = vmatpush1.msra.mxu0 %v534
    %2954 = vmatprep.subr.mxu0 %v543
    %2955 = vmatpush1.msra.mxu0 %v542
    %2956 = vmatprep.subr.mxu0 %v551
    %2957 = vmatpush1.msra.mxu0 %v550
    %2958 = vmatprep.subr.mxu0 %v559
    %2959 = vmatpush1.msra.mxu0 %v558
    %2960 = vmatprep.subr.mxu0 %v567
    %2961 = vmatpush1.msra.mxu0 %v566
    %2962 = vmatprep.subr.mxu0 %v575
    %2963 = vmatpush1.msra.mxu0 %v574
    %2964 = vmatprep.subr.mxu0 %v583
    %2965 = vmatpush1.msra.mxu0 %v582
    %2966 = vmatprep.subr.mxu0 %v591
    %2967 = vmatpush1.msra.mxu0 %v590
    %2968 = vmatprep.subr.mxu0 %v599
    %2969 = vmatpush1.msra.mxu0 %v598
    %2970 = vmatprep.subr.mxu0 %v607
    %2971 = vmatpush1.msra.mxu0 %v606
    %2972 = vmatprep.subr.mxu0 %v615
    %2973 = vmatpush1.msra.mxu0 %v614
    %2974 = vmatprep.subr.mxu0 %v623
    %2975 = vmatpush1.msra.mxu0 %v622
    %2976 = vmatprep.subr.mxu0 %v631
    %2977 = vmatpush1.msra.mxu0 %v630
    %2978 = vmatprep.subr.mxu0 %v639
    %2979 = vmatpush1.msra.mxu0 %v638
    %2980 = vmatprep.mubr.f32.mxu0 %v2751
    %2981 = vmatmul.mubr.f32.gmra.mrb[0].mxu0 %v2773
    %v2982 = vpop.f32.mrb[0].mxu0
    %v2983 = vadd.f32 0.0, %v2982
    %v2984 = vpop.f32.mrb[0].mxu0
    %v2985 = vadd.f32 0.0, %v2984
    %2986 = vdwg.mxu0
    %2987 = vmatprep.subr.mxu0 %v393
    %2988 = vmatpush1.msra.mxu0 %v392
    %2989 = vmatprep.subr.mxu0 %v401
    %2990 = vmatpush1.msra.mxu0 %v400
    %2991 = vmatprep.subr.mxu0 %v409
    %2992 = vmatpush1.msra.mxu0 %v408
    %2993 = vmatprep.subr.mxu0 %v417
    %2994 = vmatpush1.msra.mxu0 %v416
    %2995 = vmatprep.subr.mxu0 %v425
    %2996 = vmatpush1.msra.mxu0 %v424
    %2997 = vmatprep.subr.mxu0 %v433
    %2998 = vmatpush1.msra.mxu0 %v432
    %2999 = vmatprep.subr.mxu0 %v441
    %3000 = vmatpush1.msra.mxu0 %v440
    %3001 = vmatprep.subr.mxu0 %v449
    %3002 = vmatpush1.msra.mxu0 %v448
    %3003 = vmatprep.subr.mxu0 %v457
    %3004 = vmatpush1.msra.mxu0 %v456
    %3005 = vmatprep.subr.mxu0 %v465
    %3006 = vmatpush1.msra.mxu0 %v464
    %3007 = vmatprep.subr.mxu0 %v473
    %3008 = vmatpush1.msra.mxu0 %v472
    %3009 = vmatprep.subr.mxu0 %v481
    %3010 = vmatpush1.msra.mxu0 %v480
    %3011 = vmatprep.subr.mxu0 %v489
    %3012 = vmatpush1.msra.mxu0 %v488
    %3013 = vmatprep.subr.mxu0 %v497
    %3014 = vmatpush1.msra.mxu0 %v496
    %3015 = vmatprep.subr.mxu0 %v505
    %3016 = vmatpush1.msra.mxu0 %v504
    %3017 = vmatprep.subr.mxu0 %v513
    %3018 = vmatpush1.msra.mxu0 %v512
    %3019 = vmatprep.subr.mxu0 %v521
    %3020 = vmatpush1.msra.mxu0 %v520
    %3021 = vmatprep.subr.mxu0 %v529
    %3022 = vmatpush1.msra.mxu0 %v528
    %3023 = vmatprep.subr.mxu0 %v537
    %3024 = vmatpush1.msra.mxu0 %v536
    %3025 = vmatprep.subr.mxu0 %v545
    %3026 = vmatpush1.msra.mxu0 %v544
    %3027 = vmatprep.subr.mxu0 %v553
    %3028 = vmatpush1.msra.mxu0 %v552
    %3029 = vmatprep.subr.mxu0 %v561
    %3030 = vmatpush1.msra.mxu0 %v560
    %3031 = vmatprep.subr.mxu0 %v569
    %3032 = vmatpush1.msra.mxu0 %v568
    %3033 = vmatprep.subr.mxu0 %v577
    %3034 = vmatpush1.msra.mxu0 %v576
    %3035 = vmatprep.subr.mxu0 %v585
    %3036 = vmatpush1.msra.mxu0 %v584
    %3037 = vmatprep.subr.mxu0 %v593
    %3038 = vmatpush1.msra.mxu0 %v592
    %3039 = vmatprep.subr.mxu0 %v601
    %3040 = vmatpush1.msra.mxu0 %v600
    %3041 = vmatprep.subr.mxu0 %v609
    %3042 = vmatpush1.msra.mxu0 %v608
    %3043 = vmatprep.subr.mxu0 %v617
    %3044 = vmatpush1.msra.mxu0 %v616
    %3045 = vmatprep.subr.mxu0 %v625
    %3046 = vmatpush1.msra.mxu0 %v624
    %3047 = vmatprep.subr.mxu0 %v633
    %3048 = vmatpush1.msra.mxu0 %v632
    %3049 = vmatprep.subr.mxu0 %v641
    %3050 = vmatpush1.msra.mxu0 %v640
    %3051 = vmatprep.mubr.f32.mxu0 %v2751
    %3052 = vmatmul.mubr.f32.gmra.mrb[0].mxu0 %v2773
    %v3053 = vpop.f32.mrb[0].mxu0
    %v3054 = vadd.f32 0.0, %v3053
    %v3055 = vpop.f32.mrb[0].mxu0
    %v3056 = vadd.f32 0.0, %v3055
    %3057 = vdwg.mxu0
    %v3058 = vadd.f32 %v2983, %v369
    %v3059 = vadd.f32 %v2985, %v373
    %v3060 = vadd.f32 %v3054, %v377
    %v3061 = vadd.f32 %v3056, %v381
    %v3062 = vmul.f32 %v3058, 0.5
    %v3063 = vtanh.pop %v3062
    %v3064 = vmul.f32 %v3063, 0.5
    %v3065 = vadd.f32 %v3064, 0.5
    %v3066 = vmul.f32 %v3059, 0.5
    %v3067 = vtanh.pop %v3066
    %v3068 = vmul.f32 %v3067, 0.5
    %v3069 = vadd.f32 %v3068, 0.5
    %v3070 = vtanh.pop %v3060
    %v3071 = vmul.f32 %v3061, 0.5
    %v3072 = vtanh.pop %v3071
    %v3073 = vmul.f32 %v3072, 0.5
    %v3074 = vadd.f32 %v3073, 0.5
    %v3075 = vmul.f32 %v3069, %v2749
    %v3076 = vmul.f32 %v3065, %v3070
    %v3077 = vadd.f32 %v3075, %v3076
    %v3078 = vtanh.pop %v3077
    %v3079 = vmul.f32 %v3074, %v3078
    %v3080 = vadd.f32 %v247, %v2841
    %v3081 = vadd.f32 %v249, %v2843
    %v3082 = vadd.f32 %v360, %v2912
    %v3083 = vadd.f32 %v362, %v2914
    %v3084 = vmul.f32 %v3080, 0.5
    %v3085 = vtanh.pop %v3084
    %v3086 = vmul.f32 %v3085, 0.5
    %v3087 = vadd.f32 %v3086, 0.5
    %v3088 = vmul.f32 %v3081, 0.5
    %v3089 = vtanh.pop %v3088
    %v3090 = vmul.f32 %v3089, 0.5
    %v3091 = vadd.f32 %v3090, 0.5
    %v3092 = vtanh.pop %v3082
    %v3093 = vmul.f32 %v3083, 0.5
    %v3094 = vtanh.pop %v3093
    %v3095 = vmul.f32 %v3094, 0.5
    %v3096 = vadd.f32 %v3095, 0.5
    %v3097 = vmul.f32 %v3091, %v2771
    %v3098 = vmul.f32 %v3087, %v3092
    %v3099 = vadd.f32 %v3097, %v3098
    %v3100 = vtanh.pop %v3099
    %v3101 = vmul.f32 %v3096, %v3100
    %3102 = vmatprep.subr.mxu0 %v391
    %3103 = vmatpush1.msra.mxu0 %v390
    %3104 = vmatprep.subr.mxu0 %v399
    %3105 = vmatpush1.msra.mxu0 %v398
    %3106 = vmatprep.subr.mxu0 %v407
    %3107 = vmatpush1.msra.mxu0 %v406
    %3108 = vmatprep.subr.mxu0 %v415
    %3109 = vmatpush1.msra.mxu0 %v414
    %3110 = vmatprep.subr.mxu0 %v423
    %3111 = vmatpush1.msra.mxu0 %v422
    %3112 = vmatprep.subr.mxu0 %v431
    %3113 = vmatpush1.msra.mxu0 %v430
    %3114 = vmatprep.subr.mxu0 %v439
    %3115 = vmatpush1.msra.mxu0 %v438
    %3116 = vmatprep.subr.mxu0 %v447
    %3117 = vmatpush1.msra.mxu0 %v446
    %3118 = vmatprep.subr.mxu0 %v455
    %3119 = vmatpush1.msra.mxu0 %v454
    %3120 = vmatprep.subr.mxu0 %v463
    %3121 = vmatpush1.msra.mxu0 %v462
    %3122 = vmatprep.subr.mxu0 %v471
    %3123 = vmatpush1.msra.mxu0 %v470
    %3124 = vmatprep.subr.mxu0 %v479
    %3125 = vmatpush1.msra.mxu0 %v478
    %3126 = vmatprep.subr.mxu0 %v487
    %3127 = vmatpush1.msra.mxu0 %v486
    %3128 = vmatprep.subr.mxu0 %v495
    %3129 = vmatpush1.msra.mxu0 %v494
    %3130 = vmatprep.subr.mxu0 %v503
    %3131 = vmatpush1.msra.mxu0 %v502
    %3132 = vmatprep.subr.mxu0 %v511
    %3133 = vmatpush1.msra.mxu0 %v510
    %3134 = vmatprep.subr.mxu0 %v519
    %3135 = vmatpush1.msra.mxu0 %v518
    %3136 = vmatprep.subr.mxu0 %v527
    %3137 = vmatpush1.msra.mxu0 %v526
    %3138 = vmatprep.subr.mxu0 %v535
    %3139 = vmatpush1.msra.mxu0 %v534
    %3140 = vmatprep.subr.mxu0 %v543
    %3141 = vmatpush1.msra.mxu0 %v542
    %3142 = vmatprep.subr.mxu0 %v551
    %3143 = vmatpush1.msra.mxu0 %v550
    %3144 = vmatprep.subr.mxu0 %v559
    %3145 = vmatpush1.msra.mxu0 %v558
    %3146 = vmatprep.subr.mxu0 %v567
    %3147 = vmatpush1.msra.mxu0 %v566
    %3148 = vmatprep.subr.mxu0 %v575
    %3149 = vmatpush1.msra.mxu0 %v574
    %3150 = vmatprep.subr.mxu0 %v583
    %3151 = vmatpush1.msra.mxu0 %v582
    %3152 = vmatprep.subr.mxu0 %v591
    %3153 = vmatpush1.msra.mxu0 %v590
    %3154 = vmatprep.subr.mxu0 %v599
    %3155 = vmatpush1.msra.mxu0 %v598
    %3156 = vmatprep.subr.mxu0 %v607
    %3157 = vmatpush1.msra.mxu0 %v606
    %3158 = vmatprep.subr.mxu0 %v615
    %3159 = vmatpush1.msra.mxu0 %v614
    %3160 = vmatprep.subr.mxu0 %v623
    %3161 = vmatpush1.msra.mxu0 %v622
    %3162 = vmatprep.subr.mxu0 %v631
    %3163 = vmatpush1.msra.mxu0 %v630
    %3164 = vmatprep.subr.mxu0 %v639
    %3165 = vmatpush1.msra.mxu0 %v638
    %3166 = vmatprep.mubr.f32.mxu0 %v3079
    %3167 = vmatmul.mubr.f32.gmra.mrb[0].mxu0 %v3101
    %v3168 = vpop.f32.mrb[0].mxu0
    %v3169 = vadd.f32 %v369, %v3168
    %v3170 = vpop.f32.mrb[0].mxu0
    %v3171 = vadd.f32 %v373, %v3170
    %3172 = vdwg.mxu0
    %3173 = vmatprep.subr.mxu0 %v393
    %3174 = vmatpush1.msra.mxu0 %v392
    %3175 = vmatprep.subr.mxu0 %v401
    %3176 = vmatpush1.msra.mxu0 %v400
    %3177 = vmatprep.subr.mxu0 %v409
    %3178 = vmatpush1.msra.mxu0 %v408
    %3179 = vmatprep.subr.mxu0 %v417
    %3180 = vmatpush1.msra.mxu0 %v416
    %3181 = vmatprep.subr.mxu0 %v425
    %3182 = vmatpush1.msra.mxu0 %v424
    %3183 = vmatprep.subr.mxu0 %v433
    %3184 = vmatpush1.msra.mxu0 %v432
    %3185 = vmatprep.subr.mxu0 %v441
    %3186 = vmatpush1.msra.mxu0 %v440
    %3187 = vmatprep.subr.mxu0 %v449
    %3188 = vmatpush1.msra.mxu0 %v448
    %3189 = vmatprep.subr.mxu0 %v457
    %3190 = vmatpush1.msra.mxu0 %v456
    %3191 = vmatprep.subr.mxu0 %v465
    %3192 = vmatpush1.msra.mxu0 %v464
    %3193 = vmatprep.subr.mxu0 %v473
    %3194 = vmatpush1.msra.mxu0 %v472
    %3195 = vmatprep.subr.mxu0 %v481
    %3196 = vmatpush1.msra.mxu0 %v480
    %3197 = vmatprep.subr.mxu0 %v489
    %3198 = vmatpush1.msra.mxu0 %v488
    %3199 = vmatprep.subr.mxu0 %v497
    %3200 = vmatpush1.msra.mxu0 %v496
    %3201 = vmatprep.subr.mxu0 %v505
    %3202 = vmatpush1.msra.mxu0 %v504
    %3203 = vmatprep.subr.mxu0 %v513
    %3204 = vmatpush1.msra.mxu0 %v512
    %3205 = vmatprep.subr.mxu0 %v521
    %3206 = vmatpush1.msra.mxu0 %v520
    %3207 = vmatprep.subr.mxu0 %v529
    %3208 = vmatpush1.msra.mxu0 %v528
    %3209 = vmatprep.subr.mxu0 %v537
    %3210 = vmatpush1.msra.mxu0 %v536
    %3211 = vmatprep.subr.mxu0 %v545
    %3212 = vmatpush1.msra.mxu0 %v544
    %3213 = vmatprep.subr.mxu0 %v553
    %3214 = vmatpush1.msra.mxu0 %v552
    %3215 = vmatprep.subr.mxu0 %v561
    %3216 = vmatpush1.msra.mxu0 %v560
    %3217 = vmatprep.subr.mxu0 %v569
    %3218 = vmatpush1.msra.mxu0 %v568
    %3219 = vmatprep.subr.mxu0 %v577
    %3220 = vmatpush1.msra.mxu0 %v576
    %3221 = vmatprep.subr.mxu0 %v585
    %3222 = vmatpush1.msra.mxu0 %v584
    %3223 = vmatprep.subr.mxu0 %v593
    %3224 = vmatpush1.msra.mxu0 %v592
    %3225 = vmatprep.subr.mxu0 %v601
    %3226 = vmatpush1.msra.mxu0 %v600
    %3227 = vmatprep.subr.mxu0 %v609
    %3228 = vmatpush1.msra.mxu0 %v608
    %3229 = vmatprep.subr.mxu0 %v617
    %3230 = vmatpush1.msra.mxu0 %v616
    %3231 = vmatprep.subr.mxu0 %v625
    %3232 = vmatpush1.msra.mxu0 %v624
    %3233 = vmatprep.subr.mxu0 %v633
    %3234 = vmatpush1.msra.mxu0 %v632
    %3235 = vmatprep.subr.mxu0 %v641
    %3236 = vmatpush1.msra.mxu0 %v640
    %3237 = vmatprep.mubr.f32.mxu0 %v3079
    %3238 = vmatmul.mubr.f32.gmra.mrb[0].mxu0 %v3101
    %v3239 = vpop.f32.mrb[0].mxu0
    %v3240 = vadd.f32 %v377, %v3239
    %v3241 = vpop.f32.mrb[0].mxu0
    %v3242 = vadd.f32 %v381, %v3241
    %3243 = vdwg.mxu0
    %v3244 = vmul.f32 %v3169, 0.5
    %v3245 = vtanh.pop %v3244
    %v3246 = vmul.f32 %v3245, 0.5
    %v3247 = vadd.f32 %v3246, 0.5
    %v3248 = vmul.f32 %v3171, 0.5
    %v3249 = vtanh.pop %v3248
    %v3250 = vmul.f32 %v3249, 0.5
    %v3251 = vadd.f32 %v3250, 0.5
    %v3252 = vtanh.pop %v3240
    %v3253 = vmul.f32 %v3242, 0.5
    %v3254 = vtanh.pop %v3253
    %v3255 = vmul.f32 %v3254, 0.5
    %v3256 = vadd.f32 %v3255, 0.5
    %v3257 = vmul.f32 %v3251, %v3077
    %v3258 = vmul.f32 %v3247, %v3252
    %v3259 = vadd.f32 %v3257, %v3258
    %v3260 = vtanh.pop %v3259
    %v3261 = vmul.f32 %v3256, %v3260
    %v3262 = vld [vmem:[#allocation5] sm:$0xff]
    %v3263 = vld [vmem:[#allocation5 + $0x8] sm:$0xff]
    %v3264 = vld [vmem:[#allocation5 + $0x10] sm:$0xff]
    %v3265 = vld [vmem:[#allocation5 + $0x18] sm:$0xff]
    %v3266 = vld [vmem:[#allocation5 + $0x20] sm:$0xff]
    %v3267 = vld [vmem:[#allocation5 + $0x28] sm:$0xff]
    %v3268 = vld [vmem:[#allocation5 + $0x30] sm:$0xff]
    %v3269 = vld [vmem:[#allocation5 + $0x38] sm:$0xff]
    %v3270 = vld [vmem:[#allocation5 + $0x40] sm:$0xff]
    %v3271 = vld [vmem:[#allocation5 + $0x48] sm:$0xff]
    %v3272 = vld [vmem:[#allocation5 + $0x50] sm:$0xff]
    %v3273 = vld [vmem:[#allocation5 + $0x58] sm:$0xff]
    %v3274 = vld [vmem:[#allocation5 + $0x60] sm:$0xff]
    %v3275 = vld [vmem:[#allocation5 + $0x68] sm:$0xff]
    %v3276 = vld [vmem:[#allocation5 + $0x70] sm:$0xff]
    %v3277 = vld [vmem:[#allocation5 + $0x78] sm:$0xff]
    %v3278 = vld [vmem:[%s6] sm:$0x1]
    %v3280 = vlaneseq
    %v3281 = vshrl.u32 %v3280, 7
    %v3282 = vsub.s32 0, %v3281
    %v3283 = vrot.slane %v3278, %v3282
    %3285 = vmatprep.subr.mxu0 0.0
    %3286 = vmatpush1.msra.mxu0 %v3262
    %3287 = vmatprep.subr.mxu0 0.0
    %3288 = vmatpush1.msra.mxu0 %v3263
    %3289 = vmatprep.subr.mxu0 0.0
    %3290 = vmatpush1.msra.mxu0 %v3264
    %3291 = vmatprep.subr.mxu0 0.0
    %3292 = vmatpush1.msra.mxu0 %v3265
    %3293 = vmatprep.subr.mxu0 0.0
    %3294 = vmatpush1.msra.mxu0 %v3266
    %3295 = vmatprep.subr.mxu0 0.0
    %3296 = vmatpush1.msra.mxu0 %v3267
    %3297 = vmatprep.subr.mxu0 0.0
    %3298 = vmatpush1.msra.mxu0 %v3268
    %3299 = vmatprep.subr.mxu0 0.0
    %3300 = vmatpush1.msra.mxu0 %v3269
    %3301 = vmatprep.subr.mxu0 0.0
    %3302 = vmatpush1.msra.mxu0 %v3270
    %3303 = vmatprep.subr.mxu0 0.0
    %3304 = vmatpush1.msra.mxu0 %v3271
    %3305 = vmatprep.subr.mxu0 0.0
    %3306 = vmatpush1.msra.mxu0 %v3272
    %3307 = vmatprep.subr.mxu0 0.0
    %3308 = vmatpush1.msra.mxu0 %v3273
    %3309 = vmatprep.subr.mxu0 0.0
    %3310 = vmatpush1.msra.mxu0 %v3274
    %3311 = vmatprep.subr.mxu0 0.0
    %3312 = vmatpush1.msra.mxu0 %v3275
    %3313 = vmatprep.subr.mxu0 0.0
    %3314 = vmatpush1.msra.mxu0 %v3276
    %3315 = vmatprep.subr.mxu0 0.0
    %3316 = vmatpush1.msra.mxu0 %v3277
    %3317 = vmatprep.subr.mxu0 0.0
    %3318 = vmatpush1.msra.mxu0 0.0
    %3319 = vmatprep.subr.mxu0 0.0
    %3320 = vmatpush1.msra.mxu0 0.0
    %3321 = vmatprep.subr.mxu0 0.0
    %3322 = vmatpush1.msra.mxu0 0.0
    %3323 = vmatprep.subr.mxu0 0.0
    %3324 = vmatpush1.msra.mxu0 0.0
    %3325 = vmatprep.subr.mxu0 0.0
    %3326 = vmatpush1.msra.mxu0 0.0
    %3327 = vmatprep.subr.mxu0 0.0
    %3328 = vmatpush1.msra.mxu0 0.0
    %3329 = vmatprep.subr.mxu0 0.0
    %3330 = vmatpush1.msra.mxu0 0.0
    %3331 = vmatprep.subr.mxu0 0.0
    %3332 = vmatpush1.msra.mxu0 0.0
    %3333 = vmatprep.subr.mxu0 0.0
    %3334 = vmatpush1.msra.mxu0 0.0
    %3335 = vmatprep.subr.mxu0 0.0
    %3336 = vmatpush1.msra.mxu0 0.0
    %3337 = vmatprep.subr.mxu0 0.0
    %3338 = vmatpush1.msra.mxu0 0.0
    %3339 = vmatprep.subr.mxu0 0.0
    %3340 = vmatpush1.msra.mxu0 0.0
    %3341 = vmatprep.subr.mxu0 0.0
    %3342 = vmatpush1.msra.mxu0 0.0
    %3343 = vmatprep.subr.mxu0 0.0
    %3344 = vmatpush1.msra.mxu0 0.0
    %3345 = vmatprep.subr.mxu0 0.0
    %3346 = vmatpush1.msra.mxu0 0.0
    %3347 = vmatprep.subr.mxu0 0.0
    %3348 = vmatpush1.msra.mxu0 0.0
    %3349 = vmatprep.mubr.f32.mxu0 0.0
    %3350 = vmatmul.mubr.f32.gmra.mrb[0].mxu0 %v1111
    %v3351 = vpop.f32.mrb[0].mxu0
    %v3352 = vadd.f32 %v3283, %v3351
    %v3353 = vpop.f32.mrb[0].mxu0
    %3354 = vmatprep.mubr.f32.mxu0 0.0
    %3355 = vmatmul.mubr.f32.gmra.mrb[0].mxu0 %v1439
    %v3356 = vpop.f32.mrb[0].mxu0
    %v3357 = vadd.f32 %v3283, %v3356
    %v3358 = vpop.f32.mrb[0].mxu0
    %3359 = vmatprep.mubr.f32.mxu0 0.0
    %3360 = vmatmul.mubr.f32.gmra.mrb[0].mxu0 %v1767
    %v3361 = vpop.f32.mrb[0].mxu0
    %v3362 = vadd.f32 %v3283, %v3361
    %v3363 = vpop.f32.mrb[0].mxu0
    %3364 = vmatprep.mubr.f32.mxu0 0.0
    %3365 = vmatmul.mubr.f32.gmra.mrb[0].mxu0 %v2095
    %v3366 = vpop.f32.mrb[0].mxu0
    %v3367 = vadd.f32 %v3283, %v3366
    %v3368 = vpop.f32.mrb[0].mxu0
    %3369 = vmatprep.mubr.f32.mxu0 0.0
    %3370 = vmatmul.mubr.f32.gmra.mrb[0].mxu0 %v2423
    %v3371 = vpop.f32.mrb[0].mxu0
    %v3372 = vadd.f32 %v3283, %v3371
    %v3373 = vpop.f32.mrb[0].mxu0
    %3374 = vmatprep.mubr.f32.mxu0 0.0
    %3375 = vmatmul.mubr.f32.gmra.mrb[0].mxu0 %v2751
    %v3376 = vpop.f32.mrb[0].mxu0
    %v3377 = vadd.f32 %v3283, %v3376
    %v3378 = vpop.f32.mrb[0].mxu0
    %3379 = vmatprep.mubr.f32.mxu0 0.0
    %3380 = vmatmul.mubr.f32.gmra.mrb[0].mxu0 %v3079
    %v3381 = vpop.f32.mrb[0].mxu0
    %v3382 = vadd.f32 %v3283, %v3381
    %v3383 = vpop.f32.mrb[0].mxu0
    %3384 = vmatprep.mubr.f32.mxu0 0.0
    %3385 = vmatmul.mubr.f32.gmra.mrb[0].mxu0 %v3261
    %v3386 = vpop.f32.mrb[0].mxu0
    %v3387 = vadd.f32 %v3283, %v3386
    %v3388 = vpop.f32.mrb[0].mxu0
    %3389 = vdwg.mxu0
    %3390 = vst [vmem:[#allocation7] sm:$0xff] %v3352
    %3391 = vst [vmem:[#allocation7 + $0x8] sm:$0xff] %v3357
    %3392 = vst [vmem:[#allocation7 + $0x10] sm:$0xff] %v3362
    %3393 = vst [vmem:[#allocation7 + $0x18] sm:$0xff] %v3367
    %3394 = vst [vmem:[#allocation7 + $0x20] sm:$0xff] %v3372
    %3395 = vst [vmem:[#allocation7 + $0x28] sm:$0xff] %v3377
    %3396 = vst [vmem:[#allocation7 + $0x30] sm:$0xff] %v3382
    %3397 = vst [vmem:[#allocation7 + $0x38] sm:$0xff] %v3387
    // Predicated region
    $region38: #{tpu_custom_call.1} parent=1 // pred_check
      _
    $region39: #{tpu_custom_call.1} parent=1 // pred_check_branch
      %3399 = sbr.rel (0) target = $region41
    $region40: #{tpu_custom_call.1} parent=1 // pred_region
      %s3401 = ssub.s32 1024, 1024
      %3402 = vsyncadd [#allocation4], %s3401
      %s3403 = sshll.u32 [#allocation7], 4
      %s3404 = int_to_ptr.vmem [resolvable:$true] %s3403
      %3409 = dma.vmem_to_hbm [thread:$0]  %s3404, 1024, %s7, [#allocation4], 128, 128, 8
    $region41: #{tpu_custom_call.1} parent=1 // pred_fallthru
      _
    // Predicated region
    $region42: #{tpu_custom_call.1} parent=1 // pred_check
      _
    $region43: #{tpu_custom_call.1} parent=1 // pred_check_branch
      %3411 = sbr.rel (0) target = $region45
    $region44: #{tpu_custom_call.1} parent=1 // pred_region
      %3412 = dma.done [#allocation4], 1024
    $region45: #{tpu_custom_call.1} parent=1 // pred_fallthru
      _
    %3413 = vsyncpa [#allocation3], 1
    %3414 = vsyncpa [#allocation6], 1
    %3415 = vsyncpa [#allocation4], 1

</llo_original>
